<compile_context>
chip_gen: v7x
topology: tpu7x:2x2x1
jax: 0.10.0
libtpu: 0.0.40
codegen_flags: <defaults>
</compile_context>

<pallas_src>
import jax
import jax.numpy as jnp
from jax.experimental import pallas as pl
from jax.experimental.pallas import tpu as pltpu

LANE = 128


# ------------------------------ fused kernel -------------------------------

def _make_combined_kernel(num_layers):
    """Per grid step (one graph): num_layers x (2 SAGE relations) + both heads + blend."""

    def kernel(*refs):
        beta_ref = refs[0]                                    # (1,1) f32 in SMEM
        a_hf_ref, a_fh_ref, xh_ref, xf_ref = refs[1:5]        # bf16 adjacency / features
        layer_refs = refs[5:5 + 6 * num_layers]               # per layer: w_hf_l,w_hf_r,b_hf,w_fh_l,w_fh_r,b_fh
        w_lin_ref, b_lin_ref, w_nf_ref, b_nf_ref, out_ref = refs[5 + 6 * num_layers:]

        a_hf = a_hf_ref[...]          # [Nf_pad, Nh_pad] bf16, row-normalized (mean agg)
        a_fh = a_fh_ref[...]          # [Nh_pad, Nf_pad] bf16
        x_host = xh_ref[...]          # [Nh_pad, 128] bf16 (zero-padded lanes)
        x_flow = xf_ref[...]          # [Nf_pad, 128] bf16
        x_flow_in = x_flow            # raw flow features for the node-feature branch

        for l in range(num_layers):   # unrolled: per-layer weights are separate kernel args
            w_hf_l = layer_refs[6 * l + 0][...]
            w_hf_r = layer_refs[6 * l + 1][...]
            b_hf = layer_refs[6 * l + 2][...]
            w_fh_l = layer_refs[6 * l + 3][...]
            w_fh_r = layer_refs[6 * l + 4][...]
            b_fh = layer_refs[6 * l + 5][...]

            # relation ('host','to','flow'): dst = flow, src = host
            agg_f = jnp.dot(a_hf, x_host, preferred_element_type=jnp.float32)
            h_f = (jnp.dot(agg_f.astype(jnp.bfloat16), w_hf_l,
                           preferred_element_type=jnp.float32)
                   + jnp.dot(x_flow, w_hf_r, preferred_element_type=jnp.float32)
                   + b_hf)

            # relation ('flow','to','host'): dst = host, src = flow
            agg_h = jnp.dot(a_fh, x_flow, preferred_element_type=jnp.float32)
            h_h = (jnp.dot(agg_h.astype(jnp.bfloat16), w_fh_l,
                           preferred_element_type=jnp.float32)
                   + jnp.dot(x_host, w_fh_r, preferred_element_type=jnp.float32)
                   + b_fh)

            # HeteroConv aggr='sum' is identity (one relation per node type); leaky_relu(0.01)
            # in f32 on the accumulator (mul + max, no select).
            h_f = jnp.maximum(h_f, 0.01 * h_f)
            h_h = jnp.maximum(h_h, 0.01 * h_h)
            x_flow = h_f.astype(jnp.bfloat16)
            x_host = h_h.astype(jnp.bfloat16)

        # gcn_model head: Linear(H, dim_out) on flow embeddings (lane-padded).
        gcn_out = jnp.dot(x_flow, w_lin_ref[...],
                          preferred_element_type=jnp.float32) + b_lin_ref[...]
        # node_feature_model: Linear on the raw flow features.
        nf_out = jnp.dot(x_flow_in, w_nf_ref[...],
                         preferred_element_type=jnp.float32) + b_nf_ref[...]

        beta = beta_ref[0, 0]
        out_ref[...] = beta * gcn_out + (1.0 - beta) * nf_out

    return kernel


# ------------------------------- glue (JAX) --------------------------------

def _round_up(n, m):
    return ((n + m - 1) // m) * m


def build_mean_adj(edge_index, n_src, n_dst):
    """edge_index: [2, E], row 0 = src, row 1 = dst (PyG).  Returns row-normalized
    A[dst, src] so that A @ x_src == mean aggregation (deg clamped to 1 -> 0 for isolated)."""
    src, dst = edge_index[0], edge_index[1]
    A = jnp.zeros((n_dst, n_src), jnp.float32).at[dst, src].add(1.0)
    deg = A.sum(axis=1, keepdims=True)
    return A / jnp.maximum(deg, 1.0)


def _pad2(x, rows, cols):
    r, c = x.shape
    return jnp.pad(x, ((0, rows - r), (0, cols - c)))


def _pad_w(w, lane=LANE):
    f_in, f_out = w.shape
    return jnp.zeros((lane, lane), jnp.float32).at[:f_in, :f_out].set(w).astype(jnp.bfloat16)


def _pad_b(b, lane=LANE):
    return jnp.zeros((1, lane), jnp.float32).at[:, :b.shape[1]].set(b)


def combined_forward(x_dicts, edge_index_dicts, params):
    """Batched forward: x_dicts / edge_index_dicts are length-B lists of per-graph inputs
    (same node counts per graph).  Returns [B, n_flow, dim_out] f32."""
    B = len(x_dicts)
    n_host = x_dicts[0]['host'].shape[0]
    n_flow = x_dicts[0]['flow'].shape[0]
    num_layers = len(params['convs'])
    dim_out = params['lin']['w'].shape[1]

    # Lane-dense padding of the node axes (padded src columns of A are zero -> inert).
    nh_pad = _round_up(n_host, LANE)
    nf_pad = _round_up(n_flow, LANE)

    a_hf, a_fh, xh, xf = [], [], [], []
    for b in range(B):
        A1 = build_mean_adj(edge_index_dicts[b][('host', 'to', 'flow')], n_host, n_flow)
        A2 = build_mean_adj(edge_index_dicts[b][('flow', 'to', 'host')], n_flow, n_host)
        a_hf.append(_pad2(A1, nf_pad, nh_pad))
        a_fh.append(_pad2(A2, nh_pad, nf_pad))
        xh.append(_pad2(x_dicts[b]['host'], nh_pad, LANE))
        xf.append(_pad2(x_dicts[b]['flow'], nf_pad, LANE))
    a_hf = jnp.stack(a_hf).astype(jnp.bfloat16)          # [B, Nf_pad, Nh_pad]
    a_fh = jnp.stack(a_fh).astype(jnp.bfloat16)          # [B, Nh_pad, Nf_pad]
    xh = jnp.stack(xh).astype(jnp.bfloat16)              # [B, Nh_pad, 128]
    xf = jnp.stack(xf).astype(jnp.bfloat16)              # [B, Nf_pad, 128]

    beta = jnp.reshape(params['beta'].astype(jnp.float32), (1, 1))

    weight_args = []
    for layer in params['convs']:
        for rel in ('hf', 'fh'):
            weight_args += [_pad_w(layer[rel]['w_l']),
                            _pad_w(layer[rel]['w_r']),
                            _pad_b(layer[rel]['b_l'])]
    weight_args += [_pad_w(params['lin']['w']), _pad_b(params['lin']['b']),
                    _pad_w(params['node_feature']['w']), _pad_b(params['node_feature']['b'])]

    args = [beta, a_hf, a_fh, xh, xf] + weight_args

    def _shared(arr):  # weights: resident, constant block index across the grid
        return pl.BlockSpec(arr.shape, lambda b: (0,) * arr.ndim)

    in_specs = [
        pl.BlockSpec(memory_space=pltpu.MemorySpace.SMEM),                 # beta scalar
        pl.BlockSpec((None, nf_pad, nh_pad), lambda b: (b, 0, 0)),         # A_hf
        pl.BlockSpec((None, nh_pad, nf_pad), lambda b: (b, 0, 0)),         # A_fh
        pl.BlockSpec((None, nh_pad, LANE), lambda b: (b, 0, 0)),           # x_host
        pl.BlockSpec((None, nf_pad, LANE), lambda b: (b, 0, 0)),           # x_flow
    ] + [_shared(a) for a in weight_args]

    out_padded = pl.pallas_call(
        _make_combined_kernel(num_layers),
        out_shape=jax.ShapeDtypeStruct((B, nf_pad, LANE), jnp.float32),
        grid=(B,),
        in_specs=in_specs,
        out_specs=pl.BlockSpec((None, nf_pad, LANE), lambda b: (b, 0, 0)),
        compiler_params=pltpu.CompilerParams(
            dimension_semantics=("parallel",),        # shards graphs across both TCs on v7x
            vmem_limit_bytes=32 * 1024 * 1024,        # explicit; valid on v5e/v6e/v7x
        ),
    )(*args)
    return out_padded[:, :n_flow, :dim_out]


# --------------------------- pure-JAX reference -----------------------------

def reference_forward(x_dict, edge_index_dict, params):
    n_host = x_dict['host'].shape[0]
    n_flow = x_dict['flow'].shape[0]
    A_hf = build_mean_adj(edge_index_dict[('host', 'to', 'flow')], n_host, n_flow)
    A_fh = build_mean_adj(edge_index_dict[('flow', 'to', 'host')], n_flow, n_host)
    xh, xf = x_dict['host'], x_dict['flow']
    xf_in = xf
    for layer in params['convs']:
        hf = (A_hf @ xh) @ layer['hf']['w_l'] + layer['hf']['b_l'] + xf @ layer['hf']['w_r']
        hh = (A_fh @ xf) @ layer['fh']['w_l'] + layer['fh']['b_l'] + xh @ layer['fh']['w_r']
        xf = jnp.where(hf >= 0, hf, 0.01 * hf)
        xh = jnp.where(hh >= 0, hh, 0.01 * hh)
    gcn = xf @ params['lin']['w'] + params['lin']['b']
    nf = xf_in @ params['node_feature']['w'] + params['node_feature']['b']
    beta = params['beta']
    return beta * gcn + (1.0 - beta) * nf


# ---------------------------- parameter setup ------------------------------

def init_params(key, dim_in_host, dim_in_flow, dim_h, dim_out, num_layers):
    params = {'convs': []}
    f_host, f_flow = dim_in_host, dim_in_flow
    for _ in range(num_layers):
        layer = {}
        for rel, (f_src, f_dst) in (('hf', (f_host, f_flow)), ('fh', (f_flow, f_host))):
            key, k1, k2, k3 = jax.random.split(key, 4)
            layer[rel] = {
                'w_l': 0.1 * jax.random.normal(k1, (f_src, dim_h), jnp.float32),
                'b_l': 0.1 * jax.random.normal(k2, (1, dim_h), jnp.float32),
                'w_r': 0.1 * jax.random.normal(k3, (f_dst, dim_h), jnp.float32),
            }
        params['convs'].append(layer)
        f_host = f_flow = dim_h
    key, k1, k2, k3, k4 = jax.random.split(key, 5)
    params['lin'] = {
        'w': 0.1 * jax.random.normal(k1, (dim_h, dim_out), jnp.float32),
        'b': 0.1 * jax.random.normal(k2, (1, dim_out), jnp.float32),
    }
    params['node_feature'] = {
        'w': 0.1 * jax.random.normal(k3, (dim_in_flow, dim_out), jnp.float32),
        'b': 0.1 * jax.random.normal(k4, (1, dim_out), jnp.float32),
    }
    params['beta'] = jnp.array(0.5, jnp.float32)   # nn.Parameter(torch.tensor(0.5))
    return params


# ---------------------------------- main ------------------------------------

if __name__ == "__main__":
    B = 2                       # batch of graphs -> grid=(B,), parallel
    N_HOST, N_FLOW = 8, 16
    DIM_IN_HOST = DIM_IN_FLOW = 16
    DIM_H, DIM_OUT = 32, 4
    NUM_LAYERS = 2
    E = 32

    key = jax.random.PRNGKey(0)
    key, kp = jax.random.split(key)
    params = init_params(kp, DIM_IN_HOST, DIM_IN_FLOW, DIM_H, DIM_OUT, NUM_LAYERS)

    x_dicts, edge_dicts = [], []
    for b in range(B):
        key, kh, kf, ke1, ke2 = jax.random.split(key, 5)
        x_dicts.append({
            'host': jax.random.normal(kh, (N_HOST, DIM_IN_HOST), jnp.float32),
            'flow': jax.random.normal(kf, (N_FLOW, DIM_IN_FLOW), jnp.float32),
        })
        edge_dicts.append({
            ('host', 'to', 'flow'): jnp.stack([
                jax.random.randint(ke1, (E,), 0, N_HOST, jnp.int32),
                jax.random.randint(jax.random.fold_in(ke1, 1), (E,), 0, N_FLOW, jnp.int32)]),
            ('flow', 'to', 'host'): jnp.stack([
                jax.random.randint(ke2, (E,), 0, N_FLOW, jnp.int32),
                jax.random.randint(jax.random.fold_in(ke2, 1), (E,), 0, N_HOST, jnp.int32)]),
        })

    out = combined_forward(x_dicts, edge_dicts, params)
    out = jax.block_until_ready(out)
    assert out.shape == (B, N_FLOW, DIM_OUT), out.shape
    assert bool(jnp.all(jnp.isfinite(out)))

    # Loose parity check against the f32 pure-JAX reference (kernel uses bf16 MXU operands).
    ref = jnp.stack([reference_forward(x_dicts[b], edge_dicts[b], params) for b in range(B)])
    max_diff = float(jnp.max(jnp.abs(out - ref)))
    assert max_diff < 0.08, f"max abs diff vs f32 reference: {max_diff}"

    print("KERNEL_OK")
</pallas_src>

<mosaic_0001>
module attributes {stable_mosaic.version = 11 : i64} {
  func.func @kernel(%arg0: i32, %arg1: memref<1x1xf32, #tpu.memory_space<smem>>, %arg2: memref<1x128x128xbf16, #tpu.memory_space<vmem>>, %arg3: memref<1x128x128xbf16, #tpu.memory_space<vmem>>, %arg4: memref<1x128x128xbf16, #tpu.memory_space<vmem>>, %arg5: memref<1x128x128xbf16, #tpu.memory_space<vmem>>, %arg6: memref<128x128xbf16, #tpu.memory_space<vmem>>, %arg7: memref<128x128xbf16, #tpu.memory_space<vmem>>, %arg8: memref<1x128xf32, #tpu.memory_space<vmem>>, %arg9: memref<128x128xbf16, #tpu.memory_space<vmem>>, %arg10: memref<128x128xbf16, #tpu.memory_space<vmem>>, %arg11: memref<1x128xf32, #tpu.memory_space<vmem>>, %arg12: memref<128x128xbf16, #tpu.memory_space<vmem>>, %arg13: memref<128x128xbf16, #tpu.memory_space<vmem>>, %arg14: memref<1x128xf32, #tpu.memory_space<vmem>>, %arg15: memref<128x128xbf16, #tpu.memory_space<vmem>>, %arg16: memref<128x128xbf16, #tpu.memory_space<vmem>>, %arg17: memref<1x128xf32, #tpu.memory_space<vmem>>, %arg18: memref<128x128xbf16, #tpu.memory_space<vmem>>, %arg19: memref<1x128xf32, #tpu.memory_space<vmem>>, %arg20: memref<128x128xbf16, #tpu.memory_space<vmem>>, %arg21: memref<1x128xf32, #tpu.memory_space<vmem>>, %arg22: memref<1x128x128xf32, #tpu.memory_space<vmem>>) attributes {dimension_semantics = [#tpu.dimension_semantics<parallel>], iteration_bounds = array<i64: 2>, scalar_prefetch = 0 : i64, scratch_operands = 0 : i64, tpu.core_type = #tpu.core_type<tc>, window_params = [{transform_indices = @transform_0, window_bounds = array<i64: 1, 1>}, {transform_indices = @transform_1, window_bounds = array<i64: 1, 128, 128>}, {transform_indices = @transform_2, window_bounds = array<i64: 1, 128, 128>}, {transform_indices = @transform_3, window_bounds = array<i64: 1, 128, 128>}, {transform_indices = @transform_4, window_bounds = array<i64: 1, 128, 128>}, {pipeline_mode = #tpu.pipeline_mode<synchronous>, transform_indices = @transform_5, window_bounds = array<i64: 128, 128>}, {pipeline_mode = #tpu.pipeline_mode<synchronous>, transform_indices = @transform_6, window_bounds = array<i64: 128, 128>}, {pipeline_mode = #tpu.pipeline_mode<synchronous>, transform_indices = @transform_7, window_bounds = array<i64: 1, 128>}, {pipeline_mode = #tpu.pipeline_mode<synchronous>, transform_indices = @transform_8, window_bounds = array<i64: 128, 128>}, {pipeline_mode = #tpu.pipeline_mode<synchronous>, transform_indices = @transform_9, window_bounds = array<i64: 128, 128>}, {pipeline_mode = #tpu.pipeline_mode<synchronous>, transform_indices = @transform_10, window_bounds = array<i64: 1, 128>}, {pipeline_mode = #tpu.pipeline_mode<synchronous>, transform_indices = @transform_11, window_bounds = array<i64: 128, 128>}, {pipeline_mode = #tpu.pipeline_mode<synchronous>, transform_indices = @transform_12, window_bounds = array<i64: 128, 128>}, {pipeline_mode = #tpu.pipeline_mode<synchronous>, transform_indices = @transform_13, window_bounds = array<i64: 1, 128>}, {pipeline_mode = #tpu.pipeline_mode<synchronous>, transform_indices = @transform_14, window_bounds = array<i64: 128, 128>}, {pipeline_mode = #tpu.pipeline_mode<synchronous>, transform_indices = @transform_15, window_bounds = array<i64: 128, 128>}, {pipeline_mode = #tpu.pipeline_mode<synchronous>, transform_indices = @transform_16, window_bounds = array<i64: 1, 128>}, {pipeline_mode = #tpu.pipeline_mode<synchronous>, transform_indices = @transform_17, window_bounds = array<i64: 128, 128>}, {pipeline_mode = #tpu.pipeline_mode<synchronous>, transform_indices = @transform_18, window_bounds = array<i64: 1, 128>}, {pipeline_mode = #tpu.pipeline_mode<synchronous>, transform_indices = @transform_19, window_bounds = array<i64: 128, 128>}, {pipeline_mode = #tpu.pipeline_mode<synchronous>, transform_indices = @transform_20, window_bounds = array<i64: 1, 128>}, {transform_indices = @transform_21, window_bounds = array<i64: 1, 128, 128>}]} {
    %c0 = arith.constant 0 : index
    %c0_0 = arith.constant 0 : index
    %c0_1 = arith.constant 0 : index
    %0 = vector.load %arg2[%c0, %c0_0, %c0_1] : memref<1x128x128xbf16, #tpu.memory_space<vmem>>, vector<1x128x128xbf16>
    %1 = vector.shape_cast %0 : vector<1x128x128xbf16> to vector<128x128xbf16>
    %c0_2 = arith.constant 0 : index
    %c0_3 = arith.constant 0 : index
    %c0_4 = arith.constant 0 : index
    %2 = vector.load %arg3[%c0_2, %c0_3, %c0_4] : memref<1x128x128xbf16, #tpu.memory_space<vmem>>, vector<1x128x128xbf16>
    %3 = vector.shape_cast %2 : vector<1x128x128xbf16> to vector<128x128xbf16>
    %c0_5 = arith.constant 0 : index
    %c0_6 = arith.constant 0 : index
    %c0_7 = arith.constant 0 : index
    %4 = vector.load %arg4[%c0_5, %c0_6, %c0_7] : memref<1x128x128xbf16, #tpu.memory_space<vmem>>, vector<1x128x128xbf16>
    %5 = vector.shape_cast %4 : vector<1x128x128xbf16> to vector<128x128xbf16>
    %c0_8 = arith.constant 0 : index
    %c0_9 = arith.constant 0 : index
    %c0_10 = arith.constant 0 : index
    %6 = vector.load %arg5[%c0_8, %c0_9, %c0_10] : memref<1x128x128xbf16, #tpu.memory_space<vmem>>, vector<1x128x128xbf16>
    %7 = vector.shape_cast %6 : vector<1x128x128xbf16> to vector<128x128xbf16>
    %c0_11 = arith.constant 0 : index
    %c0_12 = arith.constant 0 : index
    %8 = vector.load %arg6[%c0_11, %c0_12] : memref<128x128xbf16, #tpu.memory_space<vmem>>, vector<128x128xbf16>
    %c0_13 = arith.constant 0 : index
    %c0_14 = arith.constant 0 : index
    %9 = vector.load %arg7[%c0_13, %c0_14] : memref<128x128xbf16, #tpu.memory_space<vmem>>, vector<128x128xbf16>
    %c0_15 = arith.constant 0 : index
    %c0_16 = arith.constant 0 : index
    %10 = vector.load %arg8[%c0_15, %c0_16] : memref<1x128xf32, #tpu.memory_space<vmem>>, vector<1x128xf32>
    %c0_17 = arith.constant 0 : index
    %c0_18 = arith.constant 0 : index
    %11 = vector.load %arg9[%c0_17, %c0_18] : memref<128x128xbf16, #tpu.memory_space<vmem>>, vector<128x128xbf16>
    %c0_19 = arith.constant 0 : index
    %c0_20 = arith.constant 0 : index
    %12 = vector.load %arg10[%c0_19, %c0_20] : memref<128x128xbf16, #tpu.memory_space<vmem>>, vector<128x128xbf16>
    %c0_21 = arith.constant 0 : index
    %c0_22 = arith.constant 0 : index
    %13 = vector.load %arg11[%c0_21, %c0_22] : memref<1x128xf32, #tpu.memory_space<vmem>>, vector<1x128xf32>
    %cst = arith.constant dense<0.000000e+00> : vector<128x128xf32>
    %14 = tpu.matmul %1, %5, %cst {dimension_numbers = #tpu.dot_dimension_numbers<[1], [0], [0], [1], [0, 0, 1, 1], [], []>} : vector<128x128xbf16>, vector<128x128xbf16>, vector<128x128xf32> -> vector<128x128xf32>
    %15 = arith.truncf %14 : vector<128x128xf32> to vector<128x128xbf16>
    %cst_23 = arith.constant dense<0.000000e+00> : vector<128x128xf32>
    %16 = tpu.matmul %15, %8, %cst_23 {dimension_numbers = #tpu.dot_dimension_numbers<[1], [0], [0], [1], [0, 0, 1, 1], [], []>} : vector<128x128xbf16>, vector<128x128xbf16>, vector<128x128xf32> -> vector<128x128xf32>
    %cst_24 = arith.constant dense<0.000000e+00> : vector<128x128xf32>
    %17 = tpu.matmul %7, %9, %cst_24 {dimension_numbers = #tpu.dot_dimension_numbers<[1], [0], [0], [1], [0, 0, 1, 1], [], []>} : vector<128x128xbf16>, vector<128x128xbf16>, vector<128x128xf32> -> vector<128x128xf32>
    %18 = arith.addf %16, %17 : vector<128x128xf32>
    %19 = vector.broadcast %10 : vector<1x128xf32> to vector<128x128xf32>
    %20 = arith.addf %18, %19 : vector<128x128xf32>
    %cst_25 = arith.constant dense<0.000000e+00> : vector<128x128xf32>
    %21 = tpu.matmul %3, %7, %cst_25 {dimension_numbers = #tpu.dot_dimension_numbers<[1], [0], [0], [1], [0, 0, 1, 1], [], []>} : vector<128x128xbf16>, vector<128x128xbf16>, vector<128x128xf32> -> vector<128x128xf32>
    %22 = arith.truncf %21 : vector<128x128xf32> to vector<128x128xbf16>
    %cst_26 = arith.constant dense<0.000000e+00> : vector<128x128xf32>
    %23 = tpu.matmul %22, %11, %cst_26 {dimension_numbers = #tpu.dot_dimension_numbers<[1], [0], [0], [1], [0, 0, 1, 1], [], []>} : vector<128x128xbf16>, vector<128x128xbf16>, vector<128x128xf32> -> vector<128x128xf32>
    %cst_27 = arith.constant dense<0.000000e+00> : vector<128x128xf32>
    %24 = tpu.matmul %5, %12, %cst_27 {dimension_numbers = #tpu.dot_dimension_numbers<[1], [0], [0], [1], [0, 0, 1, 1], [], []>} : vector<128x128xbf16>, vector<128x128xbf16>, vector<128x128xf32> -> vector<128x128xf32>
    %25 = arith.addf %23, %24 : vector<128x128xf32>
    %26 = vector.broadcast %13 : vector<1x128xf32> to vector<128x128xf32>
    %27 = arith.addf %25, %26 : vector<128x128xf32>
    %cst_28 = arith.constant 0.00999999977 : f32
    %28 = vector.broadcast %cst_28 : f32 to vector<128x128xf32>
    %29 = arith.mulf %28, %20 : vector<128x128xf32>
    %30 = arith.maximumf %20, %29 : vector<128x128xf32>
    %cst_29 = arith.constant 0.00999999977 : f32
    %31 = vector.broadcast %cst_29 : f32 to vector<128x128xf32>
    %32 = arith.mulf %31, %27 : vector<128x128xf32>
    %33 = arith.maximumf %27, %32 : vector<128x128xf32>
    %34 = arith.truncf %30 : vector<128x128xf32> to vector<128x128xbf16>
    %35 = arith.truncf %33 : vector<128x128xf32> to vector<128x128xbf16>
    %c0_30 = arith.constant 0 : index
    %c0_31 = arith.constant 0 : index
    %36 = vector.load %arg12[%c0_30, %c0_31] : memref<128x128xbf16, #tpu.memory_space<vmem>>, vector<128x128xbf16>
    %c0_32 = arith.constant 0 : index
    %c0_33 = arith.constant 0 : index
    %37 = vector.load %arg13[%c0_32, %c0_33] : memref<128x128xbf16, #tpu.memory_space<vmem>>, vector<128x128xbf16>
    %c0_34 = arith.constant 0 : index
    %c0_35 = arith.constant 0 : index
    %38 = vector.load %arg14[%c0_34, %c0_35] : memref<1x128xf32, #tpu.memory_space<vmem>>, vector<1x128xf32>
    %cst_36 = arith.constant dense<0.000000e+00> : vector<128x128xf32>
    %39 = tpu.matmul %1, %35, %cst_36 {dimension_numbers = #tpu.dot_dimension_numbers<[1], [0], [0], [1], [0, 0, 1, 1], [], []>} : vector<128x128xbf16>, vector<128x128xbf16>, vector<128x128xf32> -> vector<128x128xf32>
    %40 = arith.truncf %39 : vector<128x128xf32> to vector<128x128xbf16>
    %cst_37 = arith.constant dense<0.000000e+00> : vector<128x128xf32>
    %41 = tpu.matmul %40, %36, %cst_37 {dimension_numbers = #tpu.dot_dimension_numbers<[1], [0], [0], [1], [0, 0, 1, 1], [], []>} : vector<128x128xbf16>, vector<128x128xbf16>, vector<128x128xf32> -> vector<128x128xf32>
    %cst_38 = arith.constant dense<0.000000e+00> : vector<128x128xf32>
    %42 = tpu.matmul %34, %37, %cst_38 {dimension_numbers = #tpu.dot_dimension_numbers<[1], [0], [0], [1], [0, 0, 1, 1], [], []>} : vector<128x128xbf16>, vector<128x128xbf16>, vector<128x128xf32> -> vector<128x128xf32>
    %43 = arith.addf %41, %42 : vector<128x128xf32>
    %44 = vector.broadcast %38 : vector<1x128xf32> to vector<128x128xf32>
    %45 = arith.addf %43, %44 : vector<128x128xf32>
    %cst_39 = arith.constant 0.00999999977 : f32
    %46 = vector.broadcast %cst_39 : f32 to vector<128x128xf32>
    %47 = arith.mulf %46, %45 : vector<128x128xf32>
    %48 = arith.maximumf %45, %47 : vector<128x128xf32>
    %49 = arith.truncf %48 : vector<128x128xf32> to vector<128x128xbf16>
    %c0_40 = arith.constant 0 : index
    %c0_41 = arith.constant 0 : index
    %50 = vector.load %arg18[%c0_40, %c0_41] : memref<128x128xbf16, #tpu.memory_space<vmem>>, vector<128x128xbf16>
    %cst_42 = arith.constant dense<0.000000e+00> : vector<128x128xf32>
    %51 = tpu.matmul %49, %50, %cst_42 {dimension_numbers = #tpu.dot_dimension_numbers<[1], [0], [0], [1], [0, 0, 1, 1], [], []>} : vector<128x128xbf16>, vector<128x128xbf16>, vector<128x128xf32> -> vector<128x128xf32>
    %c0_43 = arith.constant 0 : index
    %c0_44 = arith.constant 0 : index
    %52 = vector.load %arg19[%c0_43, %c0_44] : memref<1x128xf32, #tpu.memory_space<vmem>>, vector<1x128xf32>
    %53 = vector.broadcast %52 : vector<1x128xf32> to vector<128x128xf32>
    %54 = arith.addf %51, %53 : vector<128x128xf32>
    %c0_45 = arith.constant 0 : index
    %c0_46 = arith.constant 0 : index
    %55 = vector.load %arg20[%c0_45, %c0_46] : memref<128x128xbf16, #tpu.memory_space<vmem>>, vector<128x128xbf16>
    %cst_47 = arith.constant dense<0.000000e+00> : vector<128x128xf32>
    %56 = tpu.matmul %7, %55, %cst_47 {dimension_numbers = #tpu.dot_dimension_numbers<[1], [0], [0], [1], [0, 0, 1, 1], [], []>} : vector<128x128xbf16>, vector<128x128xbf16>, vector<128x128xf32> -> vector<128x128xf32>
    %c0_48 = arith.constant 0 : index
    %c0_49 = arith.constant 0 : index
    %57 = vector.load %arg21[%c0_48, %c0_49] : memref<1x128xf32, #tpu.memory_space<vmem>>, vector<1x128xf32>
    %58 = vector.broadcast %57 : vector<1x128xf32> to vector<128x128xf32>
    %59 = arith.addf %56, %58 : vector<128x128xf32>
    %c0_50 = arith.constant 0 : index
    %c0_51 = arith.constant 0 : index
    %60 = memref.load %arg1[%c0_50, %c0_51] : memref<1x1xf32, #tpu.memory_space<smem>>
    %61 = vector.broadcast %60 : f32 to vector<128x128xf32>
    %62 = arith.mulf %61, %54 : vector<128x128xf32>
    %cst_52 = arith.constant 1.000000e+00 : f32
    %63 = arith.subf %cst_52, %60 : f32
    %64 = vector.broadcast %63 : f32 to vector<128x128xf32>
    %65 = arith.mulf %64, %59 : vector<128x128xf32>
    %66 = arith.addf %62, %65 : vector<128x128xf32>
    %c0_53 = arith.constant 0 : index
    %c0_54 = arith.constant 0 : index
    %c0_55 = arith.constant 0 : index
    %67 = vector.load %arg22[%c0_53, %c0_54, %c0_55] : memref<1x128x128xf32, #tpu.memory_space<vmem>>, vector<1x128x128xf32>
    %68 = vector.shape_cast %67 : vector<1x128x128xf32> to vector<128x128xf32>
    %69 = vector.shape_cast %66 : vector<128x128xf32> to vector<1x128x128xf32>
    tpu.vector_store %arg22[%c0_53, %c0_54, %c0_55], %69 {strides = array<i32>} : memref<1x128x128xf32, #tpu.memory_space<vmem>>, vector<1x128x128xf32>,
    return
  }
  func.func @transform_0(%arg0: i32) -> (i32, i32) {
    %c0_i32 = arith.constant 0 : i32
    %c0_i32_0 = arith.constant 0 : i32
    %c0_i32_1 = arith.constant 0 : i32
    return %c0_i32, %c0_i32_0 : i32, i32
  }
  func.func @transform_1(%arg0: i32) -> (i32, i32, i32) {
    %c0_i32 = arith.constant 0 : i32
    %c0_i32_0 = arith.constant 0 : i32
    %c0_i32_1 = arith.constant 0 : i32
    return %arg0, %c0_i32, %c0_i32_0 : i32, i32, i32
  }
  func.func @transform_2(%arg0: i32) -> (i32, i32, i32) {
    %c0_i32 = arith.constant 0 : i32
    %c0_i32_0 = arith.constant 0 : i32
    %c0_i32_1 = arith.constant 0 : i32
    return %arg0, %c0_i32, %c0_i32_0 : i32, i32, i32
  }
  func.func @transform_3(%arg0: i32) -> (i32, i32, i32) {
    %c0_i32 = arith.constant 0 : i32
    %c0_i32_0 = arith.constant 0 : i32
    %c0_i32_1 = arith.constant 0 : i32
    return %arg0, %c0_i32, %c0_i32_0 : i32, i32, i32
  }
  func.func @transform_4(%arg0: i32) -> (i32, i32, i32) {
    %c0_i32 = arith.constant 0 : i32
    %c0_i32_0 = arith.constant 0 : i32
    %c0_i32_1 = arith.constant 0 : i32
    return %arg0, %c0_i32, %c0_i32_0 : i32, i32, i32
  }
  func.func @transform_5(%arg0: i32) -> (i32, i32) {
    %c0_i32 = arith.constant 0 : i32
    %c0_i32_0 = arith.constant 0 : i32
    %c0_i32_1 = arith.constant 0 : i32
    return %c0_i32, %c0_i32_0 : i32, i32
  }
  func.func @transform_6(%arg0: i32) -> (i32, i32) {
    %c0_i32 = arith.constant 0 : i32
    %c0_i32_0 = arith.constant 0 : i32
    %c0_i32_1 = arith.constant 0 : i32
    return %c0_i32, %c0_i32_0 : i32, i32
  }
  func.func @transform_7(%arg0: i32) -> (i32, i32) {
    %c0_i32 = arith.constant 0 : i32
    %c0_i32_0 = arith.constant 0 : i32
    %c0_i32_1 = arith.constant 0 : i32
    return %c0_i32, %c0_i32_0 : i32, i32
  }
  func.func @transform_8(%arg0: i32) -> (i32, i32) {
    %c0_i32 = arith.constant 0 : i32
    %c0_i32_0 = arith.constant 0 : i32
    %c0_i32_1 = arith.constant 0 : i32
    return %c0_i32, %c0_i32_0 : i32, i32
  }
  func.func @transform_9(%arg0: i32) -> (i32, i32) {
    %c0_i32 = arith.constant 0 : i32
    %c0_i32_0 = arith.constant 0 : i32
    %c0_i32_1 = arith.constant 0 : i32
    return %c0_i32, %c0_i32_0 : i32, i32
  }
  func.func @transform_10(%arg0: i32) -> (i32, i32) {
    %c0_i32 = arith.constant 0 : i32
    %c0_i32_0 = arith.constant 0 : i32
    %c0_i32_1 = arith.constant 0 : i32
    return %c0_i32, %c0_i32_0 : i32, i32
  }
  func.func @transform_11(%arg0: i32) -> (i32, i32) {
    %c0_i32 = arith.constant 0 : i32
    %c0_i32_0 = arith.constant 0 : i32
    %c0_i32_1 = arith.constant 0 : i32
    return %c0_i32, %c0_i32_0 : i32, i32
  }
  func.func @transform_12(%arg0: i32) -> (i32, i32) {
    %c0_i32 = arith.constant 0 : i32
    %c0_i32_0 = arith.constant 0 : i32
    %c0_i32_1 = arith.constant 0 : i32
    return %c0_i32, %c0_i32_0 : i32, i32
  }
  func.func @transform_13(%arg0: i32) -> (i32, i32) {
    %c0_i32 = arith.constant 0 : i32
    %c0_i32_0 = arith.constant 0 : i32
    %c0_i32_1 = arith.constant 0 : i32
    return %c0_i32, %c0_i32_0 : i32, i32
  }
  func.func @transform_14(%arg0: i32) -> (i32, i32) {
    %c0_i32 = arith.constant 0 : i32
    %c0_i32_0 = arith.constant 0 : i32
    %c0_i32_1 = arith.constant 0 : i32
    return %c0_i32, %c0_i32_0 : i32, i32
  }
  func.func @transform_15(%arg0: i32) -> (i32, i32) {
    %c0_i32 = arith.constant 0 : i32
    %c0_i32_0 = arith.constant 0 : i32
    %c0_i32_1 = arith.constant 0 : i32
    return %c0_i32, %c0_i32_0 : i32, i32
  }
  func.func @transform_16(%arg0: i32) -> (i32, i32) {
    %c0_i32 = arith.constant 0 : i32
    %c0_i32_0 = arith.constant 0 : i32
    %c0_i32_1 = arith.constant 0 : i32
    return %c0_i32, %c0_i32_0 : i32, i32
  }
  func.func @transform_17(%arg0: i32) -> (i32, i32) {
    %c0_i32 = arith.constant 0 : i32
    %c0_i32_0 = arith.constant 0 : i32
    %c0_i32_1 = arith.constant 0 : i32
    return %c0_i32, %c0_i32_0 : i32, i32
  }
  func.func @transform_18(%arg0: i32) -> (i32, i32) {
    %c0_i32 = arith.constant 0 : i32
    %c0_i32_0 = arith.constant 0 : i32
    %c0_i32_1 = arith.constant 0 : i32
    return %c0_i32, %c0_i32_0 : i32, i32
  }
  func.func @transform_19(%arg0: i32) -> (i32, i32) {
    %c0_i32 = arith.constant 0 : i32
    %c0_i32_0 = arith.constant 0 : i32
    %c0_i32_1 = arith.constant 0 : i32
    return %c0_i32, %c0_i32_0 : i32, i32
  }
  func.func @transform_20(%arg0: i32) -> (i32, i32) {
    %c0_i32 = arith.constant 0 : i32
    %c0_i32_0 = arith.constant 0 : i32
    %c0_i32_1 = arith.constant 0 : i32
    return %c0_i32, %c0_i32_0 : i32, i32
  }
  func.func @transform_21(%arg0: i32) -> (i32, i32, i32) {
    %c0_i32 = arith.constant 0 : i32
    %c0_i32_0 = arith.constant 0 : i32
    %c0_i32_1 = arith.constant 0 : i32
    return %arg0, %c0_i32, %c0_i32_0 : i32, i32, i32
  }
}

</mosaic_0001>

<llo_original>
// kernel: tpu_custom_call.1
$region0: #{tpu_custom_call.1}
  #allocation0 [shape = 'u32[]', space=smem, size = 0x4, offset = 0x4, fixed_abs, tag = 'smem constant byte address 0x4 - core index']
  #allocation1 [shape = 'u32[144,128]{1,0:T(1,128)}', space=vmem, size = 0x12000, scoped, tag = 'internal scratch']
  #allocation2 [shape = 'f32[1,1]{1,0:T(1,128)S(6)}', space=smem, size = 0x200, scoped, tag = 'scoped memory for tpu_custom_call.1']
  %s0 = inlined_call_operand.<no memory space> [shape: f32[1,1], index: 0, kind: input, shape index: {}]
  %s1 = inlined_call_operand.hbm [shape: bf16[2,128,128], index: 1, kind: input, shape index: {}]
  %s2 = inlined_call_operand.hbm [shape: bf16[2,128,128], index: 2, kind: input, shape index: {}]
  %s3 = inlined_call_operand.hbm [shape: bf16[2,128,128], index: 3, kind: input, shape index: {}]
  %s4 = inlined_call_operand.hbm [shape: bf16[2,128,128], index: 4, kind: input, shape index: {}]
  %s5 = inlined_call_operand.hbm [shape: bf16[128,128], index: 5, kind: input, shape index: {}]
  %s6 = inlined_call_operand.hbm [shape: bf16[128,128], index: 6, kind: input, shape index: {}]
  %s7 = inlined_call_operand.hbm [shape: f32[1,128], index: 7, kind: input, shape index: {}]
  %s8 = inlined_call_operand.hbm [shape: bf16[128,128], index: 8, kind: input, shape index: {}]
  %s9 = inlined_call_operand.hbm [shape: bf16[128,128], index: 9, kind: input, shape index: {}]
  %s10 = inlined_call_operand.hbm [shape: f32[1,128], index: 10, kind: input, shape index: {}]
  %s11 = inlined_call_operand.hbm [shape: bf16[128,128], index: 11, kind: input, shape index: {}]
  %s12 = inlined_call_operand.hbm [shape: bf16[128,128], index: 12, kind: input, shape index: {}]
  %s13 = inlined_call_operand.hbm [shape: f32[1,128], index: 13, kind: input, shape index: {}]
  %s14 = inlined_call_operand.hbm [shape: bf16[128,128], index: 14, kind: input, shape index: {}]
  %s15 = inlined_call_operand.hbm [shape: bf16[128,128], index: 15, kind: input, shape index: {}]
  %s16 = inlined_call_operand.hbm [shape: f32[1,128], index: 16, kind: input, shape index: {}]
  %s17 = inlined_call_operand.vmem [shape: bf16[128,128], index: 17, kind: input, shape index: {}]
  %s18 = inlined_call_operand.vmem [shape: f32[1,128], index: 18, kind: input, shape index: {}]
  %s19 = inlined_call_operand.hbm [shape: bf16[128,128], index: 19, kind: input, shape index: {}]
  %s20 = inlined_call_operand.vmem [shape: f32[1,128], index: 20, kind: input, shape index: {}]
  %s21 = inlined_call_operand.hbm [shape: f32[2,128,128], index: 21, kind: output, shape index: {}]
  %s22 = sld [smem:[#allocation0]]
  $region185: #{tpu_custom_call.1} parent=0
    _
  %s24 = ssub.s32 1, %s22
  %s25 = scalar_select 0, %s24, %s22
  %26 = sst [smem:[#allocation2]] %s0
  $region1: #{tpu_custom_call.1} parent=0
    #allocation3 [shape = 'u8[65536]{0}', space=vmem, size = 0x10000, scoped, tag = 'input window, operand 1']
    #allocation4 [shape = 's32[2]{0}', space=sflag, size = 0x8, scoped, tag = 'scoped memory for tpu_custom_call.1']
    #allocation5 [shape = 's32[2]{0}', space=sflag, size = 0x8, scoped, tag = 'scoped memory for tpu_custom_call.1']
    #allocation6 [shape = 'u8[65536]{0}', space=vmem, size = 0x10000, scoped, tag = 'input window, operand 2']
    #allocation7 [shape = 's32[2]{0}', space=sflag, size = 0x8, scoped, tag = 'scoped memory for tpu_custom_call.1']
    #allocation8 [shape = 'u8[65536]{0}', space=vmem, size = 0x10000, scoped, tag = 'input window, operand 3']
    #allocation9 [shape = 'u8[65536]{0}', space=vmem, size = 0x10000, scoped, tag = 'input window, operand 4']
    #allocation10 [shape = 's32[2]{0}', space=sflag, size = 0x8, scoped, tag = 'scoped memory for tpu_custom_call.1']
    #allocation11 [shape = 'u8[32768]{0}', space=vmem, size = 0x8000, scoped, tag = 'input window, operand 5, single buffered']
    #allocation12 [shape = 'u8[32768]{0}', space=vmem, size = 0x8000, scoped, tag = 'input window, operand 6, single buffered']
    #allocation13 [shape = 's32[1]{0}', space=sflag, size = 0x4, scoped, tag = 'scoped memory for tpu_custom_call.1']
    #allocation14 [shape = 'u8[512]{0}', space=vmem, size = 0x400, scoped, tag = 'input window, operand 7, single buffered']
    #allocation15 [shape = 'u8[32768]{0}', space=vmem, size = 0x8000, scoped, tag = 'input window, operand 8, single buffered']
    #allocation16 [shape = 's32[1]{0}', space=sflag, size = 0x4, scoped, tag = 'scoped memory for tpu_custom_call.1']
    #allocation17 [shape = 'u8[32768]{0}', space=vmem, size = 0x8000, scoped, tag = 'input window, operand 9, single buffered']
    #allocation18 [shape = 'u8[512]{0}', space=vmem, size = 0x400, scoped, tag = 'input window, operand 10, single buffered']
    #allocation19 [shape = 's32[1]{0}', space=sflag, size = 0x4, scoped, tag = 'scoped memory for tpu_custom_call.1']
    #allocation20 [shape = 'u8[32768]{0}', space=vmem, size = 0x8000, scoped, tag = 'input window, operand 11, single buffered']
    #allocation21 [shape = 'u8[32768]{0}', space=vmem, size = 0x8000, scoped, tag = 'input window, operand 12, single buffered']
    #allocation22 [shape = 's32[1]{0}', space=sflag, size = 0x4, scoped, tag = 'scoped memory for tpu_custom_call.1']
    #allocation23 [shape = 'u8[512]{0}', space=vmem, size = 0x400, scoped, tag = 'input window, operand 13, single buffered']
    #allocation24 [shape = 'u8[32768]{0}', space=vmem, size = 0x8000, scoped, tag = 'input window, operand 14, single buffered']
    #allocation25 [shape = 's32[1]{0}', space=sflag, size = 0x4, scoped, tag = 'scoped memory for tpu_custom_call.1']
    #allocation26 [shape = 'u8[32768]{0}', space=vmem, size = 0x8000, scoped, tag = 'input window, operand 15, single buffered']
    #allocation27 [shape = 'u8[512]{0}', space=vmem, size = 0x400, scoped, tag = 'input window, operand 16, single buffered']
    #allocation28 [shape = 's32[1]{0}', space=sflag, size = 0x4, scoped, tag = 'scoped memory for tpu_custom_call.1']
    #allocation29 [shape = 'u8[32768]{0}', space=vmem, size = 0x8000, scoped, tag = 'input window, operand 19, single buffered']
    #allocation30 [shape = 'u8[131072]{0}', space=vmem, size = 0x20000, scoped, tag = 'output window, operand 0']
    %27 = vsyncpa [#allocation4], 0
    %s28 = scalar_lea.sflag [#allocation4], 1
    %29 = vsyncpa %s28, 0
    %30 = vsyncpa [#allocation7], 0
    %s31 = scalar_lea.sflag [#allocation7], 1
    %32 = vsyncpa %s31, 0
    %33 = vsyncpa [#allocation10], 0
    %s34 = scalar_lea.sflag [#allocation10], 1
    %35 = vsyncpa %s34, 0
    %36 = vsyncpa [#allocation13], 0
    %37 = vsyncpa [#allocation16], 0
    %38 = vsyncpa [#allocation19], 0
    %39 = vsyncpa [#allocation22], 0
    %40 = vsyncpa [#allocation25], 0
    %41 = vsyncpa [#allocation28], 0
    %42 = vsyncpa [#allocation5], 0
    %s43 = scalar_lea.sflag [#allocation5], 1
    %44 = vsyncpa %s43, 0
    loop: start=0, step=1, limit=4
    $region2: #{tpu_custom_call.1} parent=1 // loop_pre_header
      _
    $region3: #{tpu_custom_call.1} parent=1 // loop_header
      %s46 = sphi 0, %s50
      %p47 = scmp.ge.s32.totalorder %s46, 4
      %s54 = sphi 0, %s54
      %s56 = sphi 0, %s54
      %s57 = sphi 0, %s56
      %s71 = sphi 0, %s57
      %s77 = sphi 0, %s79
      %s80 = sphi 0, %s77
      %s81 = sphi 0, %s80
      %s97 = sphi 0, %s81
      %s103 = sphi 0, %s105
      %s106 = sphi 0, %s103
      %s107 = sphi 0, %s106
      %s123 = sphi 0, %s107
      %s129 = sphi 0, %s131
      %s132 = sphi 0, %s129
      %s133 = sphi 0, %s132
      %s149 = sphi 0, %s133
      %s155 = sphi 0, %s157
      %s158 = sphi 0, %s155
      %s159 = sphi 0, %s158
      %s175 = sphi 0, %s159
      %s179 = sphi 0, %s179
      %s181 = sphi 0, %s179
      %s182 = sphi 0, %s181
      %s196 = sphi 0, %s182
      %s200 = sphi 0, %s200
      %s202 = sphi 0, %s200
      %s203 = sphi 0, %s202
      %s217 = sphi 0, %s203
      %s221 = sphi 0, %s221
      %s223 = sphi 0, %s221
      %s224 = sphi 0, %s223
      %s238 = sphi 0, %s224
      %s242 = sphi 0, %s242
      %s244 = sphi 0, %s242
      %s245 = sphi 0, %s244
      %s259 = sphi 0, %s245
      %s263 = sphi 0, %s263
      %s265 = sphi 0, %s263
      %s266 = sphi 0, %s265
      %s280 = sphi 0, %s266
      %s284 = sphi 0, %s284
      %s286 = sphi 0, %s284
      %s287 = sphi 0, %s286
      %s301 = sphi 0, %s287
      %s305 = sphi 0, %s305
      %s307 = sphi 0, %s305
      %s308 = sphi 0, %s307
      %s322 = sphi 0, %s308
      %s326 = sphi 0, %s326
      %s328 = sphi 0, %s326
      %s329 = sphi 0, %s328
      %s343 = sphi 0, %s329
      %s347 = sphi 0, %s347
      %s349 = sphi 0, %s347
      %s350 = sphi 0, %s349
      %s364 = sphi 0, %s350
      %s368 = sphi 0, %s368
      %s370 = sphi 0, %s368
      %s371 = sphi 0, %s370
      %s385 = sphi 0, %s371
      %s389 = sphi 0, %s389
      %s391 = sphi 0, %s389
      %s392 = sphi 0, %s391
      %s406 = sphi 0, %s392
      %s410 = sphi 0, %s410
      %s412 = sphi 0, %s410
      %s413 = sphi 0, %s412
      %s427 = sphi 0, %s413
      %s431 = sphi 0, %s431
      %s433 = sphi 0, %s431
      %s434 = sphi 0, %s433
      %s448 = sphi 0, %s434
      %s452 = sphi 0, %s452
      %s454 = sphi 0, %s452
      %s455 = sphi 0, %s454
      %s469 = sphi 0, %s455
      %s473 = sphi 0, %s473
      %s475 = sphi 0, %s473
      %s476 = sphi 0, %s475
      %s490 = sphi 0, %s476
      %s494 = sphi 0, %s494
      %s496 = sphi 0, %s494
      %s497 = sphi 0, %s496
      %s511 = sphi 0, %s497
      %s517 = sphi 0, %s519
      %s520 = sphi 0, %s517
      %s521 = sphi 0, %s520
      %s537 = sphi 0, %s521
    $region4: #{tpu_custom_call.1} parent=1 // loop_header_branch
      %49 = sbr.rel (%p47) target = $region8
    $region5: #{tpu_custom_call.1} parent=1 // loop_body
      %s51 = ssub.s32 %s46, 1
      %s52 = ssub.s32 %s46, 2
      %s53 = sadd.s32 %s46, 1
      %s55 = sadd.s32 %s54, 1
      %p58 = scmp.eq.s32.totalorder %s46, 1
      %p59 = scmp.ne.s32.totalorder %s54, %s56
      %p60 = scmp.eq.s32.totalorder %s46, 0
      %p61 = por %p59, %p60
      %p62 = scmp.ne.s32.totalorder %s54, %s56
      %p63 = scmp.eq.s32.totalorder %s51, 1
      %p64 = por %p62, %p63
      %p65 = scmp.ne.s32.totalorder %s56, %s57
      %p66 = scmp.eq.s32.totalorder %s51, 0
      %p67 = por %p65, %p66
      %p68 = scmp.ne.s32.totalorder %s56, %s57
      %p69 = scmp.eq.s32.totalorder %s52, 1
      %p70 = por %p68, %p69
      %p72 = scmp.ne.s32.totalorder %s57, %s71
      %p73 = scmp.eq.s32.totalorder %s52, 0
      %p74 = por %p72, %p73
      %s75 = ssub.s32 %s46, %s53
      %p76 = scmp.eq.s32.totalorder %s75, 0
      %s78 = sadd.s32 %s77, 1
      %s79 = scalar_select %p76, %s77, %s78
      %p82 = pneg %p76
      %p83 = scmp.eq.s32.totalorder %s46, 1
      %p84 = por %p82, %p83
      %p85 = scmp.ne.s32.totalorder %s77, %s80
      %p86 = scmp.eq.s32.totalorder %s46, 0
      %p87 = por %p85, %p86
      %p88 = scmp.ne.s32.totalorder %s77, %s80
      %p89 = scmp.eq.s32.totalorder %s51, 1
      %p90 = por %p88, %p89
      %p91 = scmp.ne.s32.totalorder %s80, %s81
      %p92 = scmp.eq.s32.totalorder %s51, 0
      %p93 = por %p91, %p92
      %p94 = scmp.ne.s32.totalorder %s80, %s81
      %p95 = scmp.eq.s32.totalorder %s52, 1
      %p96 = por %p94, %p95
      %p98 = scmp.ne.s32.totalorder %s81, %s97
      %p99 = scmp.eq.s32.totalorder %s52, 0
      %p100 = por %p98, %p99
      %s101 = ssub.s32 %s46, %s53
      %p102 = scmp.eq.s32.totalorder %s101, 0
      %s104 = sadd.s32 %s103, 1
      %s105 = scalar_select %p102, %s103, %s104
      %p108 = pneg %p102
      %p109 = scmp.eq.s32.totalorder %s46, 1
      %p110 = por %p108, %p109
      %p111 = scmp.ne.s32.totalorder %s103, %s106
      %p112 = scmp.eq.s32.totalorder %s46, 0
      %p113 = por %p111, %p112
      %p114 = scmp.ne.s32.totalorder %s103, %s106
      %p115 = scmp.eq.s32.totalorder %s51, 1
      %p116 = por %p114, %p115
      %p117 = scmp.ne.s32.totalorder %s106, %s107
      %p118 = scmp.eq.s32.totalorder %s51, 0
      %p119 = por %p117, %p118
      %p120 = scmp.ne.s32.totalorder %s106, %s107
      %p121 = scmp.eq.s32.totalorder %s52, 1
      %p122 = por %p120, %p121
      %p124 = scmp.ne.s32.totalorder %s107, %s123
      %p125 = scmp.eq.s32.totalorder %s52, 0
      %p126 = por %p124, %p125
      %s127 = ssub.s32 %s46, %s53
      %p128 = scmp.eq.s32.totalorder %s127, 0
      %s130 = sadd.s32 %s129, 1
      %s131 = scalar_select %p128, %s129, %s130
      %p134 = pneg %p128
      %p135 = scmp.eq.s32.totalorder %s46, 1
      %p136 = por %p134, %p135
      %p137 = scmp.ne.s32.totalorder %s129, %s132
      %p138 = scmp.eq.s32.totalorder %s46, 0
      %p139 = por %p137, %p138
      %p140 = scmp.ne.s32.totalorder %s129, %s132
      %p141 = scmp.eq.s32.totalorder %s51, 1
      %p142 = por %p140, %p141
      %p143 = scmp.ne.s32.totalorder %s132, %s133
      %p144 = scmp.eq.s32.totalorder %s51, 0
      %p145 = por %p143, %p144
      %p146 = scmp.ne.s32.totalorder %s132, %s133
      %p147 = scmp.eq.s32.totalorder %s52, 1
      %p148 = por %p146, %p147
      %p150 = scmp.ne.s32.totalorder %s133, %s149
      %p151 = scmp.eq.s32.totalorder %s52, 0
      %p152 = por %p150, %p151
      %s153 = ssub.s32 %s46, %s53
      %p154 = scmp.eq.s32.totalorder %s153, 0
      %s156 = sadd.s32 %s155, 1
      %s157 = scalar_select %p154, %s155, %s156
      %p160 = pneg %p154
      %p161 = scmp.eq.s32.totalorder %s46, 1
      %p162 = por %p160, %p161
      %p163 = scmp.ne.s32.totalorder %s155, %s158
      %p164 = scmp.eq.s32.totalorder %s46, 0
      %p165 = por %p163, %p164
      %p166 = scmp.ne.s32.totalorder %s155, %s158
      %p167 = scmp.eq.s32.totalorder %s51, 1
      %p168 = por %p166, %p167
      %p169 = scmp.ne.s32.totalorder %s158, %s159
      %p170 = scmp.eq.s32.totalorder %s51, 0
      %p171 = por %p169, %p170
      %p172 = scmp.ne.s32.totalorder %s158, %s159
      %p173 = scmp.eq.s32.totalorder %s52, 1
      %p174 = por %p172, %p173
      %p176 = scmp.ne.s32.totalorder %s159, %s175
      %p177 = scmp.eq.s32.totalorder %s52, 0
      %p178 = por %p176, %p177
      %s180 = sadd.s32 %s179, 1
      %p183 = scmp.eq.s32.totalorder %s46, 1
      %p184 = scmp.ne.s32.totalorder %s179, %s181
      %p185 = scmp.eq.s32.totalorder %s46, 0
      %p186 = por %p184, %p185
      %p187 = scmp.ne.s32.totalorder %s179, %s181
      %p188 = scmp.eq.s32.totalorder %s51, 1
      %p189 = por %p187, %p188
      %p190 = scmp.ne.s32.totalorder %s181, %s182
      %p191 = scmp.eq.s32.totalorder %s51, 0
      %p192 = por %p190, %p191
      %p193 = scmp.ne.s32.totalorder %s181, %s182
      %p194 = scmp.eq.s32.totalorder %s52, 1
      %p195 = por %p193, %p194
      %p197 = scmp.ne.s32.totalorder %s182, %s196
      %p198 = scmp.eq.s32.totalorder %s52, 0
      %p199 = por %p197, %p198
      %s201 = sadd.s32 %s200, 1
      %p204 = scmp.eq.s32.totalorder %s46, 1
      %p205 = scmp.ne.s32.totalorder %s200, %s202
      %p206 = scmp.eq.s32.totalorder %s46, 0
      %p207 = por %p205, %p206
      %p208 = scmp.ne.s32.totalorder %s200, %s202
      %p209 = scmp.eq.s32.totalorder %s51, 1
      %p210 = por %p208, %p209
      %p211 = scmp.ne.s32.totalorder %s202, %s203
      %p212 = scmp.eq.s32.totalorder %s51, 0
      %p213 = por %p211, %p212
      %p214 = scmp.ne.s32.totalorder %s202, %s203
      %p215 = scmp.eq.s32.totalorder %s52, 1
      %p216 = por %p214, %p215
      %p218 = scmp.ne.s32.totalorder %s203, %s217
      %p219 = scmp.eq.s32.totalorder %s52, 0
      %p220 = por %p218, %p219
      %s222 = sadd.s32 %s221, 1
      %p225 = scmp.eq.s32.totalorder %s46, 1
      %p226 = scmp.ne.s32.totalorder %s221, %s223
      %p227 = scmp.eq.s32.totalorder %s46, 0
      %p228 = por %p226, %p227
      %p229 = scmp.ne.s32.totalorder %s221, %s223
      %p230 = scmp.eq.s32.totalorder %s51, 1
      %p231 = por %p229, %p230
      %p232 = scmp.ne.s32.totalorder %s223, %s224
      %p233 = scmp.eq.s32.totalorder %s51, 0
      %p234 = por %p232, %p233
      %p235 = scmp.ne.s32.totalorder %s223, %s224
      %p236 = scmp.eq.s32.totalorder %s52, 1
      %p237 = por %p235, %p236
      %p239 = scmp.ne.s32.totalorder %s224, %s238
      %p240 = scmp.eq.s32.totalorder %s52, 0
      %p241 = por %p239, %p240
      %s243 = sadd.s32 %s242, 1
      %p246 = scmp.eq.s32.totalorder %s46, 1
      %p247 = scmp.ne.s32.totalorder %s242, %s244
      %p248 = scmp.eq.s32.totalorder %s46, 0
      %p249 = por %p247, %p248
      %p250 = scmp.ne.s32.totalorder %s242, %s244
      %p251 = scmp.eq.s32.totalorder %s51, 1
      %p252 = por %p250, %p251
      %p253 = scmp.ne.s32.totalorder %s244, %s245
      %p254 = scmp.eq.s32.totalorder %s51, 0
      %p255 = por %p253, %p254
      %p256 = scmp.ne.s32.totalorder %s244, %s245
      %p257 = scmp.eq.s32.totalorder %s52, 1
      %p258 = por %p256, %p257
      %p260 = scmp.ne.s32.totalorder %s245, %s259
      %p261 = scmp.eq.s32.totalorder %s52, 0
      %p262 = por %p260, %p261
      %s264 = sadd.s32 %s263, 1
      %p267 = scmp.eq.s32.totalorder %s46, 1
      %p268 = scmp.ne.s32.totalorder %s263, %s265
      %p269 = scmp.eq.s32.totalorder %s46, 0
      %p270 = por %p268, %p269
      %p271 = scmp.ne.s32.totalorder %s263, %s265
      %p272 = scmp.eq.s32.totalorder %s51, 1
      %p273 = por %p271, %p272
      %p274 = scmp.ne.s32.totalorder %s265, %s266
      %p275 = scmp.eq.s32.totalorder %s51, 0
      %p276 = por %p274, %p275
      %p277 = scmp.ne.s32.totalorder %s265, %s266
      %p278 = scmp.eq.s32.totalorder %s52, 1
      %p279 = por %p277, %p278
      %p281 = scmp.ne.s32.totalorder %s266, %s280
      %p282 = scmp.eq.s32.totalorder %s52, 0
      %p283 = por %p281, %p282
      %s285 = sadd.s32 %s284, 1
      %p288 = scmp.eq.s32.totalorder %s46, 1
      %p289 = scmp.ne.s32.totalorder %s284, %s286
      %p290 = scmp.eq.s32.totalorder %s46, 0
      %p291 = por %p289, %p290
      %p292 = scmp.ne.s32.totalorder %s284, %s286
      %p293 = scmp.eq.s32.totalorder %s51, 1
      %p294 = por %p292, %p293
      %p295 = scmp.ne.s32.totalorder %s286, %s287
      %p296 = scmp.eq.s32.totalorder %s51, 0
      %p297 = por %p295, %p296
      %p298 = scmp.ne.s32.totalorder %s286, %s287
      %p299 = scmp.eq.s32.totalorder %s52, 1
      %p300 = por %p298, %p299
      %p302 = scmp.ne.s32.totalorder %s287, %s301
      %p303 = scmp.eq.s32.totalorder %s52, 0
      %p304 = por %p302, %p303
      %s306 = sadd.s32 %s305, 1
      %p309 = scmp.eq.s32.totalorder %s46, 1
      %p310 = scmp.ne.s32.totalorder %s305, %s307
      %p311 = scmp.eq.s32.totalorder %s46, 0
      %p312 = por %p310, %p311
      %p313 = scmp.ne.s32.totalorder %s305, %s307
      %p314 = scmp.eq.s32.totalorder %s51, 1
      %p315 = por %p313, %p314
      %p316 = scmp.ne.s32.totalorder %s307, %s308
      %p317 = scmp.eq.s32.totalorder %s51, 0
      %p318 = por %p316, %p317
      %p319 = scmp.ne.s32.totalorder %s307, %s308
      %p320 = scmp.eq.s32.totalorder %s52, 1
      %p321 = por %p319, %p320
      %p323 = scmp.ne.s32.totalorder %s308, %s322
      %p324 = scmp.eq.s32.totalorder %s52, 0
      %p325 = por %p323, %p324
      %s327 = sadd.s32 %s326, 1
      %p330 = scmp.eq.s32.totalorder %s46, 1
      %p331 = scmp.ne.s32.totalorder %s326, %s328
      %p332 = scmp.eq.s32.totalorder %s46, 0
      %p333 = por %p331, %p332
      %p334 = scmp.ne.s32.totalorder %s326, %s328
      %p335 = scmp.eq.s32.totalorder %s51, 1
      %p336 = por %p334, %p335
      %p337 = scmp.ne.s32.totalorder %s328, %s329
      %p338 = scmp.eq.s32.totalorder %s51, 0
      %p339 = por %p337, %p338
      %p340 = scmp.ne.s32.totalorder %s328, %s329
      %p341 = scmp.eq.s32.totalorder %s52, 1
      %p342 = por %p340, %p341
      %p344 = scmp.ne.s32.totalorder %s329, %s343
      %p345 = scmp.eq.s32.totalorder %s52, 0
      %p346 = por %p344, %p345
      %s348 = sadd.s32 %s347, 1
      %p351 = scmp.eq.s32.totalorder %s46, 1
      %p352 = scmp.ne.s32.totalorder %s347, %s349
      %p353 = scmp.eq.s32.totalorder %s46, 0
      %p354 = por %p352, %p353
      %p355 = scmp.ne.s32.totalorder %s347, %s349
      %p356 = scmp.eq.s32.totalorder %s51, 1
      %p357 = por %p355, %p356
      %p358 = scmp.ne.s32.totalorder %s349, %s350
      %p359 = scmp.eq.s32.totalorder %s51, 0
      %p360 = por %p358, %p359
      %p361 = scmp.ne.s32.totalorder %s349, %s350
      %p362 = scmp.eq.s32.totalorder %s52, 1
      %p363 = por %p361, %p362
      %p365 = scmp.ne.s32.totalorder %s350, %s364
      %p366 = scmp.eq.s32.totalorder %s52, 0
      %p367 = por %p365, %p366
      %s369 = sadd.s32 %s368, 1
      %p372 = scmp.eq.s32.totalorder %s46, 1
      %p373 = scmp.ne.s32.totalorder %s368, %s370
      %p374 = scmp.eq.s32.totalorder %s46, 0
      %p375 = por %p373, %p374
      %p376 = scmp.ne.s32.totalorder %s368, %s370
      %p377 = scmp.eq.s32.totalorder %s51, 1
      %p378 = por %p376, %p377
      %p379 = scmp.ne.s32.totalorder %s370, %s371
      %p380 = scmp.eq.s32.totalorder %s51, 0
      %p381 = por %p379, %p380
      %p382 = scmp.ne.s32.totalorder %s370, %s371
      %p383 = scmp.eq.s32.totalorder %s52, 1
      %p384 = por %p382, %p383
      %p386 = scmp.ne.s32.totalorder %s371, %s385
      %p387 = scmp.eq.s32.totalorder %s52, 0
      %p388 = por %p386, %p387
      %s390 = sadd.s32 %s389, 1
      %p393 = scmp.eq.s32.totalorder %s46, 1
      %p394 = scmp.ne.s32.totalorder %s389, %s391
      %p395 = scmp.eq.s32.totalorder %s46, 0
      %p396 = por %p394, %p395
      %p397 = scmp.ne.s32.totalorder %s389, %s391
      %p398 = scmp.eq.s32.totalorder %s51, 1
      %p399 = por %p397, %p398
      %p400 = scmp.ne.s32.totalorder %s391, %s392
      %p401 = scmp.eq.s32.totalorder %s51, 0
      %p402 = por %p400, %p401
      %p403 = scmp.ne.s32.totalorder %s391, %s392
      %p404 = scmp.eq.s32.totalorder %s52, 1
      %p405 = por %p403, %p404
      %p407 = scmp.ne.s32.totalorder %s392, %s406
      %p408 = scmp.eq.s32.totalorder %s52, 0
      %p409 = por %p407, %p408
      %s411 = sadd.s32 %s410, 1
      %p414 = scmp.eq.s32.totalorder %s46, 1
      %p415 = scmp.ne.s32.totalorder %s410, %s412
      %p416 = scmp.eq.s32.totalorder %s46, 0
      %p417 = por %p415, %p416
      %p418 = scmp.ne.s32.totalorder %s410, %s412
      %p419 = scmp.eq.s32.totalorder %s51, 1
      %p420 = por %p418, %p419
      %p421 = scmp.ne.s32.totalorder %s412, %s413
      %p422 = scmp.eq.s32.totalorder %s51, 0
      %p423 = por %p421, %p422
      %p424 = scmp.ne.s32.totalorder %s412, %s413
      %p425 = scmp.eq.s32.totalorder %s52, 1
      %p426 = por %p424, %p425
      %p428 = scmp.ne.s32.totalorder %s413, %s427
      %p429 = scmp.eq.s32.totalorder %s52, 0
      %p430 = por %p428, %p429
      %s432 = sadd.s32 %s431, 1
      %p435 = scmp.eq.s32.totalorder %s46, 1
      %p436 = scmp.ne.s32.totalorder %s431, %s433
      %p437 = scmp.eq.s32.totalorder %s46, 0
      %p438 = por %p436, %p437
      %p439 = scmp.ne.s32.totalorder %s431, %s433
      %p440 = scmp.eq.s32.totalorder %s51, 1
      %p441 = por %p439, %p440
      %p442 = scmp.ne.s32.totalorder %s433, %s434
      %p443 = scmp.eq.s32.totalorder %s51, 0
      %p444 = por %p442, %p443
      %p445 = scmp.ne.s32.totalorder %s433, %s434
      %p446 = scmp.eq.s32.totalorder %s52, 1
      %p447 = por %p445, %p446
      %p449 = scmp.ne.s32.totalorder %s434, %s448
      %p450 = scmp.eq.s32.totalorder %s52, 0
      %p451 = por %p449, %p450
      %s453 = sadd.s32 %s452, 1
      %p456 = scmp.eq.s32.totalorder %s46, 1
      %p457 = scmp.ne.s32.totalorder %s452, %s454
      %p458 = scmp.eq.s32.totalorder %s46, 0
      %p459 = por %p457, %p458
      %p460 = scmp.ne.s32.totalorder %s452, %s454
      %p461 = scmp.eq.s32.totalorder %s51, 1
      %p462 = por %p460, %p461
      %p463 = scmp.ne.s32.totalorder %s454, %s455
      %p464 = scmp.eq.s32.totalorder %s51, 0
      %p465 = por %p463, %p464
      %p466 = scmp.ne.s32.totalorder %s454, %s455
      %p467 = scmp.eq.s32.totalorder %s52, 1
      %p468 = por %p466, %p467
      %p470 = scmp.ne.s32.totalorder %s455, %s469
      %p471 = scmp.eq.s32.totalorder %s52, 0
      %p472 = por %p470, %p471
      %s474 = sadd.s32 %s473, 1
      %p477 = scmp.eq.s32.totalorder %s46, 1
      %p478 = scmp.ne.s32.totalorder %s473, %s475
      %p479 = scmp.eq.s32.totalorder %s46, 0
      %p480 = por %p478, %p479
      %p481 = scmp.ne.s32.totalorder %s473, %s475
      %p482 = scmp.eq.s32.totalorder %s51, 1
      %p483 = por %p481, %p482
      %p484 = scmp.ne.s32.totalorder %s475, %s476
      %p485 = scmp.eq.s32.totalorder %s51, 0
      %p486 = por %p484, %p485
      %p487 = scmp.ne.s32.totalorder %s475, %s476
      %p488 = scmp.eq.s32.totalorder %s52, 1
      %p489 = por %p487, %p488
      %p491 = scmp.ne.s32.totalorder %s476, %s490
      %p492 = scmp.eq.s32.totalorder %s52, 0
      %p493 = por %p491, %p492
      %s495 = sadd.s32 %s494, 1
      %p498 = scmp.eq.s32.totalorder %s46, 1
      %p499 = scmp.ne.s32.totalorder %s494, %s496
      %p500 = scmp.eq.s32.totalorder %s46, 0
      %p501 = por %p499, %p500
      %p502 = scmp.ne.s32.totalorder %s494, %s496
      %p503 = scmp.eq.s32.totalorder %s51, 1
      %p504 = por %p502, %p503
      %p505 = scmp.ne.s32.totalorder %s496, %s497
      %p506 = scmp.eq.s32.totalorder %s51, 0
      %p507 = por %p505, %p506
      %p508 = scmp.ne.s32.totalorder %s496, %s497
      %p509 = scmp.eq.s32.totalorder %s52, 1
      %p510 = por %p508, %p509
      %p512 = scmp.ne.s32.totalorder %s497, %s511
      %p513 = scmp.eq.s32.totalorder %s52, 0
      %p514 = por %p512, %p513
      %s515 = ssub.s32 %s46, %s53
      %p516 = scmp.eq.s32.totalorder %s515, 0
      %s518 = sadd.s32 %s517, 1
      %s519 = scalar_select %p516, %s517, %s518
      %p522 = pneg %p516
      %p523 = scmp.eq.s32.totalorder %s46, 1
      %p524 = por %p522, %p523
      %p525 = scmp.ne.s32.totalorder %s517, %s520
      %p526 = scmp.eq.s32.totalorder %s46, 0
      %p527 = por %p525, %p526
      %p528 = scmp.ne.s32.totalorder %s517, %s520
      %p529 = scmp.eq.s32.totalorder %s51, 1
      %p530 = por %p528, %p529
      %p531 = scmp.ne.s32.totalorder %s520, %s521
      %p532 = scmp.eq.s32.totalorder %s51, 0
      %p533 = por %p531, %p532
      %p534 = scmp.ne.s32.totalorder %s520, %s521
      %p535 = scmp.eq.s32.totalorder %s52, 1
      %p536 = por %p534, %p535
      %p538 = scmp.ne.s32.totalorder %s521, %s537
      %p539 = scmp.eq.s32.totalorder %s52, 0
      %p540 = por %p538, %p539
      %p541 = scmp.le.s32.totalorder 1, %s46
      %p542 = scmp.lt.s32.totalorder %s46, 3
      %p543 = pnand %p541, %p542
      %p544 = pneg %p543
      // Predicated region
      $region9: #{tpu_custom_call.1} parent=5 // pred_check
        _
      $region10: #{tpu_custom_call.1} parent=5 // pred_check_branch
        %546 = sbr.rel (%p543) target = $region12
      $region11: #{tpu_custom_call.1} parent=5 // pred_region
        %s547 = ssub.s32 %s46, 1
        // Predicated region
        $region13: #{tpu_custom_call.1} parent=11 // pred_check
          %p548 = pneg %p67
        $region14: #{tpu_custom_call.1} parent=11 // pred_check_branch
          %550 = sbr.rel (%p548) target = $region16
        $region15: #{tpu_custom_call.1} parent=11 // pred_region
          _
        $region16: #{tpu_custom_call.1} parent=11 // pred_fallthru
          _
        // Predicated region
        $region17: #{tpu_custom_call.1} parent=11 // pred_check
          %p551 = pneg %p192
        $region18: #{tpu_custom_call.1} parent=11 // pred_check_branch
          %553 = sbr.rel (%p551) target = $region20
        $region19: #{tpu_custom_call.1} parent=11 // pred_region
          %s555 = ssub.s32 1024, 1024
          %556 = vsyncadd [#allocation10], %s555
          %s557 = sshll.u32 [#allocation11], 4
          %s558 = int_to_ptr.vmem [resolvable:$true] %s557
          %563 = dma.hbm_to_vmem [thread:$0]  %s5, 1024, %s558, [#allocation10], 64, 64, 4
        $region20: #{tpu_custom_call.1} parent=11 // pred_fallthru
          _
        // Predicated region
        $region21: #{tpu_custom_call.1} parent=11 // pred_check
          %p564 = pneg %p213
        $region22: #{tpu_custom_call.1} parent=11 // pred_check_branch
          %566 = sbr.rel (%p564) target = $region24
        $region23: #{tpu_custom_call.1} parent=11 // pred_region
          %s568 = ssub.s32 1024, 1024
          %569 = vsyncadd [#allocation13], %s568
          %s570 = sshll.u32 [#allocation12], 4
          %s571 = int_to_ptr.vmem [resolvable:$true] %s570
          %576 = dma.hbm_to_vmem [thread:$0]  %s6, 1024, %s571, [#allocation13], 64, 64, 4
        $region24: #{tpu_custom_call.1} parent=11 // pred_fallthru
          _
        // Predicated region
        $region25: #{tpu_custom_call.1} parent=11 // pred_check
          %p577 = pneg %p234
        $region26: #{tpu_custom_call.1} parent=11 // pred_check_branch
          %579 = sbr.rel (%p577) target = $region28
        $region27: #{tpu_custom_call.1} parent=11 // pred_region
          %s581 = ssub.s32 16, 16
          %582 = vsyncadd [#allocation13], %s581
          %s584 = sshll.u32 [#allocation14], 4
          %s585 = int_to_ptr.vmem [resolvable:$true] %s584
          %587 = dma.hbm_to_vmem [thread:$0]  %s7, 16, %s585, [#allocation13]
        $region28: #{tpu_custom_call.1} parent=11 // pred_fallthru
          _
        // Predicated region
        $region29: #{tpu_custom_call.1} parent=11 // pred_check
          %p588 = pneg %p255
        $region30: #{tpu_custom_call.1} parent=11 // pred_check_branch
          %590 = sbr.rel (%p588) target = $region32
        $region31: #{tpu_custom_call.1} parent=11 // pred_region
          %s592 = ssub.s32 1024, 1024
          %593 = vsyncadd [#allocation16], %s592
          %s594 = sshll.u32 [#allocation15], 4
          %s595 = int_to_ptr.vmem [resolvable:$true] %s594
          %600 = dma.hbm_to_vmem [thread:$0]  %s8, 1024, %s595, [#allocation16], 64, 64, 4
        $region32: #{tpu_custom_call.1} parent=11 // pred_fallthru
          _
        // Predicated region
        $region33: #{tpu_custom_call.1} parent=11 // pred_check
          %p601 = pneg %p276
        $region34: #{tpu_custom_call.1} parent=11 // pred_check_branch
          %603 = sbr.rel (%p601) target = $region36
        $region35: #{tpu_custom_call.1} parent=11 // pred_region
          %s605 = ssub.s32 1024, 1024
          %606 = vsyncadd [#allocation16], %s605
          %s607 = sshll.u32 [#allocation17], 4
          %s608 = int_to_ptr.vmem [resolvable:$true] %s607
          %613 = dma.hbm_to_vmem [thread:$0]  %s9, 1024, %s608, [#allocation16], 64, 64, 4
        $region36: #{tpu_custom_call.1} parent=11 // pred_fallthru
          _
        // Predicated region
        $region37: #{tpu_custom_call.1} parent=11 // pred_check
          %p614 = pneg %p297
        $region38: #{tpu_custom_call.1} parent=11 // pred_check_branch
          %616 = sbr.rel (%p614) target = $region40
        $region39: #{tpu_custom_call.1} parent=11 // pred_region
          %s618 = ssub.s32 16, 16
          %619 = vsyncadd [#allocation19], %s618
          %s621 = sshll.u32 [#allocation18], 4
          %s622 = int_to_ptr.vmem [resolvable:$true] %s621
          %624 = dma.hbm_to_vmem [thread:$0]  %s10, 16, %s622, [#allocation19]
        $region40: #{tpu_custom_call.1} parent=11 // pred_fallthru
          _
        // Predicated region
        $region41: #{tpu_custom_call.1} parent=11 // pred_check
          %p625 = pneg %p318
        $region42: #{tpu_custom_call.1} parent=11 // pred_check_branch
          %627 = sbr.rel (%p625) target = $region44
        $region43: #{tpu_custom_call.1} parent=11 // pred_region
          %s629 = ssub.s32 1024, 1024
          %630 = vsyncadd [#allocation19], %s629
          %s631 = sshll.u32 [#allocation20], 4
          %s632 = int_to_ptr.vmem [resolvable:$true] %s631
          %637 = dma.hbm_to_vmem [thread:$0]  %s11, 1024, %s632, [#allocation19], 64, 64, 4
        $region44: #{tpu_custom_call.1} parent=11 // pred_fallthru
          _
        // Predicated region
        $region45: #{tpu_custom_call.1} parent=11 // pred_check
          %p638 = pneg %p339
        $region46: #{tpu_custom_call.1} parent=11 // pred_check_branch
          %640 = sbr.rel (%p638) target = $region48
        $region47: #{tpu_custom_call.1} parent=11 // pred_region
          %s642 = ssub.s32 1024, 1024
          %643 = vsyncadd [#allocation22], %s642
          %s644 = sshll.u32 [#allocation21], 4
          %s645 = int_to_ptr.vmem [resolvable:$true] %s644
          %650 = dma.hbm_to_vmem [thread:$0]  %s12, 1024, %s645, [#allocation22], 64, 64, 4
        $region48: #{tpu_custom_call.1} parent=11 // pred_fallthru
          _
        // Predicated region
        $region49: #{tpu_custom_call.1} parent=11 // pred_check
          %p651 = pneg %p360
        $region50: #{tpu_custom_call.1} parent=11 // pred_check_branch
          %653 = sbr.rel (%p651) target = $region52
        $region51: #{tpu_custom_call.1} parent=11 // pred_region
          %s655 = ssub.s32 16, 16
          %656 = vsyncadd [#allocation22], %s655
          %s658 = sshll.u32 [#allocation23], 4
          %s659 = int_to_ptr.vmem [resolvable:$true] %s658
          %661 = dma.hbm_to_vmem [thread:$0]  %s13, 16, %s659, [#allocation22]
        $region52: #{tpu_custom_call.1} parent=11 // pred_fallthru
          _
        // Predicated region
        $region53: #{tpu_custom_call.1} parent=11 // pred_check
          %p662 = pneg %p381
        $region54: #{tpu_custom_call.1} parent=11 // pred_check_branch
          %664 = sbr.rel (%p662) target = $region56
        $region55: #{tpu_custom_call.1} parent=11 // pred_region
          %s666 = ssub.s32 1024, 1024
          %667 = vsyncadd [#allocation25], %s666
          %s668 = sshll.u32 [#allocation24], 4
          %s669 = int_to_ptr.vmem [resolvable:$true] %s668
          %674 = dma.hbm_to_vmem [thread:$0]  %s14, 1024, %s669, [#allocation25], 64, 64, 4
        $region56: #{tpu_custom_call.1} parent=11 // pred_fallthru
          _
        // Predicated region
        $region57: #{tpu_custom_call.1} parent=11 // pred_check
          %p675 = pneg %p402
        $region58: #{tpu_custom_call.1} parent=11 // pred_check_branch
          %677 = sbr.rel (%p675) target = $region60
        $region59: #{tpu_custom_call.1} parent=11 // pred_region
          %s679 = ssub.s32 1024, 1024
          %680 = vsyncadd [#allocation25], %s679
          %s681 = sshll.u32 [#allocation26], 4
          %s682 = int_to_ptr.vmem [resolvable:$true] %s681
          %687 = dma.hbm_to_vmem [thread:$0]  %s15, 1024, %s682, [#allocation25], 64, 64, 4
        $region60: #{tpu_custom_call.1} parent=11 // pred_fallthru
          _
        // Predicated region
        $region61: #{tpu_custom_call.1} parent=11 // pred_check
          %p688 = pneg %p423
        $region62: #{tpu_custom_call.1} parent=11 // pred_check_branch
          %690 = sbr.rel (%p688) target = $region64
        $region63: #{tpu_custom_call.1} parent=11 // pred_region
          %s692 = ssub.s32 16, 16
          %693 = vsyncadd [#allocation28], %s692
          %s695 = sshll.u32 [#allocation27], 4
          %s696 = int_to_ptr.vmem [resolvable:$true] %s695
          %698 = dma.hbm_to_vmem [thread:$0]  %s16, 16, %s696, [#allocation28]
        $region64: #{tpu_custom_call.1} parent=11 // pred_fallthru
          _
        // Predicated region
        $region65: #{tpu_custom_call.1} parent=11 // pred_check
          %p699 = pneg %p444
        $region66: #{tpu_custom_call.1} parent=11 // pred_check_branch
          %701 = sbr.rel (%p699) target = $region68
        $region67: #{tpu_custom_call.1} parent=11 // pred_region
          _
        $region68: #{tpu_custom_call.1} parent=11 // pred_fallthru
          _
        // Predicated region
        $region69: #{tpu_custom_call.1} parent=11 // pred_check
          %p702 = pneg %p465
        $region70: #{tpu_custom_call.1} parent=11 // pred_check_branch
          %704 = sbr.rel (%p702) target = $region72
        $region71: #{tpu_custom_call.1} parent=11 // pred_region
          _
        $region72: #{tpu_custom_call.1} parent=11 // pred_fallthru
          _
        // Predicated region
        $region73: #{tpu_custom_call.1} parent=11 // pred_check
          %p705 = pneg %p486
        $region74: #{tpu_custom_call.1} parent=11 // pred_check_branch
          %707 = sbr.rel (%p705) target = $region76
        $region75: #{tpu_custom_call.1} parent=11 // pred_region
          %s709 = ssub.s32 1024, 1024
          %710 = vsyncadd [#allocation28], %s709
          %s711 = sshll.u32 [#allocation29], 4
          %s712 = int_to_ptr.vmem [resolvable:$true] %s711
          %717 = dma.hbm_to_vmem [thread:$0]  %s19, 1024, %s712, [#allocation28], 64, 64, 4
        $region76: #{tpu_custom_call.1} parent=11 // pred_fallthru
          _
        // Predicated region
        $region77: #{tpu_custom_call.1} parent=11 // pred_check
          %p718 = pneg %p507
        $region78: #{tpu_custom_call.1} parent=11 // pred_check_branch
          %720 = sbr.rel (%p718) target = $region80
        $region79: #{tpu_custom_call.1} parent=11 // pred_region
          _
        $region80: #{tpu_custom_call.1} parent=11 // pred_fallthru
          _
      $region12: #{tpu_custom_call.1} parent=5 // pred_fallthru
        _
      %p721 = scmp.lt.s32.totalorder %s46, 2
      // Predicated region
      $region81: #{tpu_custom_call.1} parent=5 // pred_check
        %p722 = pneg %p721
      $region82: #{tpu_custom_call.1} parent=5 // pred_check_branch
        %724 = sbr.rel (%p722) target = $region84
      $region83: #{tpu_custom_call.1} parent=5 // pred_region
        // Predicated region
        $region85: #{tpu_custom_call.1} parent=83 // pred_check
          %p725 = pneg %p87
        $region86: #{tpu_custom_call.1} parent=83 // pred_check_branch
          %727 = sbr.rel (%p725) target = $region88
        $region87: #{tpu_custom_call.1} parent=83 // pred_region
          %s728 = sand.u32 %s77, 1
          %s729 = scalar_lea.sflag [#allocation4], %s728
          %s730 = sand.u32 %s77, 1
          %s731 = smul.addr %s730, 64
          %s732 = scalar_lea.vmem [#allocation3], %s731
          %s734 = ssub.s32 1024, 1024
          %735 = vsyncadd %s729, %s734
          %s736 = smul.addr %s46, 16
          %s737 = smul.addr %s736, 64
          %s738 = scalar_lea.hbm %s1, %s737
          %s739 = sshll.u32 %s732, 4
          %s740 = int_to_ptr.vmem [resolvable:$true] %s739
          %745 = dma.hbm_to_vmem [thread:$0]  %s738, 1024, %s740, %s729, 64, 64, 4
        $region88: #{tpu_custom_call.1} parent=83 // pred_fallthru
          _
        // Predicated region
        $region89: #{tpu_custom_call.1} parent=83 // pred_check
          %p746 = pneg %p113
        $region90: #{tpu_custom_call.1} parent=83 // pred_check_branch
          %748 = sbr.rel (%p746) target = $region92
        $region91: #{tpu_custom_call.1} parent=83 // pred_region
          %s749 = sand.u32 %s46, 1
          %s750 = scalar_lea.sflag [#allocation7], %s749
          %s751 = sand.u32 %s103, 1
          %s752 = smul.addr %s751, 64
          %s753 = scalar_lea.vmem [#allocation6], %s752
          %s755 = ssub.s32 1024, 1024
          %756 = vsyncadd %s750, %s755
          %s757 = smul.addr %s46, 16
          %s758 = smul.addr %s757, 64
          %s759 = scalar_lea.hbm %s2, %s758
          %s760 = sshll.u32 %s753, 4
          %s761 = int_to_ptr.vmem [resolvable:$true] %s760
          %766 = dma.hbm_to_vmem [thread:$0]  %s759, 1024, %s761, %s750, 64, 64, 4
        $region92: #{tpu_custom_call.1} parent=83 // pred_fallthru
          _
        // Predicated region
        $region93: #{tpu_custom_call.1} parent=83 // pred_check
          %p767 = pneg %p139
        $region94: #{tpu_custom_call.1} parent=83 // pred_check_branch
          %769 = sbr.rel (%p767) target = $region96
        $region95: #{tpu_custom_call.1} parent=83 // pred_region
          %s770 = sand.u32 %s46, 1
          %s771 = scalar_lea.sflag [#allocation7], %s770
          %s772 = sand.u32 %s129, 1
          %s773 = smul.addr %s772, 64
          %s774 = scalar_lea.vmem [#allocation8], %s773
          %s776 = ssub.s32 1024, 1024
          %777 = vsyncadd %s771, %s776
          %s778 = smul.addr %s46, 16
          %s779 = smul.addr %s778, 64
          %s780 = scalar_lea.hbm %s3, %s779
          %s781 = sshll.u32 %s774, 4
          %s782 = int_to_ptr.vmem [resolvable:$true] %s781
          %787 = dma.hbm_to_vmem [thread:$0]  %s780, 1024, %s782, %s771, 64, 64, 4
        $region96: #{tpu_custom_call.1} parent=83 // pred_fallthru
          _
        // Predicated region
        $region97: #{tpu_custom_call.1} parent=83 // pred_check
          %p788 = pneg %p165
        $region98: #{tpu_custom_call.1} parent=83 // pred_check_branch
          %790 = sbr.rel (%p788) target = $region100
        $region99: #{tpu_custom_call.1} parent=83 // pred_region
          %s791 = sand.u32 %s46, 1
          %s792 = scalar_lea.sflag [#allocation10], %s791
          %s793 = sand.u32 %s155, 1
          %s794 = smul.addr %s793, 64
          %s795 = scalar_lea.vmem [#allocation9], %s794
          %s797 = ssub.s32 1024, 1024
          %798 = vsyncadd %s792, %s797
          %s799 = smul.addr %s46, 16
          %s800 = smul.addr %s799, 64
          %s801 = scalar_lea.hbm %s4, %s800
          %s802 = sshll.u32 %s795, 4
          %s803 = int_to_ptr.vmem [resolvable:$true] %s802
          %808 = dma.hbm_to_vmem [thread:$0]  %s801, 1024, %s803, %s792, 64, 64, 4
        $region100: #{tpu_custom_call.1} parent=83 // pred_fallthru
          _
      $region84: #{tpu_custom_call.1} parent=5 // pred_fallthru
        _
      %p809 = scmp.le.s32.totalorder 1, %s46
      %p810 = scmp.lt.s32.totalorder %s46, 3
      %p811 = pnand %p809, %p810
      %p812 = pneg %p811
      // Predicated region
      $region101: #{tpu_custom_call.1} parent=5 // pred_check
        _
      $region102: #{tpu_custom_call.1} parent=5 // pred_check_branch
        %814 = sbr.rel (%p811) target = $region104
      $region103: #{tpu_custom_call.1} parent=5 // pred_region
        %s815 = ssub.s32 %s46, 1
        %s816 = sand.u32 %s80, 1
        %s817 = scalar_lea.sflag [#allocation4], %s816
        %s818 = sand.u32 %s80, 1
        %s819 = smul.addr %s818, 64
        %s820 = scalar_lea.vmem [#allocation3], %s819
        // Predicated region
        $region105: #{tpu_custom_call.1} parent=103 // pred_check
          %p821 = pneg %p93
        $region106: #{tpu_custom_call.1} parent=103 // pred_check_branch
          %823 = sbr.rel (%p821) target = $region108
        $region107: #{tpu_custom_call.1} parent=103 // pred_region
          %824 = dma.done %s817, 1024
        $region108: #{tpu_custom_call.1} parent=103 // pred_fallthru
          _
        %s825 = sand.u32 %s51, 1
        %s826 = scalar_lea.sflag [#allocation7], %s825
        %s827 = sand.u32 %s106, 1
        %s828 = smul.addr %s827, 64
        %s829 = scalar_lea.vmem [#allocation6], %s828
        // Predicated region
        $region109: #{tpu_custom_call.1} parent=103 // pred_check
          %p830 = pneg %p119
        $region110: #{tpu_custom_call.1} parent=103 // pred_check_branch
          %832 = sbr.rel (%p830) target = $region112
        $region111: #{tpu_custom_call.1} parent=103 // pred_region
          %833 = dma.done %s826, 1024
        $region112: #{tpu_custom_call.1} parent=103 // pred_fallthru
          _
        %s834 = sand.u32 %s51, 1
        %s835 = scalar_lea.sflag [#allocation7], %s834
        %s836 = sand.u32 %s132, 1
        %s837 = smul.addr %s836, 64
        %s838 = scalar_lea.vmem [#allocation8], %s837
        // Predicated region
        $region113: #{tpu_custom_call.1} parent=103 // pred_check
          %p839 = pneg %p145
        $region114: #{tpu_custom_call.1} parent=103 // pred_check_branch
          %841 = sbr.rel (%p839) target = $region116
        $region115: #{tpu_custom_call.1} parent=103 // pred_region
          %842 = dma.done %s835, 1024
        $region116: #{tpu_custom_call.1} parent=103 // pred_fallthru
          _
        %s843 = sand.u32 %s51, 1
        %s844 = scalar_lea.sflag [#allocation10], %s843
        %s845 = sand.u32 %s158, 1
        %s846 = smul.addr %s845, 64
        %s847 = scalar_lea.vmem [#allocation9], %s846
        // Predicated region
        $region117: #{tpu_custom_call.1} parent=103 // pred_check
          %p848 = pneg %p171
        $region118: #{tpu_custom_call.1} parent=103 // pred_check_branch
          %850 = sbr.rel (%p848) target = $region120
        $region119: #{tpu_custom_call.1} parent=103 // pred_region
          %851 = dma.done %s844, 1024
        $region120: #{tpu_custom_call.1} parent=103 // pred_fallthru
          _
        // Predicated region
        $region121: #{tpu_custom_call.1} parent=103 // pred_check
          %p852 = pneg %p192
        $region122: #{tpu_custom_call.1} parent=103 // pred_check_branch
          %854 = sbr.rel (%p852) target = $region124
        $region123: #{tpu_custom_call.1} parent=103 // pred_region
          %855 = dma.done [#allocation10], 1024
        $region124: #{tpu_custom_call.1} parent=103 // pred_fallthru
          _
        // Predicated region
        $region125: #{tpu_custom_call.1} parent=103 // pred_check
          %p856 = pneg %p213
        $region126: #{tpu_custom_call.1} parent=103 // pred_check_branch
          %858 = sbr.rel (%p856) target = $region128
        $region127: #{tpu_custom_call.1} parent=103 // pred_region
          %859 = dma.done [#allocation13], 1024
        $region128: #{tpu_custom_call.1} parent=103 // pred_fallthru
          _
        // Predicated region
        $region129: #{tpu_custom_call.1} parent=103 // pred_check
          %p860 = pneg %p234
        $region130: #{tpu_custom_call.1} parent=103 // pred_check_branch
          %862 = sbr.rel (%p860) target = $region132
        $region131: #{tpu_custom_call.1} parent=103 // pred_region
          %863 = dma.done [#allocation13], 16
        $region132: #{tpu_custom_call.1} parent=103 // pred_fallthru
          _
        // Predicated region
        $region133: #{tpu_custom_call.1} parent=103 // pred_check
          %p864 = pneg %p255
        $region134: #{tpu_custom_call.1} parent=103 // pred_check_branch
          %866 = sbr.rel (%p864) target = $region136
        $region135: #{tpu_custom_call.1} parent=103 // pred_region
          %867 = dma.done [#allocation16], 1024
        $region136: #{tpu_custom_call.1} parent=103 // pred_fallthru
          _
        // Predicated region
        $region137: #{tpu_custom_call.1} parent=103 // pred_check
          %p868 = pneg %p276
        $region138: #{tpu_custom_call.1} parent=103 // pred_check_branch
          %870 = sbr.rel (%p868) target = $region140
        $region139: #{tpu_custom_call.1} parent=103 // pred_region
          %871 = dma.done [#allocation16], 1024
        $region140: #{tpu_custom_call.1} parent=103 // pred_fallthru
          _
        // Predicated region
        $region141: #{tpu_custom_call.1} parent=103 // pred_check
          %p872 = pneg %p297
        $region142: #{tpu_custom_call.1} parent=103 // pred_check_branch
          %874 = sbr.rel (%p872) target = $region144
        $region143: #{tpu_custom_call.1} parent=103 // pred_region
          %875 = dma.done [#allocation19], 16
        $region144: #{tpu_custom_call.1} parent=103 // pred_fallthru
          _
        // Predicated region
        $region145: #{tpu_custom_call.1} parent=103 // pred_check
          %p876 = pneg %p318
        $region146: #{tpu_custom_call.1} parent=103 // pred_check_branch
          %878 = sbr.rel (%p876) target = $region148
        $region147: #{tpu_custom_call.1} parent=103 // pred_region
          %879 = dma.done [#allocation19], 1024
        $region148: #{tpu_custom_call.1} parent=103 // pred_fallthru
          _
        // Predicated region
        $region149: #{tpu_custom_call.1} parent=103 // pred_check
          %p880 = pneg %p339
        $region150: #{tpu_custom_call.1} parent=103 // pred_check_branch
          %882 = sbr.rel (%p880) target = $region152
        $region151: #{tpu_custom_call.1} parent=103 // pred_region
          %883 = dma.done [#allocation22], 1024
        $region152: #{tpu_custom_call.1} parent=103 // pred_fallthru
          _
        // Predicated region
        $region153: #{tpu_custom_call.1} parent=103 // pred_check
          %p884 = pneg %p360
        $region154: #{tpu_custom_call.1} parent=103 // pred_check_branch
          %886 = sbr.rel (%p884) target = $region156
        $region155: #{tpu_custom_call.1} parent=103 // pred_region
          %887 = dma.done [#allocation22], 16
        $region156: #{tpu_custom_call.1} parent=103 // pred_fallthru
          _
        // Predicated region
        $region157: #{tpu_custom_call.1} parent=103 // pred_check
          %p888 = pneg %p381
        $region158: #{tpu_custom_call.1} parent=103 // pred_check_branch
          %890 = sbr.rel (%p888) target = $region160
        $region159: #{tpu_custom_call.1} parent=103 // pred_region
          %891 = dma.done [#allocation25], 1024
        $region160: #{tpu_custom_call.1} parent=103 // pred_fallthru
          _
        // Predicated region
        $region161: #{tpu_custom_call.1} parent=103 // pred_check
          %p892 = pneg %p402
        $region162: #{tpu_custom_call.1} parent=103 // pred_check_branch
          %894 = sbr.rel (%p892) target = $region164
        $region163: #{tpu_custom_call.1} parent=103 // pred_region
          %895 = dma.done [#allocation25], 1024
        $region164: #{tpu_custom_call.1} parent=103 // pred_fallthru
          _
        // Predicated region
        $region165: #{tpu_custom_call.1} parent=103 // pred_check
          %p896 = pneg %p423
        $region166: #{tpu_custom_call.1} parent=103 // pred_check_branch
          %898 = sbr.rel (%p896) target = $region168
        $region167: #{tpu_custom_call.1} parent=103 // pred_region
          %899 = dma.done [#allocation28], 16
        $region168: #{tpu_custom_call.1} parent=103 // pred_fallthru
          _
        // Predicated region
        $region169: #{tpu_custom_call.1} parent=103 // pred_check
          %p900 = pneg %p486
        $region170: #{tpu_custom_call.1} parent=103 // pred_check_branch
          %902 = sbr.rel (%p900) target = $region172
        $region171: #{tpu_custom_call.1} parent=103 // pred_region
          %903 = dma.done [#allocation28], 1024
        $region172: #{tpu_custom_call.1} parent=103 // pred_fallthru
          _
        %p904 = pneg %p67
        %p905 = pneg %p64
        %s906 = sand.u32 %s80, 1
        %s907 = scalar_lea.sflag [#allocation4], %s906
        %s908 = sand.u32 %s80, 1
        %s909 = smul.addr %s908, 64
        %s910 = scalar_lea.vmem [#allocation3], %s909
        %p911 = pneg %p93
        %p912 = pneg %p90
        %s913 = sand.u32 %s51, 1
        %s914 = scalar_lea.sflag [#allocation7], %s913
        %s915 = sand.u32 %s106, 1
        %s916 = smul.addr %s915, 64
        %s917 = scalar_lea.vmem [#allocation6], %s916
        %p918 = pneg %p119
        %p919 = pneg %p116
        %s920 = sand.u32 %s51, 1
        %s921 = scalar_lea.sflag [#allocation7], %s920
        %s922 = sand.u32 %s132, 1
        %s923 = smul.addr %s922, 64
        %s924 = scalar_lea.vmem [#allocation8], %s923
        %p925 = pneg %p145
        %p926 = pneg %p142
        %s927 = sand.u32 %s51, 1
        %s928 = scalar_lea.sflag [#allocation10], %s927
        %s929 = sand.u32 %s158, 1
        %s930 = smul.addr %s929, 64
        %s931 = scalar_lea.vmem [#allocation9], %s930
        %p932 = pneg %p171
        %p933 = pneg %p168
        %p934 = pneg %p192
        %p935 = pneg %p189
        %p936 = pneg %p213
        %p937 = pneg %p210
        %p938 = pneg %p234
        %p939 = pneg %p231
        %p940 = pneg %p255
        %p941 = pneg %p252
        %p942 = pneg %p276
        %p943 = pneg %p273
        %p944 = pneg %p297
        %p945 = pneg %p294
        %p946 = pneg %p318
        %p947 = pneg %p315
        %p948 = pneg %p339
        %p949 = pneg %p336
        %p950 = pneg %p360
        %p951 = pneg %p357
        %p952 = pneg %p381
        %p953 = pneg %p378
        %p954 = pneg %p402
        %p955 = pneg %p399
        %p956 = pneg %p423
        %p957 = pneg %p420
        %p958 = pneg %p444
        %p959 = pneg %p441
        %p960 = pneg %p465
        %p961 = pneg %p462
        %p962 = pneg %p486
        %p963 = pneg %p483
        %p964 = pneg %p507
        %p965 = pneg %p504
        %p966 = pneg %p533
        %p967 = pneg %p530
        %s968 = sand.u32 %s520, 1
        %s969 = scalar_lea.sflag [#allocation5], %s968
        %s970 = sand.u32 %s520, 1
        %s971 = smul.addr %s970, 128
        %s972 = scalar_lea.vmem [#allocation30], %s971
        %v974 = vld [vmem:[%s820] sm:$0xf]
        %v975 = vld [vmem:[%s820 + $0x4] sm:$0xf]
        %v976 = vld [vmem:[%s820 + $0x8] sm:$0xf]
        %v977 = vld [vmem:[%s820 + $0xc] sm:$0xf]
        %v978 = vld [vmem:[%s820 + $0x10] sm:$0xf]
        %v979 = vld [vmem:[%s820 + $0x14] sm:$0xf]
        %v980 = vld [vmem:[%s820 + $0x18] sm:$0xf]
        %v981 = vld [vmem:[%s820 + $0x1c] sm:$0xf]
        %v982 = vld [vmem:[%s820 + $0x20] sm:$0xf]
        %v983 = vld [vmem:[%s820 + $0x24] sm:$0xf]
        %v984 = vld [vmem:[%s820 + $0x28] sm:$0xf]
        %v985 = vld [vmem:[%s820 + $0x2c] sm:$0xf]
        %v986 = vld [vmem:[%s820 + $0x30] sm:$0xf]
        %v987 = vld [vmem:[%s820 + $0x34] sm:$0xf]
        %v988 = vld [vmem:[%s820 + $0x38] sm:$0xf]
        %v989 = vld [vmem:[%s820 + $0x3c] sm:$0xf]
        %v990 = vld [vmem:[%s829] sm:$0xf]
        %v991 = vld [vmem:[%s829 + $0x4] sm:$0xf]
        %v992 = vld [vmem:[%s829 + $0x8] sm:$0xf]
        %v993 = vld [vmem:[%s829 + $0xc] sm:$0xf]
        %v994 = vld [vmem:[%s829 + $0x10] sm:$0xf]
        %v995 = vld [vmem:[%s829 + $0x14] sm:$0xf]
        %v996 = vld [vmem:[%s829 + $0x18] sm:$0xf]
        %v997 = vld [vmem:[%s829 + $0x1c] sm:$0xf]
        %v998 = vld [vmem:[%s829 + $0x20] sm:$0xf]
        %v999 = vld [vmem:[%s829 + $0x24] sm:$0xf]
        %v1000 = vld [vmem:[%s829 + $0x28] sm:$0xf]
        %v1001 = vld [vmem:[%s829 + $0x2c] sm:$0xf]
        %v1002 = vld [vmem:[%s829 + $0x30] sm:$0xf]
        %v1003 = vld [vmem:[%s829 + $0x34] sm:$0xf]
        %v1004 = vld [vmem:[%s829 + $0x38] sm:$0xf]
        %v1005 = vld [vmem:[%s829 + $0x3c] sm:$0xf]
        %v1006 = vld [vmem:[%s838] sm:$0xf]
        %v1007 = vld [vmem:[%s838 + $0x4] sm:$0xf]
        %v1008 = vld [vmem:[%s838 + $0x8] sm:$0xf]
        %v1009 = vld [vmem:[%s838 + $0xc] sm:$0xf]
        %v1010 = vld [vmem:[%s838 + $0x10] sm:$0xf]
        %v1011 = vld [vmem:[%s838 + $0x14] sm:$0xf]
        %v1012 = vld [vmem:[%s838 + $0x18] sm:$0xf]
        %v1013 = vld [vmem:[%s838 + $0x1c] sm:$0xf]
        %v1014 = vld [vmem:[%s838 + $0x20] sm:$0xf]
        %v1015 = vld [vmem:[%s838 + $0x24] sm:$0xf]
        %v1016 = vld [vmem:[%s838 + $0x28] sm:$0xf]
        %v1017 = vld [vmem:[%s838 + $0x2c] sm:$0xf]
        %v1018 = vld [vmem:[%s838 + $0x30] sm:$0xf]
        %v1019 = vld [vmem:[%s838 + $0x34] sm:$0xf]
        %v1020 = vld [vmem:[%s838 + $0x38] sm:$0xf]
        %v1021 = vld [vmem:[%s838 + $0x3c] sm:$0xf]
        %v1022 = vld [vmem:[%s847] sm:$0xf]
        %v1023 = vld [vmem:[%s847 + $0x4] sm:$0xf]
        %v1024 = vld [vmem:[%s847 + $0x8] sm:$0xf]
        %v1025 = vld [vmem:[%s847 + $0xc] sm:$0xf]
        %v1026 = vld [vmem:[%s847 + $0x10] sm:$0xf]
        %v1027 = vld [vmem:[%s847 + $0x14] sm:$0xf]
        %v1028 = vld [vmem:[%s847 + $0x18] sm:$0xf]
        %v1029 = vld [vmem:[%s847 + $0x1c] sm:$0xf]
        %v1030 = vld [vmem:[%s847 + $0x20] sm:$0xf]
        %v1031 = vld [vmem:[%s847 + $0x24] sm:$0xf]
        %v1032 = vld [vmem:[%s847 + $0x28] sm:$0xf]
        %v1033 = vld [vmem:[%s847 + $0x2c] sm:$0xf]
        %v1034 = vld [vmem:[%s847 + $0x30] sm:$0xf]
        %v1035 = vld [vmem:[%s847 + $0x34] sm:$0xf]
        %v1036 = vld [vmem:[%s847 + $0x38] sm:$0xf]
        %v1037 = vld [vmem:[%s847 + $0x3c] sm:$0xf]
        %v1038 = vld [vmem:[#allocation11] sm:$0xf]
        %v1039 = vld [vmem:[#allocation11 + $0x4] sm:$0xf]
        %v1040 = vld [vmem:[#allocation11 + $0x8] sm:$0xf]
        %v1041 = vld [vmem:[#allocation11 + $0xc] sm:$0xf]
        %v1042 = vld [vmem:[#allocation11 + $0x10] sm:$0xf]
        %v1043 = vld [vmem:[#allocation11 + $0x14] sm:$0xf]
        %v1044 = vld [vmem:[#allocation11 + $0x18] sm:$0xf]
        %v1045 = vld [vmem:[#allocation11 + $0x1c] sm:$0xf]
        %v1046 = vld [vmem:[#allocation11 + $0x20] sm:$0xf]
        %v1047 = vld [vmem:[#allocation11 + $0x24] sm:$0xf]
        %v1048 = vld [vmem:[#allocation11 + $0x28] sm:$0xf]
        %v1049 = vld [vmem:[#allocation11 + $0x2c] sm:$0xf]
        %v1050 = vld [vmem:[#allocation11 + $0x30] sm:$0xf]
        %v1051 = vld [vmem:[#allocation11 + $0x34] sm:$0xf]
        %v1052 = vld [vmem:[#allocation11 + $0x38] sm:$0xf]
        %v1053 = vld [vmem:[#allocation11 + $0x3c] sm:$0xf]
        %v1054 = vld [vmem:[#allocation12] sm:$0xf]
        %v1055 = vld [vmem:[#allocation12 + $0x4] sm:$0xf]
        %v1056 = vld [vmem:[#allocation12 + $0x8] sm:$0xf]
        %v1057 = vld [vmem:[#allocation12 + $0xc] sm:$0xf]
        %v1058 = vld [vmem:[#allocation12 + $0x10] sm:$0xf]
        %v1059 = vld [vmem:[#allocation12 + $0x14] sm:$0xf]
        %v1060 = vld [vmem:[#allocation12 + $0x18] sm:$0xf]
        %v1061 = vld [vmem:[#allocation12 + $0x1c] sm:$0xf]
        %v1062 = vld [vmem:[#allocation12 + $0x20] sm:$0xf]
        %v1063 = vld [vmem:[#allocation12 + $0x24] sm:$0xf]
        %v1064 = vld [vmem:[#allocation12 + $0x28] sm:$0xf]
        %v1065 = vld [vmem:[#allocation12 + $0x2c] sm:$0xf]
        %v1066 = vld [vmem:[#allocation12 + $0x30] sm:$0xf]
        %v1067 = vld [vmem:[#allocation12 + $0x34] sm:$0xf]
        %v1068 = vld [vmem:[#allocation12 + $0x38] sm:$0xf]
        %v1069 = vld [vmem:[#allocation12 + $0x3c] sm:$0xf]
        %v1070 = vld [vmem:[#allocation14] sm:$0x1]
        %v1071 = vld [vmem:[#allocation15] sm:$0xf]
        %v1072 = vld [vmem:[#allocation15 + $0x4] sm:$0xf]
        %v1073 = vld [vmem:[#allocation15 + $0x8] sm:$0xf]
        %v1074 = vld [vmem:[#allocation15 + $0xc] sm:$0xf]
        %v1075 = vld [vmem:[#allocation15 + $0x10] sm:$0xf]
        %v1076 = vld [vmem:[#allocation15 + $0x14] sm:$0xf]
        %v1077 = vld [vmem:[#allocation15 + $0x18] sm:$0xf]
        %v1078 = vld [vmem:[#allocation15 + $0x1c] sm:$0xf]
        %v1079 = vld [vmem:[#allocation15 + $0x20] sm:$0xf]
        %v1080 = vld [vmem:[#allocation15 + $0x24] sm:$0xf]
        %v1081 = vld [vmem:[#allocation15 + $0x28] sm:$0xf]
        %v1082 = vld [vmem:[#allocation15 + $0x2c] sm:$0xf]
        %v1083 = vld [vmem:[#allocation15 + $0x30] sm:$0xf]
        %v1084 = vld [vmem:[#allocation15 + $0x34] sm:$0xf]
        %v1085 = vld [vmem:[#allocation15 + $0x38] sm:$0xf]
        %v1086 = vld [vmem:[#allocation15 + $0x3c] sm:$0xf]
        %v1087 = vld [vmem:[#allocation17] sm:$0xf]
        %v1088 = vld [vmem:[#allocation17 + $0x4] sm:$0xf]
        %v1089 = vld [vmem:[#allocation17 + $0x8] sm:$0xf]
        %v1090 = vld [vmem:[#allocation17 + $0xc] sm:$0xf]
        %v1091 = vld [vmem:[#allocation17 + $0x10] sm:$0xf]
        %v1092 = vld [vmem:[#allocation17 + $0x14] sm:$0xf]
        %v1093 = vld [vmem:[#allocation17 + $0x18] sm:$0xf]
        %v1094 = vld [vmem:[#allocation17 + $0x1c] sm:$0xf]
        %v1095 = vld [vmem:[#allocation17 + $0x20] sm:$0xf]
        %v1096 = vld [vmem:[#allocation17 + $0x24] sm:$0xf]
        %v1097 = vld [vmem:[#allocation17 + $0x28] sm:$0xf]
        %v1098 = vld [vmem:[#allocation17 + $0x2c] sm:$0xf]
        %v1099 = vld [vmem:[#allocation17 + $0x30] sm:$0xf]
        %v1100 = vld [vmem:[#allocation17 + $0x34] sm:$0xf]
        %v1101 = vld [vmem:[#allocation17 + $0x38] sm:$0xf]
        %v1102 = vld [vmem:[#allocation17 + $0x3c] sm:$0xf]
        %v1103 = vld [vmem:[#allocation18] sm:$0x1]
        %v1120 = vunpack.c.l.b16 %v974
        %v1121 = vunpack.c.l.b16 %v975
        %v1122 = vunpack.c.l.b16 %v976
        %v1123 = vunpack.c.l.b16 %v977
        %v1124 = vunpack.c.l.b16 %v978
        %v1125 = vunpack.c.l.b16 %v979
        %v1126 = vunpack.c.l.b16 %v980
        %v1127 = vunpack.c.l.b16 %v981
        %v1128 = vunpack.c.l.b16 %v982
        %v1129 = vunpack.c.l.b16 %v983
        %v1130 = vunpack.c.l.b16 %v984
        %v1131 = vunpack.c.l.b16 %v985
        %v1132 = vunpack.c.l.b16 %v986
        %v1133 = vunpack.c.l.b16 %v987
        %v1134 = vunpack.c.l.b16 %v988
        %v1135 = vunpack.c.l.b16 %v989
        %v1136 = vpack.c.b16 %v1121, %v1120
        %v1137 = vpack.c.b16 %v1123, %v1122
        %v1138 = vpack.c.b16 %v1125, %v1124
        %v1139 = vpack.c.b16 %v1127, %v1126
        %v1140 = vpack.c.b16 %v1129, %v1128
        %v1141 = vpack.c.b16 %v1131, %v1130
        %v1142 = vpack.c.b16 %v1133, %v1132
        %v1143 = vpack.c.b16 %v1135, %v1134
        %v1168 = vunpack.c.l.b16 %v1006
        %v1169 = vunpack.c.l.b16 %v1007
        %v1170 = vunpack.c.l.b16 %v1008
        %v1171 = vunpack.c.l.b16 %v1009
        %v1172 = vunpack.c.l.b16 %v1010
        %v1173 = vunpack.c.l.b16 %v1011
        %v1174 = vunpack.c.l.b16 %v1012
        %v1175 = vunpack.c.l.b16 %v1013
        %v1176 = vunpack.c.l.b16 %v1014
        %v1177 = vunpack.c.l.b16 %v1015
        %v1178 = vunpack.c.l.b16 %v1016
        %v1179 = vunpack.c.l.b16 %v1017
        %v1180 = vunpack.c.l.b16 %v1018
        %v1181 = vunpack.c.l.b16 %v1019
        %v1182 = vunpack.c.l.b16 %v1020
        %v1183 = vunpack.c.l.b16 %v1021
        %v1184 = vpack.c.b16 %v1169, %v1168
        %v1185 = vpack.c.b16 %v1171, %v1170
        %v1186 = vpack.c.b16 %v1173, %v1172
        %v1187 = vpack.c.b16 %v1175, %v1174
        %v1188 = vpack.c.b16 %v1177, %v1176
        %v1189 = vpack.c.b16 %v1179, %v1178
        %v1190 = vpack.c.b16 %v1181, %v1180
        %v1191 = vpack.c.b16 %v1183, %v1182
        %1200 = vmatprep.subr.bf16.mxu0 0
        %1201 = vmatpush1.bf16.msra.mxu0 %v1184
        %1202 = vmatprep.subr.bf16.mxu0 0
        %1203 = vmatpush1.bf16.msra.mxu0 %v1185
        %1204 = vmatprep.subr.bf16.mxu0 0
        %1205 = vmatpush1.bf16.msra.mxu0 %v1186
        %1206 = vmatprep.subr.bf16.mxu0 0
        %1207 = vmatpush1.bf16.msra.mxu0 %v1187
        %1208 = vmatprep.subr.bf16.mxu0 0
        %1209 = vmatpush1.bf16.msra.mxu0 %v1188
        %1210 = vmatprep.subr.bf16.mxu0 0
        %1211 = vmatpush1.bf16.msra.mxu0 %v1189
        %1212 = vmatprep.subr.bf16.mxu0 0
        %1213 = vmatpush1.bf16.msra.mxu0 %v1190
        %1214 = vmatprep.subr.bf16.mxu0 0
        %1215 = vmatpush1.bf16.msra.mxu0 %v1191
        %1216 = vmatprep.subr.bf16.mxu0 0
        %1217 = vmatpush1.bf16.msra.mxu0 0
        %1218 = vmatprep.subr.bf16.mxu0 0
        %1219 = vmatpush1.bf16.msra.mxu0 0
        %1220 = vmatprep.subr.bf16.mxu0 0
        %1221 = vmatpush1.bf16.msra.mxu0 0
        %1222 = vmatprep.subr.bf16.mxu0 0
        %1223 = vmatpush1.bf16.msra.mxu0 0
        %1224 = vmatprep.subr.bf16.mxu0 0
        %1225 = vmatpush1.bf16.msra.mxu0 0
        %1226 = vmatprep.subr.bf16.mxu0 0
        %1227 = vmatpush1.bf16.msra.mxu0 0
        %1228 = vmatprep.subr.bf16.mxu0 0
        %1229 = vmatpush1.bf16.msra.mxu0 0
        %1230 = vmatprep.subr.bf16.mxu0 0
        %1231 = vmatpush1.bf16.msra.mxu0 0
        %1232 = vmatprep.mubr.bf16.mxu0 0
        %1233 = vmatmul.mubr.bf16.gmra.mrb[0].mxu0 %v1136
        %v1234 = vpop.f32.mrb[0].mxu0
        %v1235 = vadd.f32 0.0, %v1234
        %v1236 = vpop.f32.mrb[0].mxu0
        %v1237 = vpop.f32.mrb[0].mxu0
        %v1238 = vadd.f32 0.0, %v1237
        %v1239 = vpop.f32.mrb[0].mxu0
        %1240 = vmatprep.mubr.bf16.mxu0 0
        %1241 = vmatmul.mubr.bf16.gmra.mrb[0].mxu0 %v1137
        %v1242 = vpop.f32.mrb[0].mxu0
        %v1243 = vadd.f32 0.0, %v1242
        %v1244 = vpop.f32.mrb[0].mxu0
        %v1245 = vpop.f32.mrb[0].mxu0
        %v1246 = vadd.f32 0.0, %v1245
        %v1247 = vpop.f32.mrb[0].mxu0
        %1248 = vmatprep.mubr.bf16.mxu0 0
        %1249 = vmatmul.mubr.bf16.gmra.mrb[0].mxu0 %v1138
        %v1250 = vpop.f32.mrb[0].mxu0
        %v1251 = vadd.f32 0.0, %v1250
        %v1252 = vpop.f32.mrb[0].mxu0
        %v1253 = vpop.f32.mrb[0].mxu0
        %v1254 = vadd.f32 0.0, %v1253
        %v1255 = vpop.f32.mrb[0].mxu0
        %1256 = vmatprep.mubr.bf16.mxu0 0
        %1257 = vmatmul.mubr.bf16.gmra.mrb[0].mxu0 %v1139
        %v1258 = vpop.f32.mrb[0].mxu0
        %v1259 = vadd.f32 0.0, %v1258
        %v1260 = vpop.f32.mrb[0].mxu0
        %v1261 = vpop.f32.mrb[0].mxu0
        %v1262 = vadd.f32 0.0, %v1261
        %v1263 = vpop.f32.mrb[0].mxu0
        %1264 = vmatprep.mubr.bf16.mxu0 0
        %1265 = vmatmul.mubr.bf16.gmra.mrb[0].mxu0 %v1140
        %v1266 = vpop.f32.mrb[0].mxu0
        %v1267 = vadd.f32 0.0, %v1266
        %v1268 = vpop.f32.mrb[0].mxu0
        %v1269 = vpop.f32.mrb[0].mxu0
        %v1270 = vadd.f32 0.0, %v1269
        %v1271 = vpop.f32.mrb[0].mxu0
        %1272 = vmatprep.mubr.bf16.mxu0 0
        %1273 = vmatmul.mubr.bf16.gmra.mrb[0].mxu0 %v1141
        %v1274 = vpop.f32.mrb[0].mxu0
        %v1275 = vadd.f32 0.0, %v1274
        %v1276 = vpop.f32.mrb[0].mxu0
        %v1277 = vpop.f32.mrb[0].mxu0
        %v1278 = vadd.f32 0.0, %v1277
        %v1279 = vpop.f32.mrb[0].mxu0
        %1280 = vmatprep.mubr.bf16.mxu0 0
        %1281 = vmatmul.mubr.bf16.gmra.mrb[0].mxu0 %v1142
        %v1282 = vpop.f32.mrb[0].mxu0
        %v1283 = vadd.f32 0.0, %v1282
        %v1284 = vpop.f32.mrb[0].mxu0
        %v1285 = vpop.f32.mrb[0].mxu0
        %v1286 = vadd.f32 0.0, %v1285
        %v1287 = vpop.f32.mrb[0].mxu0
        %1288 = vmatprep.mubr.bf16.mxu0 0
        %1289 = vmatmul.mubr.bf16.gmra.mrb[0].mxu0 %v1143
        %v1290 = vpop.f32.mrb[0].mxu0
        %v1291 = vadd.f32 0.0, %v1290
        %v1292 = vpop.f32.mrb[0].mxu0
        %v1293 = vpop.f32.mrb[0].mxu0
        %v1294 = vadd.f32 0.0, %v1293
        %v1295 = vpop.f32.mrb[0].mxu0
        %1296 = vdwg.mxu0
        %v1297 = vpack.c.bf16 %v1238, %v1235
        %v1298 = vpack.c.bf16 %v1246, %v1243
        %v1299 = vpack.c.bf16 %v1254, %v1251
        %v1300 = vpack.c.bf16 %v1262, %v1259
        %v1301 = vpack.c.bf16 %v1270, %v1267
        %v1302 = vpack.c.bf16 %v1278, %v1275
        %v1303 = vpack.c.bf16 %v1286, %v1283
        %v1304 = vpack.c.bf16 %v1294, %v1291
        %v1321 = vunpack.c.l.b16 %v1022
        %v1322 = vunpack.c.l.b16 %v1023
        %v1323 = vunpack.c.l.b16 %v1024
        %v1324 = vunpack.c.l.b16 %v1025
        %v1325 = vunpack.c.l.b16 %v1026
        %v1326 = vunpack.c.l.b16 %v1027
        %v1327 = vunpack.c.l.b16 %v1028
        %v1328 = vunpack.c.l.b16 %v1029
        %v1329 = vunpack.c.l.b16 %v1030
        %v1330 = vunpack.c.l.b16 %v1031
        %v1331 = vunpack.c.l.b16 %v1032
        %v1332 = vunpack.c.l.b16 %v1033
        %v1333 = vunpack.c.l.b16 %v1034
        %v1334 = vunpack.c.l.b16 %v1035
        %v1335 = vunpack.c.l.b16 %v1036
        %v1336 = vunpack.c.l.b16 %v1037
        %v1337 = vpack.c.b16 %v1322, %v1321
        %v1338 = vpack.c.b16 %v1324, %v1323
        %v1339 = vpack.c.b16 %v1326, %v1325
        %v1340 = vpack.c.b16 %v1328, %v1327
        %v1341 = vpack.c.b16 %v1330, %v1329
        %v1342 = vpack.c.b16 %v1332, %v1331
        %v1343 = vpack.c.b16 %v1334, %v1333
        %v1344 = vpack.c.b16 %v1336, %v1335
        %v1369 = vunpack.c.l.b16 %v1054
        %v1370 = vunpack.c.l.b16 %v1055
        %v1371 = vunpack.c.l.b16 %v1056
        %v1372 = vunpack.c.l.b16 %v1057
        %v1373 = vunpack.c.l.b16 %v1058
        %v1374 = vunpack.c.l.b16 %v1059
        %v1375 = vunpack.c.l.b16 %v1060
        %v1376 = vunpack.c.l.b16 %v1061
        %v1377 = vunpack.c.l.b16 %v1062
        %v1378 = vunpack.c.l.b16 %v1063
        %v1379 = vunpack.c.l.b16 %v1064
        %v1380 = vunpack.c.l.b16 %v1065
        %v1381 = vunpack.c.l.b16 %v1066
        %v1382 = vunpack.c.l.b16 %v1067
        %v1383 = vunpack.c.l.b16 %v1068
        %v1384 = vunpack.c.l.b16 %v1069
        %v1385 = vpack.c.b16 %v1370, %v1369
        %v1386 = vpack.c.b16 %v1372, %v1371
        %v1387 = vpack.c.b16 %v1374, %v1373
        %v1388 = vpack.c.b16 %v1376, %v1375
        %v1389 = vpack.c.b16 %v1378, %v1377
        %v1390 = vpack.c.b16 %v1380, %v1379
        %v1391 = vpack.c.b16 %v1382, %v1381
        %v1392 = vpack.c.b16 %v1384, %v1383
        %1401 = vmatprep.subr.bf16.mxu0 0
        %1402 = vmatpush1.bf16.msra.mxu0 %v1385
        %1403 = vmatprep.subr.bf16.mxu0 0
        %1404 = vmatpush1.bf16.msra.mxu0 %v1386
        %1405 = vmatprep.subr.bf16.mxu0 0
        %1406 = vmatpush1.bf16.msra.mxu0 %v1387
        %1407 = vmatprep.subr.bf16.mxu0 0
        %1408 = vmatpush1.bf16.msra.mxu0 %v1388
        %1409 = vmatprep.subr.bf16.mxu0 0
        %1410 = vmatpush1.bf16.msra.mxu0 %v1389
        %1411 = vmatprep.subr.bf16.mxu0 0
        %1412 = vmatpush1.bf16.msra.mxu0 %v1390
        %1413 = vmatprep.subr.bf16.mxu0 0
        %1414 = vmatpush1.bf16.msra.mxu0 %v1391
        %1415 = vmatprep.subr.bf16.mxu0 0
        %1416 = vmatpush1.bf16.msra.mxu0 %v1392
        %1417 = vmatprep.subr.bf16.mxu0 0
        %1418 = vmatpush1.bf16.msra.mxu0 0
        %1419 = vmatprep.subr.bf16.mxu0 0
        %1420 = vmatpush1.bf16.msra.mxu0 0
        %1421 = vmatprep.subr.bf16.mxu0 0
        %1422 = vmatpush1.bf16.msra.mxu0 0
        %1423 = vmatprep.subr.bf16.mxu0 0
        %1424 = vmatpush1.bf16.msra.mxu0 0
        %1425 = vmatprep.subr.bf16.mxu0 0
        %1426 = vmatpush1.bf16.msra.mxu0 0
        %1427 = vmatprep.subr.bf16.mxu0 0
        %1428 = vmatpush1.bf16.msra.mxu0 0
        %1429 = vmatprep.subr.bf16.mxu0 0
        %1430 = vmatpush1.bf16.msra.mxu0 0
        %1431 = vmatprep.subr.bf16.mxu0 0
        %1432 = vmatpush1.bf16.msra.mxu0 0
        %1433 = vmatprep.mubr.bf16.mxu0 0
        %1434 = vmatmul.mubr.bf16.gmra.mrb[0].mxu0 %v1337
        %v1435 = vpop.f32.mrb[0].mxu0
        %v1436 = vadd.f32 0.0, %v1435
        %v1437 = vpop.f32.mrb[0].mxu0
        %v1438 = vpop.f32.mrb[0].mxu0
        %v1439 = vadd.f32 0.0, %v1438
        %v1440 = vpop.f32.mrb[0].mxu0
        %1441 = vmatprep.mubr.bf16.mxu0 0
        %1442 = vmatmul.mubr.bf16.gmra.mrb[0].mxu0 %v1338
        %v1443 = vpop.f32.mrb[0].mxu0
        %v1444 = vadd.f32 0.0, %v1443
        %v1445 = vpop.f32.mrb[0].mxu0
        %v1446 = vpop.f32.mrb[0].mxu0
        %v1447 = vadd.f32 0.0, %v1446
        %v1448 = vpop.f32.mrb[0].mxu0
        %1449 = vmatprep.mubr.bf16.mxu0 0
        %1450 = vmatmul.mubr.bf16.gmra.mrb[0].mxu0 %v1339
        %v1451 = vpop.f32.mrb[0].mxu0
        %v1452 = vadd.f32 0.0, %v1451
        %v1453 = vpop.f32.mrb[0].mxu0
        %v1454 = vpop.f32.mrb[0].mxu0
        %v1455 = vadd.f32 0.0, %v1454
        %v1456 = vpop.f32.mrb[0].mxu0
        %1457 = vmatprep.mubr.bf16.mxu0 0
        %1458 = vmatmul.mubr.bf16.gmra.mrb[0].mxu0 %v1340
        %v1459 = vpop.f32.mrb[0].mxu0
        %v1460 = vadd.f32 0.0, %v1459
        %v1461 = vpop.f32.mrb[0].mxu0
        %v1462 = vpop.f32.mrb[0].mxu0
        %v1463 = vadd.f32 0.0, %v1462
        %v1464 = vpop.f32.mrb[0].mxu0
        %1465 = vmatprep.mubr.bf16.mxu0 0
        %1466 = vmatmul.mubr.bf16.gmra.mrb[0].mxu0 %v1341
        %v1467 = vpop.f32.mrb[0].mxu0
        %v1468 = vadd.f32 0.0, %v1467
        %v1469 = vpop.f32.mrb[0].mxu0
        %v1470 = vpop.f32.mrb[0].mxu0
        %v1471 = vadd.f32 0.0, %v1470
        %v1472 = vpop.f32.mrb[0].mxu0
        %1473 = vmatprep.mubr.bf16.mxu0 0
        %1474 = vmatmul.mubr.bf16.gmra.mrb[0].mxu0 %v1342
        %v1475 = vpop.f32.mrb[0].mxu0
        %v1476 = vadd.f32 0.0, %v1475
        %v1477 = vpop.f32.mrb[0].mxu0
        %v1478 = vpop.f32.mrb[0].mxu0
        %v1479 = vadd.f32 0.0, %v1478
        %v1480 = vpop.f32.mrb[0].mxu0
        %1481 = vmatprep.mubr.bf16.mxu0 0
        %1482 = vmatmul.mubr.bf16.gmra.mrb[0].mxu0 %v1343
        %v1483 = vpop.f32.mrb[0].mxu0
        %v1484 = vadd.f32 0.0, %v1483
        %v1485 = vpop.f32.mrb[0].mxu0
        %v1486 = vpop.f32.mrb[0].mxu0
        %v1487 = vadd.f32 0.0, %v1486
        %v1488 = vpop.f32.mrb[0].mxu0
        %1489 = vmatprep.mubr.bf16.mxu0 0
        %1490 = vmatmul.mubr.bf16.gmra.mrb[0].mxu0 %v1344
        %v1491 = vpop.f32.mrb[0].mxu0
        %v1492 = vadd.f32 0.0, %v1491
        %v1493 = vpop.f32.mrb[0].mxu0
        %v1494 = vpop.f32.mrb[0].mxu0
        %v1495 = vadd.f32 0.0, %v1494
        %v1496 = vpop.f32.mrb[0].mxu0
        %1497 = vdwg.mxu0
        %v1514 = vunpack.c.l.b16 %v1038
        %v1515 = vunpack.c.l.b16 %v1039
        %v1516 = vunpack.c.l.b16 %v1040
        %v1517 = vunpack.c.l.b16 %v1041
        %v1518 = vunpack.c.l.b16 %v1042
        %v1519 = vunpack.c.l.b16 %v1043
        %v1520 = vunpack.c.l.b16 %v1044
        %v1521 = vunpack.c.l.b16 %v1045
        %v1522 = vunpack.c.l.b16 %v1046
        %v1523 = vunpack.c.l.b16 %v1047
        %v1524 = vunpack.c.l.b16 %v1048
        %v1525 = vunpack.c.l.b16 %v1049
        %v1526 = vunpack.c.l.b16 %v1050
        %v1527 = vunpack.c.l.b16 %v1051
        %v1528 = vunpack.c.l.b16 %v1052
        %v1529 = vunpack.c.l.b16 %v1053
        %v1530 = vpack.c.b16 %v1515, %v1514
        %v1531 = vpack.c.b16 %v1517, %v1516
        %v1532 = vpack.c.b16 %v1519, %v1518
        %v1533 = vpack.c.b16 %v1521, %v1520
        %v1534 = vpack.c.b16 %v1523, %v1522
        %v1535 = vpack.c.b16 %v1525, %v1524
        %v1536 = vpack.c.b16 %v1527, %v1526
        %v1537 = vpack.c.b16 %v1529, %v1528
        %1546 = vmatprep.subr.bf16.mxu0 0
        %1547 = vmatpush1.bf16.msra.mxu0 %v1530
        %1548 = vmatprep.subr.bf16.mxu0 0
        %1549 = vmatpush1.bf16.msra.mxu0 %v1531
        %1550 = vmatprep.subr.bf16.mxu0 0
        %1551 = vmatpush1.bf16.msra.mxu0 %v1532
        %1552 = vmatprep.subr.bf16.mxu0 0
        %1553 = vmatpush1.bf16.msra.mxu0 %v1533
        %1554 = vmatprep.subr.bf16.mxu0 0
        %1555 = vmatpush1.bf16.msra.mxu0 %v1534
        %1556 = vmatprep.subr.bf16.mxu0 0
        %1557 = vmatpush1.bf16.msra.mxu0 %v1535
        %1558 = vmatprep.subr.bf16.mxu0 0
        %1559 = vmatpush1.bf16.msra.mxu0 %v1536
        %1560 = vmatprep.subr.bf16.mxu0 0
        %1561 = vmatpush1.bf16.msra.mxu0 %v1537
        %1562 = vmatprep.subr.bf16.mxu0 0
        %1563 = vmatpush1.bf16.msra.mxu0 0
        %1564 = vmatprep.subr.bf16.mxu0 0
        %1565 = vmatpush1.bf16.msra.mxu0 0
        %1566 = vmatprep.subr.bf16.mxu0 0
        %1567 = vmatpush1.bf16.msra.mxu0 0
        %1568 = vmatprep.subr.bf16.mxu0 0
        %1569 = vmatpush1.bf16.msra.mxu0 0
        %1570 = vmatprep.subr.bf16.mxu0 0
        %1571 = vmatpush1.bf16.msra.mxu0 0
        %1572 = vmatprep.subr.bf16.mxu0 0
        %1573 = vmatpush1.bf16.msra.mxu0 0
        %1574 = vmatprep.subr.bf16.mxu0 0
        %1575 = vmatpush1.bf16.msra.mxu0 0
        %1576 = vmatprep.subr.bf16.mxu0 0
        %1577 = vmatpush1.bf16.msra.mxu0 0
        %1578 = vmatprep.mubr.bf16.mxu0 0
        %1579 = vmatmul.mubr.bf16.gmra.mrb[0].mxu0 %v1297
        %v1580 = vpop.f32.mrb[0].mxu0
        %v1581 = vadd.f32 %v1436, %v1580
        %v1582 = vpop.f32.mrb[0].mxu0
        %v1583 = vpop.f32.mrb[0].mxu0
        %v1584 = vadd.f32 %v1439, %v1583
        %v1585 = vpop.f32.mrb[0].mxu0
        %1586 = vmatprep.mubr.bf16.mxu0 0
        %1587 = vmatmul.mubr.bf16.gmra.mrb[0].mxu0 %v1298
        %v1588 = vpop.f32.mrb[0].mxu0
        %v1589 = vadd.f32 %v1444, %v1588
        %v1590 = vpop.f32.mrb[0].mxu0
        %v1591 = vpop.f32.mrb[0].mxu0
        %v1592 = vadd.f32 %v1447, %v1591
        %v1593 = vpop.f32.mrb[0].mxu0
        %1594 = vmatprep.mubr.bf16.mxu0 0
        %1595 = vmatmul.mubr.bf16.gmra.mrb[0].mxu0 %v1299
        %v1596 = vpop.f32.mrb[0].mxu0
        %v1597 = vadd.f32 %v1452, %v1596
        %v1598 = vpop.f32.mrb[0].mxu0
        %v1599 = vpop.f32.mrb[0].mxu0
        %v1600 = vadd.f32 %v1455, %v1599
        %v1601 = vpop.f32.mrb[0].mxu0
        %1602 = vmatprep.mubr.bf16.mxu0 0
        %1603 = vmatmul.mubr.bf16.gmra.mrb[0].mxu0 %v1300
        %v1604 = vpop.f32.mrb[0].mxu0
        %v1605 = vadd.f32 %v1460, %v1604
        %v1606 = vpop.f32.mrb[0].mxu0
        %v1607 = vpop.f32.mrb[0].mxu0
        %v1608 = vadd.f32 %v1463, %v1607
        %v1609 = vpop.f32.mrb[0].mxu0
        %1610 = vmatprep.mubr.bf16.mxu0 0
        %1611 = vmatmul.mubr.bf16.gmra.mrb[0].mxu0 %v1301
        %v1612 = vpop.f32.mrb[0].mxu0
        %v1613 = vadd.f32 %v1468, %v1612
        %v1614 = vpop.f32.mrb[0].mxu0
        %v1615 = vpop.f32.mrb[0].mxu0
        %v1616 = vadd.f32 %v1471, %v1615
        %v1617 = vpop.f32.mrb[0].mxu0
        %1618 = vmatprep.mubr.bf16.mxu0 0
        %1619 = vmatmul.mubr.bf16.gmra.mrb[0].mxu0 %v1302
        %v1620 = vpop.f32.mrb[0].mxu0
        %v1621 = vadd.f32 %v1476, %v1620
        %v1622 = vpop.f32.mrb[0].mxu0
        %v1623 = vpop.f32.mrb[0].mxu0
        %v1624 = vadd.f32 %v1479, %v1623
        %v1625 = vpop.f32.mrb[0].mxu0
        %1626 = vmatprep.mubr.bf16.mxu0 0
        %1627 = vmatmul.mubr.bf16.gmra.mrb[0].mxu0 %v1303
        %v1628 = vpop.f32.mrb[0].mxu0
        %v1629 = vadd.f32 %v1484, %v1628
        %v1630 = vpop.f32.mrb[0].mxu0
        %v1631 = vpop.f32.mrb[0].mxu0
        %v1632 = vadd.f32 %v1487, %v1631
        %v1633 = vpop.f32.mrb[0].mxu0
        %1634 = vmatprep.mubr.bf16.mxu0 0
        %1635 = vmatmul.mubr.bf16.gmra.mrb[0].mxu0 %v1304
        %v1636 = vpop.f32.mrb[0].mxu0
        %v1637 = vadd.f32 %v1492, %v1636
        %v1638 = vpop.f32.mrb[0].mxu0
        %v1639 = vpop.f32.mrb[0].mxu0
        %v1640 = vadd.f32 %v1495, %v1639
        %v1641 = vpop.f32.mrb[0].mxu0
        %1642 = vdwg.mxu0
        %v1644 = vlaneseq
        %v1645 = vshrl.u32 %v1644, 7
        %v1646 = vsub.s32 0, %v1645
        %v1647 = vrot.slane %v1070, %v1646
        %v1649 = vadd.f32 %v1581, %v1647
        %v1650 = vadd.f32 %v1584, %v1647
        %v1651 = vadd.f32 %v1589, %v1647
        %v1652 = vadd.f32 %v1592, %v1647
        %v1653 = vadd.f32 %v1597, %v1647
        %v1654 = vadd.f32 %v1600, %v1647
        %v1655 = vadd.f32 %v1605, %v1647
        %v1656 = vadd.f32 %v1608, %v1647
        %v1657 = vadd.f32 %v1613, %v1647
        %v1658 = vadd.f32 %v1616, %v1647
        %v1659 = vadd.f32 %v1621, %v1647
        %v1660 = vadd.f32 %v1624, %v1647
        %v1661 = vadd.f32 %v1629, %v1647
        %v1662 = vadd.f32 %v1632, %v1647
        %v1663 = vadd.f32 %v1637, %v1647
        %v1664 = vadd.f32 %v1640, %v1647
        %v1681 = vunpack.c.l.b16 %v990
        %v1682 = vunpack.c.l.b16 %v991
        %v1683 = vunpack.c.l.b16 %v992
        %v1684 = vunpack.c.l.b16 %v993
        %v1685 = vunpack.c.l.b16 %v994
        %v1686 = vunpack.c.l.b16 %v995
        %v1687 = vunpack.c.l.b16 %v996
        %v1688 = vunpack.c.l.b16 %v997
        %v1689 = vunpack.c.l.b16 %v998
        %v1690 = vunpack.c.l.b16 %v999
        %v1691 = vunpack.c.l.b16 %v1000
        %v1692 = vunpack.c.l.b16 %v1001
        %v1693 = vunpack.c.l.b16 %v1002
        %v1694 = vunpack.c.l.b16 %v1003
        %v1695 = vunpack.c.l.b16 %v1004
        %v1696 = vunpack.c.l.b16 %v1005
        %v1697 = vpack.c.b16 %v1682, %v1681
        %v1698 = vpack.c.b16 %v1684, %v1683
        %v1699 = vpack.c.b16 %v1686, %v1685
        %v1700 = vpack.c.b16 %v1688, %v1687
        %v1701 = vpack.c.b16 %v1690, %v1689
        %v1702 = vpack.c.b16 %v1692, %v1691
        %v1703 = vpack.c.b16 %v1694, %v1693
        %v1704 = vpack.c.b16 %v1696, %v1695
        %1713 = vmatprep.subr.bf16.mxu0 0
        %1714 = vmatpush1.bf16.msra.mxu0 %v1337
        %1715 = vmatprep.subr.bf16.mxu0 0
        %1716 = vmatpush1.bf16.msra.mxu0 %v1338
        %1717 = vmatprep.subr.bf16.mxu0 0
        %1718 = vmatpush1.bf16.msra.mxu0 %v1339
        %1719 = vmatprep.subr.bf16.mxu0 0
        %1720 = vmatpush1.bf16.msra.mxu0 %v1340
        %1721 = vmatprep.subr.bf16.mxu0 0
        %1722 = vmatpush1.bf16.msra.mxu0 %v1341
        %1723 = vmatprep.subr.bf16.mxu0 0
        %1724 = vmatpush1.bf16.msra.mxu0 %v1342
        %1725 = vmatprep.subr.bf16.mxu0 0
        %1726 = vmatpush1.bf16.msra.mxu0 %v1343
        %1727 = vmatprep.subr.bf16.mxu0 0
        %1728 = vmatpush1.bf16.msra.mxu0 %v1344
        %1729 = vmatprep.subr.bf16.mxu0 0
        %1730 = vmatpush1.bf16.msra.mxu0 0
        %1731 = vmatprep.subr.bf16.mxu0 0
        %1732 = vmatpush1.bf16.msra.mxu0 0
        %1733 = vmatprep.subr.bf16.mxu0 0
        %1734 = vmatpush1.bf16.msra.mxu0 0
        %1735 = vmatprep.subr.bf16.mxu0 0
        %1736 = vmatpush1.bf16.msra.mxu0 0
        %1737 = vmatprep.subr.bf16.mxu0 0
        %1738 = vmatpush1.bf16.msra.mxu0 0
        %1739 = vmatprep.subr.bf16.mxu0 0
        %1740 = vmatpush1.bf16.msra.mxu0 0
        %1741 = vmatprep.subr.bf16.mxu0 0
        %1742 = vmatpush1.bf16.msra.mxu0 0
        %1743 = vmatprep.subr.bf16.mxu0 0
        %1744 = vmatpush1.bf16.msra.mxu0 0
        %1745 = vmatprep.mubr.bf16.mxu0 0
        %1746 = vmatmul.mubr.bf16.gmra.mrb[0].mxu0 %v1697
        %v1747 = vpop.f32.mrb[0].mxu0
        %v1748 = vadd.f32 0.0, %v1747
        %v1749 = vpop.f32.mrb[0].mxu0
        %v1750 = vpop.f32.mrb[0].mxu0
        %v1751 = vadd.f32 0.0, %v1750
        %v1752 = vpop.f32.mrb[0].mxu0
        %1753 = vmatprep.mubr.bf16.mxu0 0
        %1754 = vmatmul.mubr.bf16.gmra.mrb[0].mxu0 %v1698
        %v1755 = vpop.f32.mrb[0].mxu0
        %v1756 = vadd.f32 0.0, %v1755
        %v1757 = vpop.f32.mrb[0].mxu0
        %v1758 = vpop.f32.mrb[0].mxu0
        %v1759 = vadd.f32 0.0, %v1758
        %v1760 = vpop.f32.mrb[0].mxu0
        %1761 = vmatprep.mubr.bf16.mxu0 0
        %1762 = vmatmul.mubr.bf16.gmra.mrb[0].mxu0 %v1699
        %v1763 = vpop.f32.mrb[0].mxu0
        %v1764 = vadd.f32 0.0, %v1763
        %v1765 = vpop.f32.mrb[0].mxu0
        %v1766 = vpop.f32.mrb[0].mxu0
        %v1767 = vadd.f32 0.0, %v1766
        %v1768 = vpop.f32.mrb[0].mxu0
        %1769 = vmatprep.mubr.bf16.mxu0 0
        %1770 = vmatmul.mubr.bf16.gmra.mrb[0].mxu0 %v1700
        %v1771 = vpop.f32.mrb[0].mxu0
        %v1772 = vadd.f32 0.0, %v1771
        %v1773 = vpop.f32.mrb[0].mxu0
        %v1774 = vpop.f32.mrb[0].mxu0
        %v1775 = vadd.f32 0.0, %v1774
        %v1776 = vpop.f32.mrb[0].mxu0
        %1777 = vmatprep.mubr.bf16.mxu0 0
        %1778 = vmatmul.mubr.bf16.gmra.mrb[0].mxu0 %v1701
        %v1779 = vpop.f32.mrb[0].mxu0
        %v1780 = vadd.f32 0.0, %v1779
        %v1781 = vpop.f32.mrb[0].mxu0
        %v1782 = vpop.f32.mrb[0].mxu0
        %v1783 = vadd.f32 0.0, %v1782
        %v1784 = vpop.f32.mrb[0].mxu0
        %1785 = vmatprep.mubr.bf16.mxu0 0
        %1786 = vmatmul.mubr.bf16.gmra.mrb[0].mxu0 %v1702
        %v1787 = vpop.f32.mrb[0].mxu0
        %v1788 = vadd.f32 0.0, %v1787
        %v1789 = vpop.f32.mrb[0].mxu0
        %v1790 = vpop.f32.mrb[0].mxu0
        %v1791 = vadd.f32 0.0, %v1790
        %v1792 = vpop.f32.mrb[0].mxu0
        %1793 = vmatprep.mubr.bf16.mxu0 0
        %1794 = vmatmul.mubr.bf16.gmra.mrb[0].mxu0 %v1703
        %v1795 = vpop.f32.mrb[0].mxu0
        %v1796 = vadd.f32 0.0, %v1795
        %v1797 = vpop.f32.mrb[0].mxu0
        %v1798 = vpop.f32.mrb[0].mxu0
        %v1799 = vadd.f32 0.0, %v1798
        %v1800 = vpop.f32.mrb[0].mxu0
        %1801 = vmatprep.mubr.bf16.mxu0 0
        %1802 = vmatmul.mubr.bf16.gmra.mrb[0].mxu0 %v1704
        %v1803 = vpop.f32.mrb[0].mxu0
        %v1804 = vadd.f32 0.0, %v1803
        %v1805 = vpop.f32.mrb[0].mxu0
        %v1806 = vpop.f32.mrb[0].mxu0
        %v1807 = vadd.f32 0.0, %v1806
        %v1808 = vpop.f32.mrb[0].mxu0
        %1809 = vdwg.mxu0
        %v1810 = vpack.c.bf16 %v1751, %v1748
        %v1811 = vpack.c.bf16 %v1759, %v1756
        %v1812 = vpack.c.bf16 %v1767, %v1764
        %v1813 = vpack.c.bf16 %v1775, %v1772
        %v1814 = vpack.c.bf16 %v1783, %v1780
        %v1815 = vpack.c.bf16 %v1791, %v1788
        %v1816 = vpack.c.bf16 %v1799, %v1796
        %v1817 = vpack.c.bf16 %v1807, %v1804
        %v1834 = vunpack.c.l.b16 %v1087
        %v1835 = vunpack.c.l.b16 %v1088
        %v1836 = vunpack.c.l.b16 %v1089
        %v1837 = vunpack.c.l.b16 %v1090
        %v1838 = vunpack.c.l.b16 %v1091
        %v1839 = vunpack.c.l.b16 %v1092
        %v1840 = vunpack.c.l.b16 %v1093
        %v1841 = vunpack.c.l.b16 %v1094
        %v1842 = vunpack.c.l.b16 %v1095
        %v1843 = vunpack.c.l.b16 %v1096
        %v1844 = vunpack.c.l.b16 %v1097
        %v1845 = vunpack.c.l.b16 %v1098
        %v1846 = vunpack.c.l.b16 %v1099
        %v1847 = vunpack.c.l.b16 %v1100
        %v1848 = vunpack.c.l.b16 %v1101
        %v1849 = vunpack.c.l.b16 %v1102
        %v1850 = vpack.c.b16 %v1835, %v1834
        %v1851 = vpack.c.b16 %v1837, %v1836
        %v1852 = vpack.c.b16 %v1839, %v1838
        %v1853 = vpack.c.b16 %v1841, %v1840
        %v1854 = vpack.c.b16 %v1843, %v1842
        %v1855 = vpack.c.b16 %v1845, %v1844
        %v1856 = vpack.c.b16 %v1847, %v1846
        %v1857 = vpack.c.b16 %v1849, %v1848
        %1866 = vmatprep.subr.bf16.mxu0 0
        %1867 = vmatpush1.bf16.msra.mxu0 %v1850
        %1868 = vmatprep.subr.bf16.mxu0 0
        %1869 = vmatpush1.bf16.msra.mxu0 %v1851
        %1870 = vmatprep.subr.bf16.mxu0 0
        %1871 = vmatpush1.bf16.msra.mxu0 %v1852
        %1872 = vmatprep.subr.bf16.mxu0 0
        %1873 = vmatpush1.bf16.msra.mxu0 %v1853
        %1874 = vmatprep.subr.bf16.mxu0 0
        %1875 = vmatpush1.bf16.msra.mxu0 %v1854
        %1876 = vmatprep.subr.bf16.mxu0 0
        %1877 = vmatpush1.bf16.msra.mxu0 %v1855
        %1878 = vmatprep.subr.bf16.mxu0 0
        %1879 = vmatpush1.bf16.msra.mxu0 %v1856
        %1880 = vmatprep.subr.bf16.mxu0 0
        %1881 = vmatpush1.bf16.msra.mxu0 %v1857
        %1882 = vmatprep.subr.bf16.mxu0 0
        %1883 = vmatpush1.bf16.msra.mxu0 0
        %1884 = vmatprep.subr.bf16.mxu0 0
        %1885 = vmatpush1.bf16.msra.mxu0 0
        %1886 = vmatprep.subr.bf16.mxu0 0
        %1887 = vmatpush1.bf16.msra.mxu0 0
        %1888 = vmatprep.subr.bf16.mxu0 0
        %1889 = vmatpush1.bf16.msra.mxu0 0
        %1890 = vmatprep.subr.bf16.mxu0 0
        %1891 = vmatpush1.bf16.msra.mxu0 0
        %1892 = vmatprep.subr.bf16.mxu0 0
        %1893 = vmatpush1.bf16.msra.mxu0 0
        %1894 = vmatprep.subr.bf16.mxu0 0
        %1895 = vmatpush1.bf16.msra.mxu0 0
        %1896 = vmatprep.subr.bf16.mxu0 0
        %1897 = vmatpush1.bf16.msra.mxu0 0
        %1898 = vmatprep.mubr.bf16.mxu0 0
        %1899 = vmatmul.mubr.bf16.gmra.mrb[0].mxu0 %v1184
        %v1900 = vpop.f32.mrb[0].mxu0
        %v1901 = vadd.f32 0.0, %v1900
        %v1902 = vpop.f32.mrb[0].mxu0
        %v1903 = vpop.f32.mrb[0].mxu0
        %v1904 = vadd.f32 0.0, %v1903
        %v1905 = vpop.f32.mrb[0].mxu0
        %1906 = vmatprep.mubr.bf16.mxu0 0
        %1907 = vmatmul.mubr.bf16.gmra.mrb[0].mxu0 %v1185
        %v1908 = vpop.f32.mrb[0].mxu0
        %v1909 = vadd.f32 0.0, %v1908
        %v1910 = vpop.f32.mrb[0].mxu0
        %v1911 = vpop.f32.mrb[0].mxu0
        %v1912 = vadd.f32 0.0, %v1911
        %v1913 = vpop.f32.mrb[0].mxu0
        %1914 = vmatprep.mubr.bf16.mxu0 0
        %1915 = vmatmul.mubr.bf16.gmra.mrb[0].mxu0 %v1186
        %v1916 = vpop.f32.mrb[0].mxu0
        %v1917 = vadd.f32 0.0, %v1916
        %v1918 = vpop.f32.mrb[0].mxu0
        %v1919 = vpop.f32.mrb[0].mxu0
        %v1920 = vadd.f32 0.0, %v1919
        %v1921 = vpop.f32.mrb[0].mxu0
        %1922 = vmatprep.mubr.bf16.mxu0 0
        %1923 = vmatmul.mubr.bf16.gmra.mrb[0].mxu0 %v1187
        %v1924 = vpop.f32.mrb[0].mxu0
        %v1925 = vadd.f32 0.0, %v1924
        %v1926 = vpop.f32.mrb[0].mxu0
        %v1927 = vpop.f32.mrb[0].mxu0
        %v1928 = vadd.f32 0.0, %v1927
        %v1929 = vpop.f32.mrb[0].mxu0
        %1930 = vmatprep.mubr.bf16.mxu0 0
        %1931 = vmatmul.mubr.bf16.gmra.mrb[0].mxu0 %v1188
        %v1932 = vpop.f32.mrb[0].mxu0
        %v1933 = vadd.f32 0.0, %v1932
        %v1934 = vpop.f32.mrb[0].mxu0
        %v1935 = vpop.f32.mrb[0].mxu0
        %v1936 = vadd.f32 0.0, %v1935
        %v1937 = vpop.f32.mrb[0].mxu0
        %1938 = vmatprep.mubr.bf16.mxu0 0
        %1939 = vmatmul.mubr.bf16.gmra.mrb[0].mxu0 %v1189
        %v1940 = vpop.f32.mrb[0].mxu0
        %v1941 = vadd.f32 0.0, %v1940
        %v1942 = vpop.f32.mrb[0].mxu0
        %v1943 = vpop.f32.mrb[0].mxu0
        %v1944 = vadd.f32 0.0, %v1943
        %v1945 = vpop.f32.mrb[0].mxu0
        %1946 = vmatprep.mubr.bf16.mxu0 0
        %1947 = vmatmul.mubr.bf16.gmra.mrb[0].mxu0 %v1190
        %v1948 = vpop.f32.mrb[0].mxu0
        %v1949 = vadd.f32 0.0, %v1948
        %v1950 = vpop.f32.mrb[0].mxu0
        %v1951 = vpop.f32.mrb[0].mxu0
        %v1952 = vadd.f32 0.0, %v1951
        %v1953 = vpop.f32.mrb[0].mxu0
        %1954 = vmatprep.mubr.bf16.mxu0 0
        %1955 = vmatmul.mubr.bf16.gmra.mrb[0].mxu0 %v1191
        %v1956 = vpop.f32.mrb[0].mxu0
        %v1957 = vadd.f32 0.0, %v1956
        %v1958 = vpop.f32.mrb[0].mxu0
        %v1959 = vpop.f32.mrb[0].mxu0
        %v1960 = vadd.f32 0.0, %v1959
        %v1961 = vpop.f32.mrb[0].mxu0
        %1962 = vdwg.mxu0
        %v1979 = vunpack.c.l.b16 %v1071
        %v1980 = vunpack.c.l.b16 %v1072
        %v1981 = vunpack.c.l.b16 %v1073
        %v1982 = vunpack.c.l.b16 %v1074
        %v1983 = vunpack.c.l.b16 %v1075
        %v1984 = vunpack.c.l.b16 %v1076
        %v1985 = vunpack.c.l.b16 %v1077
        %v1986 = vunpack.c.l.b16 %v1078
        %v1987 = vunpack.c.l.b16 %v1079
        %v1988 = vunpack.c.l.b16 %v1080
        %v1989 = vunpack.c.l.b16 %v1081
        %v1990 = vunpack.c.l.b16 %v1082
        %v1991 = vunpack.c.l.b16 %v1083
        %v1992 = vunpack.c.l.b16 %v1084
        %v1993 = vunpack.c.l.b16 %v1085
        %v1994 = vunpack.c.l.b16 %v1086
        %v1995 = vpack.c.b16 %v1980, %v1979
        %v1996 = vpack.c.b16 %v1982, %v1981
        %v1997 = vpack.c.b16 %v1984, %v1983
        %v1998 = vpack.c.b16 %v1986, %v1985
        %v1999 = vpack.c.b16 %v1988, %v1987
        %v2000 = vpack.c.b16 %v1990, %v1989
        %v2001 = vpack.c.b16 %v1992, %v1991
        %v2002 = vpack.c.b16 %v1994, %v1993
        %2011 = vmatprep.subr.bf16.mxu0 0
        %2012 = vmatpush1.bf16.msra.mxu0 %v1995
        %2013 = vmatprep.subr.bf16.mxu0 0
        %2014 = vmatpush1.bf16.msra.mxu0 %v1996
        %2015 = vmatprep.subr.bf16.mxu0 0
        %2016 = vmatpush1.bf16.msra.mxu0 %v1997
        %2017 = vmatprep.subr.bf16.mxu0 0
        %2018 = vmatpush1.bf16.msra.mxu0 %v1998
        %2019 = vmatprep.subr.bf16.mxu0 0
        %2020 = vmatpush1.bf16.msra.mxu0 %v1999
        %2021 = vmatprep.subr.bf16.mxu0 0
        %2022 = vmatpush1.bf16.msra.mxu0 %v2000
        %2023 = vmatprep.subr.bf16.mxu0 0
        %2024 = vmatpush1.bf16.msra.mxu0 %v2001
        %2025 = vmatprep.subr.bf16.mxu0 0
        %2026 = vmatpush1.bf16.msra.mxu0 %v2002
        %2027 = vmatprep.subr.bf16.mxu0 0
        %2028 = vmatpush1.bf16.msra.mxu0 0
        %2029 = vmatprep.subr.bf16.mxu0 0
        %2030 = vmatpush1.bf16.msra.mxu0 0
        %2031 = vmatprep.subr.bf16.mxu0 0
        %2032 = vmatpush1.bf16.msra.mxu0 0
        %2033 = vmatprep.subr.bf16.mxu0 0
        %2034 = vmatpush1.bf16.msra.mxu0 0
        %2035 = vmatprep.subr.bf16.mxu0 0
        %2036 = vmatpush1.bf16.msra.mxu0 0
        %2037 = vmatprep.subr.bf16.mxu0 0
        %2038 = vmatpush1.bf16.msra.mxu0 0
        %2039 = vmatprep.subr.bf16.mxu0 0
        %2040 = vmatpush1.bf16.msra.mxu0 0
        %2041 = vmatprep.subr.bf16.mxu0 0
        %2042 = vmatpush1.bf16.msra.mxu0 0
        %2043 = vmatprep.mubr.bf16.mxu0 0
        %2044 = vmatmul.mubr.bf16.gmra.mrb[0].mxu0 %v1810
        %v2045 = vpop.f32.mrb[0].mxu0
        %v2046 = vadd.f32 %v1901, %v2045
        %v2047 = vpop.f32.mrb[0].mxu0
        %v2048 = vpop.f32.mrb[0].mxu0
        %v2049 = vadd.f32 %v1904, %v2048
        %v2050 = vpop.f32.mrb[0].mxu0
        %2051 = vmatprep.mubr.bf16.mxu0 0
        %2052 = vmatmul.mubr.bf16.gmra.mrb[0].mxu0 %v1811
        %v2053 = vpop.f32.mrb[0].mxu0
        %v2054 = vadd.f32 %v1909, %v2053
        %v2055 = vpop.f32.mrb[0].mxu0
        %v2056 = vpop.f32.mrb[0].mxu0
        %v2057 = vadd.f32 %v1912, %v2056
        %v2058 = vpop.f32.mrb[0].mxu0
        %2059 = vmatprep.mubr.bf16.mxu0 0
        %2060 = vmatmul.mubr.bf16.gmra.mrb[0].mxu0 %v1812
        %v2061 = vpop.f32.mrb[0].mxu0
        %v2062 = vadd.f32 %v1917, %v2061
        %v2063 = vpop.f32.mrb[0].mxu0
        %v2064 = vpop.f32.mrb[0].mxu0
        %v2065 = vadd.f32 %v1920, %v2064
        %v2066 = vpop.f32.mrb[0].mxu0
        %2067 = vmatprep.mubr.bf16.mxu0 0
        %2068 = vmatmul.mubr.bf16.gmra.mrb[0].mxu0 %v1813
        %v2069 = vpop.f32.mrb[0].mxu0
        %v2070 = vadd.f32 %v1925, %v2069
        %v2071 = vpop.f32.mrb[0].mxu0
        %v2072 = vpop.f32.mrb[0].mxu0
        %v2073 = vadd.f32 %v1928, %v2072
        %v2074 = vpop.f32.mrb[0].mxu0
        %2075 = vmatprep.mubr.bf16.mxu0 0
        %2076 = vmatmul.mubr.bf16.gmra.mrb[0].mxu0 %v1814
        %v2077 = vpop.f32.mrb[0].mxu0
        %v2078 = vadd.f32 %v1933, %v2077
        %v2079 = vpop.f32.mrb[0].mxu0
        %v2080 = vpop.f32.mrb[0].mxu0
        %v2081 = vadd.f32 %v1936, %v2080
        %v2082 = vpop.f32.mrb[0].mxu0
        %2083 = vmatprep.mubr.bf16.mxu0 0
        %2084 = vmatmul.mubr.bf16.gmra.mrb[0].mxu0 %v1815
        %v2085 = vpop.f32.mrb[0].mxu0
        %v2086 = vadd.f32 %v1941, %v2085
        %v2087 = vpop.f32.mrb[0].mxu0
        %v2088 = vpop.f32.mrb[0].mxu0
        %v2089 = vadd.f32 %v1944, %v2088
        %v2090 = vpop.f32.mrb[0].mxu0
        %2091 = vmatprep.mubr.bf16.mxu0 0
        %2092 = vmatmul.mubr.bf16.gmra.mrb[0].mxu0 %v1816
        %v2093 = vpop.f32.mrb[0].mxu0
        %v2094 = vadd.f32 %v1949, %v2093
        %v2095 = vpop.f32.mrb[0].mxu0
        %v2096 = vpop.f32.mrb[0].mxu0
        %v2097 = vadd.f32 %v1952, %v2096
        %v2098 = vpop.f32.mrb[0].mxu0
        %2099 = vmatprep.mubr.bf16.mxu0 0
        %2100 = vmatmul.mubr.bf16.gmra.mrb[0].mxu0 %v1817
        %v2101 = vpop.f32.mrb[0].mxu0
        %v2102 = vadd.f32 %v1957, %v2101
        %v2103 = vpop.f32.mrb[0].mxu0
        %v2104 = vpop.f32.mrb[0].mxu0
        %v2105 = vadd.f32 %v1960, %v2104
        %v2106 = vpop.f32.mrb[0].mxu0
        %2107 = vdwg.mxu0
        %v2109 = vlaneseq
        %v2110 = vshrl.u32 %v2109, 7
        %v2111 = vsub.s32 0, %v2110
        %v2112 = vrot.slane %v1103, %v2111
        %v2114 = vadd.f32 %v2046, %v2112
        %v2115 = vadd.f32 %v2049, %v2112
        %v2116 = vadd.f32 %v2054, %v2112
        %v2117 = vadd.f32 %v2057, %v2112
        %v2118 = vadd.f32 %v2062, %v2112
        %v2119 = vadd.f32 %v2065, %v2112
        %v2120 = vadd.f32 %v2070, %v2112
        %v2121 = vadd.f32 %v2073, %v2112
        %v2122 = vadd.f32 %v2078, %v2112
        %v2123 = vadd.f32 %v2081, %v2112
        %v2124 = vadd.f32 %v2086, %v2112
        %v2125 = vadd.f32 %v2089, %v2112
        %v2126 = vadd.f32 %v2094, %v2112
        %v2127 = vadd.f32 %v2097, %v2112
        %v2128 = vadd.f32 %v2102, %v2112
        %v2129 = vadd.f32 %v2105, %v2112
        %v2130 = vmul.f32 %v1649, 0.01
        %v2131 = vmul.f32 %v1650, 0.01
        %v2132 = vmul.f32 %v1651, 0.01
        %v2133 = vmul.f32 %v1652, 0.01
        %v2134 = vmul.f32 %v1653, 0.01
        %v2135 = vmul.f32 %v1654, 0.01
        %v2136 = vmul.f32 %v1655, 0.01
        %v2137 = vmul.f32 %v1656, 0.01
        %v2138 = vmul.f32 %v1657, 0.01
        %v2139 = vmul.f32 %v1658, 0.01
        %v2140 = vmul.f32 %v1659, 0.01
        %v2141 = vmul.f32 %v1660, 0.01
        %v2142 = vmul.f32 %v1661, 0.01
        %v2143 = vmul.f32 %v1662, 0.01
        %v2144 = vmul.f32 %v1663, 0.01
        %v2145 = vmul.f32 %v1664, 0.01
        %v2146 = vmax.f32 %v1649, %v2130
        %v2147 = vmax.f32 %v1650, %v2131
        %v2148 = vmax.f32 %v1651, %v2132
        %v2149 = vmax.f32 %v1652, %v2133
        %v2150 = vmax.f32 %v1653, %v2134
        %v2151 = vmax.f32 %v1654, %v2135
        %v2152 = vmax.f32 %v1655, %v2136
        %v2153 = vmax.f32 %v1656, %v2137
        %v2154 = vmax.f32 %v1657, %v2138
        %v2155 = vmax.f32 %v1658, %v2139
        %v2156 = vmax.f32 %v1659, %v2140
        %v2157 = vmax.f32 %v1660, %v2141
        %v2158 = vmax.f32 %v1661, %v2142
        %v2159 = vmax.f32 %v1662, %v2143
        %v2160 = vmax.f32 %v1663, %v2144
        %v2161 = vmax.f32 %v1664, %v2145
        %v2162 = vmul.f32 %v2114, 0.01
        %v2163 = vmul.f32 %v2115, 0.01
        %v2164 = vmul.f32 %v2116, 0.01
        %v2165 = vmul.f32 %v2117, 0.01
        %v2166 = vmul.f32 %v2118, 0.01
        %v2167 = vmul.f32 %v2119, 0.01
        %v2168 = vmul.f32 %v2120, 0.01
        %v2169 = vmul.f32 %v2121, 0.01
        %v2170 = vmul.f32 %v2122, 0.01
        %v2171 = vmul.f32 %v2123, 0.01
        %v2172 = vmul.f32 %v2124, 0.01
        %v2173 = vmul.f32 %v2125, 0.01
        %v2174 = vmul.f32 %v2126, 0.01
        %v2175 = vmul.f32 %v2127, 0.01
        %v2176 = vmul.f32 %v2128, 0.01
        %v2177 = vmul.f32 %v2129, 0.01
        %v2178 = vmax.f32 %v2114, %v2162
        %v2179 = vmax.f32 %v2115, %v2163
        %v2180 = vmax.f32 %v2116, %v2164
        %v2181 = vmax.f32 %v2117, %v2165
        %v2182 = vmax.f32 %v2118, %v2166
        %v2183 = vmax.f32 %v2119, %v2167
        %v2184 = vmax.f32 %v2120, %v2168
        %v2185 = vmax.f32 %v2121, %v2169
        %v2186 = vmax.f32 %v2122, %v2170
        %v2187 = vmax.f32 %v2123, %v2171
        %v2188 = vmax.f32 %v2124, %v2172
        %v2189 = vmax.f32 %v2125, %v2173
        %v2190 = vmax.f32 %v2126, %v2174
        %v2191 = vmax.f32 %v2127, %v2175
        %v2192 = vmax.f32 %v2128, %v2176
        %v2193 = vmax.f32 %v2129, %v2177
        %v2194 = vpack.c.bf16 %v2147, %v2146
        %v2195 = vpack.c.bf16 %v2149, %v2148
        %v2196 = vpack.c.bf16 %v2151, %v2150
        %v2197 = vpack.c.bf16 %v2153, %v2152
        %v2198 = vpack.c.bf16 %v2155, %v2154
        %v2199 = vpack.c.bf16 %v2157, %v2156
        %v2200 = vpack.c.bf16 %v2159, %v2158
        %v2201 = vpack.c.bf16 %v2161, %v2160
        %v2202 = vpack.c.bf16 %v2179, %v2178
        %v2203 = vpack.c.bf16 %v2181, %v2180
        %v2204 = vpack.c.bf16 %v2183, %v2182
        %v2205 = vpack.c.bf16 %v2185, %v2184
        %v2206 = vpack.c.bf16 %v2187, %v2186
        %v2207 = vpack.c.bf16 %v2189, %v2188
        %v2208 = vpack.c.bf16 %v2191, %v2190
        %v2209 = vpack.c.bf16 %v2193, %v2192
        %v2210 = vld [vmem:[#allocation20] sm:$0xf]
        %v2211 = vld [vmem:[#allocation20 + $0x4] sm:$0xf]
        %v2212 = vld [vmem:[#allocation20 + $0x8] sm:$0xf]
        %v2213 = vld [vmem:[#allocation20 + $0xc] sm:$0xf]
        %v2214 = vld [vmem:[#allocation20 + $0x10] sm:$0xf]
        %v2215 = vld [vmem:[#allocation20 + $0x14] sm:$0xf]
        %v2216 = vld [vmem:[#allocation20 + $0x18] sm:$0xf]
        %v2217 = vld [vmem:[#allocation20 + $0x1c] sm:$0xf]
        %v2218 = vld [vmem:[#allocation20 + $0x20] sm:$0xf]
        %v2219 = vld [vmem:[#allocation20 + $0x24] sm:$0xf]
        %v2220 = vld [vmem:[#allocation20 + $0x28] sm:$0xf]
        %v2221 = vld [vmem:[#allocation20 + $0x2c] sm:$0xf]
        %v2222 = vld [vmem:[#allocation20 + $0x30] sm:$0xf]
        %v2223 = vld [vmem:[#allocation20 + $0x34] sm:$0xf]
        %v2224 = vld [vmem:[#allocation20 + $0x38] sm:$0xf]
        %v2225 = vld [vmem:[#allocation20 + $0x3c] sm:$0xf]
        %v2226 = vld [vmem:[#allocation21] sm:$0xf]
        %v2227 = vld [vmem:[#allocation21 + $0x4] sm:$0xf]
        %v2228 = vld [vmem:[#allocation21 + $0x8] sm:$0xf]
        %v2229 = vld [vmem:[#allocation21 + $0xc] sm:$0xf]
        %v2230 = vld [vmem:[#allocation21 + $0x10] sm:$0xf]
        %v2231 = vld [vmem:[#allocation21 + $0x14] sm:$0xf]
        %v2232 = vld [vmem:[#allocation21 + $0x18] sm:$0xf]
        %v2233 = vld [vmem:[#allocation21 + $0x1c] sm:$0xf]
        %v2234 = vld [vmem:[#allocation21 + $0x20] sm:$0xf]
        %v2235 = vld [vmem:[#allocation21 + $0x24] sm:$0xf]
        %v2236 = vld [vmem:[#allocation21 + $0x28] sm:$0xf]
        %v2237 = vld [vmem:[#allocation21 + $0x2c] sm:$0xf]
        %v2238 = vld [vmem:[#allocation21 + $0x30] sm:$0xf]
        %v2239 = vld [vmem:[#allocation21 + $0x34] sm:$0xf]
        %v2240 = vld [vmem:[#allocation21 + $0x38] sm:$0xf]
        %v2241 = vld [vmem:[#allocation21 + $0x3c] sm:$0xf]
        %v2242 = vld [vmem:[#allocation23] sm:$0x1]
        %2243 = vmatprep.subr.bf16.mxu0 0
        %2244 = vmatpush1.bf16.msra.mxu0 %v2202
        %2245 = vmatprep.subr.bf16.mxu0 0
        %2246 = vmatpush1.bf16.msra.mxu0 %v2203
        %2247 = vmatprep.subr.bf16.mxu0 0
        %2248 = vmatpush1.bf16.msra.mxu0 %v2204
        %2249 = vmatprep.subr.bf16.mxu0 0
        %2250 = vmatpush1.bf16.msra.mxu0 %v2205
        %2251 = vmatprep.subr.bf16.mxu0 0
        %2252 = vmatpush1.bf16.msra.mxu0 %v2206
        %2253 = vmatprep.subr.bf16.mxu0 0
        %2254 = vmatpush1.bf16.msra.mxu0 %v2207
        %2255 = vmatprep.subr.bf16.mxu0 0
        %2256 = vmatpush1.bf16.msra.mxu0 %v2208
        %2257 = vmatprep.subr.bf16.mxu0 0
        %2258 = vmatpush1.bf16.msra.mxu0 %v2209
        %2259 = vmatprep.subr.bf16.mxu0 0
        %2260 = vmatpush1.bf16.msra.mxu0 0
        %2261 = vmatprep.subr.bf16.mxu0 0
        %2262 = vmatpush1.bf16.msra.mxu0 0
        %2263 = vmatprep.subr.bf16.mxu0 0
        %2264 = vmatpush1.bf16.msra.mxu0 0
        %2265 = vmatprep.subr.bf16.mxu0 0
        %2266 = vmatpush1.bf16.msra.mxu0 0
        %2267 = vmatprep.subr.bf16.mxu0 0
        %2268 = vmatpush1.bf16.msra.mxu0 0
        %2269 = vmatprep.subr.bf16.mxu0 0
        %2270 = vmatpush1.bf16.msra.mxu0 0
        %2271 = vmatprep.subr.bf16.mxu0 0
        %2272 = vmatpush1.bf16.msra.mxu0 0
        %2273 = vmatprep.subr.bf16.mxu0 0
        %2274 = vmatpush1.bf16.msra.mxu0 0
        %2275 = vmatprep.mubr.bf16.mxu0 0
        %2276 = vmatmul.mubr.bf16.gmra.mrb[0].mxu0 %v1136
        %v2277 = vpop.f32.mrb[0].mxu0
        %v2278 = vadd.f32 0.0, %v2277
        %v2279 = vpop.f32.mrb[0].mxu0
        %v2280 = vpop.f32.mrb[0].mxu0
        %v2281 = vadd.f32 0.0, %v2280
        %v2282 = vpop.f32.mrb[0].mxu0
        %2283 = vmatprep.mubr.bf16.mxu0 0
        %2284 = vmatmul.mubr.bf16.gmra.mrb[0].mxu0 %v1137
        %v2285 = vpop.f32.mrb[0].mxu0
        %v2286 = vadd.f32 0.0, %v2285
        %v2287 = vpop.f32.mrb[0].mxu0
        %v2288 = vpop.f32.mrb[0].mxu0
        %v2289 = vadd.f32 0.0, %v2288
        %v2290 = vpop.f32.mrb[0].mxu0
        %2291 = vmatprep.mubr.bf16.mxu0 0
        %2292 = vmatmul.mubr.bf16.gmra.mrb[0].mxu0 %v1138
        %v2293 = vpop.f32.mrb[0].mxu0
        %v2294 = vadd.f32 0.0, %v2293
        %v2295 = vpop.f32.mrb[0].mxu0
        %v2296 = vpop.f32.mrb[0].mxu0
        %v2297 = vadd.f32 0.0, %v2296
        %v2298 = vpop.f32.mrb[0].mxu0
        %2299 = vmatprep.mubr.bf16.mxu0 0
        %2300 = vmatmul.mubr.bf16.gmra.mrb[0].mxu0 %v1139
        %v2301 = vpop.f32.mrb[0].mxu0
        %v2302 = vadd.f32 0.0, %v2301
        %v2303 = vpop.f32.mrb[0].mxu0
        %v2304 = vpop.f32.mrb[0].mxu0
        %v2305 = vadd.f32 0.0, %v2304
        %v2306 = vpop.f32.mrb[0].mxu0
        %2307 = vmatprep.mubr.bf16.mxu0 0
        %2308 = vmatmul.mubr.bf16.gmra.mrb[0].mxu0 %v1140
        %v2309 = vpop.f32.mrb[0].mxu0
        %v2310 = vadd.f32 0.0, %v2309
        %v2311 = vpop.f32.mrb[0].mxu0
        %v2312 = vpop.f32.mrb[0].mxu0
        %v2313 = vadd.f32 0.0, %v2312
        %v2314 = vpop.f32.mrb[0].mxu0
        %2315 = vmatprep.mubr.bf16.mxu0 0
        %2316 = vmatmul.mubr.bf16.gmra.mrb[0].mxu0 %v1141
        %v2317 = vpop.f32.mrb[0].mxu0
        %v2318 = vadd.f32 0.0, %v2317
        %v2319 = vpop.f32.mrb[0].mxu0
        %v2320 = vpop.f32.mrb[0].mxu0
        %v2321 = vadd.f32 0.0, %v2320
        %v2322 = vpop.f32.mrb[0].mxu0
        %2323 = vmatprep.mubr.bf16.mxu0 0
        %2324 = vmatmul.mubr.bf16.gmra.mrb[0].mxu0 %v1142
        %v2325 = vpop.f32.mrb[0].mxu0
        %v2326 = vadd.f32 0.0, %v2325
        %v2327 = vpop.f32.mrb[0].mxu0
        %v2328 = vpop.f32.mrb[0].mxu0
        %v2329 = vadd.f32 0.0, %v2328
        %v2330 = vpop.f32.mrb[0].mxu0
        %2331 = vmatprep.mubr.bf16.mxu0 0
        %2332 = vmatmul.mubr.bf16.gmra.mrb[0].mxu0 %v1143
        %v2333 = vpop.f32.mrb[0].mxu0
        %v2334 = vadd.f32 0.0, %v2333
        %v2335 = vpop.f32.mrb[0].mxu0
        %v2336 = vpop.f32.mrb[0].mxu0
        %v2337 = vadd.f32 0.0, %v2336
        %v2338 = vpop.f32.mrb[0].mxu0
        %2339 = vdwg.mxu0
        %v2340 = vpack.c.bf16 %v2281, %v2278
        %v2341 = vpack.c.bf16 %v2289, %v2286
        %v2342 = vpack.c.bf16 %v2297, %v2294
        %v2343 = vpack.c.bf16 %v2305, %v2302
        %v2344 = vpack.c.bf16 %v2313, %v2310
        %v2345 = vpack.c.bf16 %v2321, %v2318
        %v2346 = vpack.c.bf16 %v2329, %v2326
        %v2347 = vpack.c.bf16 %v2337, %v2334
        %v2364 = vunpack.c.l.b16 %v2226
        %v2365 = vunpack.c.l.b16 %v2227
        %v2366 = vunpack.c.l.b16 %v2228
        %v2367 = vunpack.c.l.b16 %v2229
        %v2368 = vunpack.c.l.b16 %v2230
        %v2369 = vunpack.c.l.b16 %v2231
        %v2370 = vunpack.c.l.b16 %v2232
        %v2371 = vunpack.c.l.b16 %v2233
        %v2372 = vunpack.c.l.b16 %v2234
        %v2373 = vunpack.c.l.b16 %v2235
        %v2374 = vunpack.c.l.b16 %v2236
        %v2375 = vunpack.c.l.b16 %v2237
        %v2376 = vunpack.c.l.b16 %v2238
        %v2377 = vunpack.c.l.b16 %v2239
        %v2378 = vunpack.c.l.b16 %v2240
        %v2379 = vunpack.c.l.b16 %v2241
        %v2380 = vpack.c.b16 %v2365, %v2364
        %v2381 = vpack.c.b16 %v2367, %v2366
        %v2382 = vpack.c.b16 %v2369, %v2368
        %v2383 = vpack.c.b16 %v2371, %v2370
        %v2384 = vpack.c.b16 %v2373, %v2372
        %v2385 = vpack.c.b16 %v2375, %v2374
        %v2386 = vpack.c.b16 %v2377, %v2376
        %v2387 = vpack.c.b16 %v2379, %v2378
        %2396 = vmatprep.subr.bf16.mxu0 0
        %2397 = vmatpush1.bf16.msra.mxu0 %v2380
        %2398 = vmatprep.subr.bf16.mxu0 0
        %2399 = vmatpush1.bf16.msra.mxu0 %v2381
        %2400 = vmatprep.subr.bf16.mxu0 0
        %2401 = vmatpush1.bf16.msra.mxu0 %v2382
        %2402 = vmatprep.subr.bf16.mxu0 0
        %2403 = vmatpush1.bf16.msra.mxu0 %v2383
        %2404 = vmatprep.subr.bf16.mxu0 0
        %2405 = vmatpush1.bf16.msra.mxu0 %v2384
        %2406 = vmatprep.subr.bf16.mxu0 0
        %2407 = vmatpush1.bf16.msra.mxu0 %v2385
        %2408 = vmatprep.subr.bf16.mxu0 0
        %2409 = vmatpush1.bf16.msra.mxu0 %v2386
        %2410 = vmatprep.subr.bf16.mxu0 0
        %2411 = vmatpush1.bf16.msra.mxu0 %v2387
        %2412 = vmatprep.subr.bf16.mxu0 0
        %2413 = vmatpush1.bf16.msra.mxu0 0
        %2414 = vmatprep.subr.bf16.mxu0 0
        %2415 = vmatpush1.bf16.msra.mxu0 0
        %2416 = vmatprep.subr.bf16.mxu0 0
        %2417 = vmatpush1.bf16.msra.mxu0 0
        %2418 = vmatprep.subr.bf16.mxu0 0
        %2419 = vmatpush1.bf16.msra.mxu0 0
        %2420 = vmatprep.subr.bf16.mxu0 0
        %2421 = vmatpush1.bf16.msra.mxu0 0
        %2422 = vmatprep.subr.bf16.mxu0 0
        %2423 = vmatpush1.bf16.msra.mxu0 0
        %2424 = vmatprep.subr.bf16.mxu0 0
        %2425 = vmatpush1.bf16.msra.mxu0 0
        %2426 = vmatprep.subr.bf16.mxu0 0
        %2427 = vmatpush1.bf16.msra.mxu0 0
        %2428 = vmatprep.mubr.bf16.mxu0 0
        %2429 = vmatmul.mubr.bf16.gmra.mrb[0].mxu0 %v2194
        %v2430 = vpop.f32.mrb[0].mxu0
        %v2431 = vadd.f32 0.0, %v2430
        %v2432 = vpop.f32.mrb[0].mxu0
        %v2433 = vpop.f32.mrb[0].mxu0
        %v2434 = vadd.f32 0.0, %v2433
        %v2435 = vpop.f32.mrb[0].mxu0
        %2436 = vmatprep.mubr.bf16.mxu0 0
        %2437 = vmatmul.mubr.bf16.gmra.mrb[0].mxu0 %v2195
        %v2438 = vpop.f32.mrb[0].mxu0
        %v2439 = vadd.f32 0.0, %v2438
        %v2440 = vpop.f32.mrb[0].mxu0
        %v2441 = vpop.f32.mrb[0].mxu0
        %v2442 = vadd.f32 0.0, %v2441
        %v2443 = vpop.f32.mrb[0].mxu0
        %2444 = vmatprep.mubr.bf16.mxu0 0
        %2445 = vmatmul.mubr.bf16.gmra.mrb[0].mxu0 %v2196
        %v2446 = vpop.f32.mrb[0].mxu0
        %v2447 = vadd.f32 0.0, %v2446
        %v2448 = vpop.f32.mrb[0].mxu0
        %v2449 = vpop.f32.mrb[0].mxu0
        %v2450 = vadd.f32 0.0, %v2449
        %v2451 = vpop.f32.mrb[0].mxu0
        %2452 = vmatprep.mubr.bf16.mxu0 0
        %2453 = vmatmul.mubr.bf16.gmra.mrb[0].mxu0 %v2197
        %v2454 = vpop.f32.mrb[0].mxu0
        %v2455 = vadd.f32 0.0, %v2454
        %v2456 = vpop.f32.mrb[0].mxu0
        %v2457 = vpop.f32.mrb[0].mxu0
        %v2458 = vadd.f32 0.0, %v2457
        %v2459 = vpop.f32.mrb[0].mxu0
        %2460 = vmatprep.mubr.bf16.mxu0 0
        %2461 = vmatmul.mubr.bf16.gmra.mrb[0].mxu0 %v2198
        %v2462 = vpop.f32.mrb[0].mxu0
        %v2463 = vadd.f32 0.0, %v2462
        %v2464 = vpop.f32.mrb[0].mxu0
        %v2465 = vpop.f32.mrb[0].mxu0
        %v2466 = vadd.f32 0.0, %v2465
        %v2467 = vpop.f32.mrb[0].mxu0
        %2468 = vmatprep.mubr.bf16.mxu0 0
        %2469 = vmatmul.mubr.bf16.gmra.mrb[0].mxu0 %v2199
        %v2470 = vpop.f32.mrb[0].mxu0
        %v2471 = vadd.f32 0.0, %v2470
        %v2472 = vpop.f32.mrb[0].mxu0
        %v2473 = vpop.f32.mrb[0].mxu0
        %v2474 = vadd.f32 0.0, %v2473
        %v2475 = vpop.f32.mrb[0].mxu0
        %2476 = vmatprep.mubr.bf16.mxu0 0
        %2477 = vmatmul.mubr.bf16.gmra.mrb[0].mxu0 %v2200
        %v2478 = vpop.f32.mrb[0].mxu0
        %v2479 = vadd.f32 0.0, %v2478
        %v2480 = vpop.f32.mrb[0].mxu0
        %v2481 = vpop.f32.mrb[0].mxu0
        %v2482 = vadd.f32 0.0, %v2481
        %v2483 = vpop.f32.mrb[0].mxu0
        %2484 = vmatprep.mubr.bf16.mxu0 0
        %2485 = vmatmul.mubr.bf16.gmra.mrb[0].mxu0 %v2201
        %v2486 = vpop.f32.mrb[0].mxu0
        %v2487 = vadd.f32 0.0, %v2486
        %v2488 = vpop.f32.mrb[0].mxu0
        %v2489 = vpop.f32.mrb[0].mxu0
        %v2490 = vadd.f32 0.0, %v2489
        %v2491 = vpop.f32.mrb[0].mxu0
        %2492 = vdwg.mxu0
        %v2509 = vunpack.c.l.b16 %v2210
        %v2510 = vunpack.c.l.b16 %v2211
        %v2511 = vunpack.c.l.b16 %v2212
        %v2512 = vunpack.c.l.b16 %v2213
        %v2513 = vunpack.c.l.b16 %v2214
        %v2514 = vunpack.c.l.b16 %v2215
        %v2515 = vunpack.c.l.b16 %v2216
        %v2516 = vunpack.c.l.b16 %v2217
        %v2517 = vunpack.c.l.b16 %v2218
        %v2518 = vunpack.c.l.b16 %v2219
        %v2519 = vunpack.c.l.b16 %v2220
        %v2520 = vunpack.c.l.b16 %v2221
        %v2521 = vunpack.c.l.b16 %v2222
        %v2522 = vunpack.c.l.b16 %v2223
        %v2523 = vunpack.c.l.b16 %v2224
        %v2524 = vunpack.c.l.b16 %v2225
        %v2525 = vpack.c.b16 %v2510, %v2509
        %v2526 = vpack.c.b16 %v2512, %v2511
        %v2527 = vpack.c.b16 %v2514, %v2513
        %v2528 = vpack.c.b16 %v2516, %v2515
        %v2529 = vpack.c.b16 %v2518, %v2517
        %v2530 = vpack.c.b16 %v2520, %v2519
        %v2531 = vpack.c.b16 %v2522, %v2521
        %v2532 = vpack.c.b16 %v2524, %v2523
        %2541 = vmatprep.subr.bf16.mxu0 0
        %2542 = vmatpush1.bf16.msra.mxu0 %v2525
        %2543 = vmatprep.subr.bf16.mxu0 0
        %2544 = vmatpush1.bf16.msra.mxu0 %v2526
        %2545 = vmatprep.subr.bf16.mxu0 0
        %2546 = vmatpush1.bf16.msra.mxu0 %v2527
        %2547 = vmatprep.subr.bf16.mxu0 0
        %2548 = vmatpush1.bf16.msra.mxu0 %v2528
        %2549 = vmatprep.subr.bf16.mxu0 0
        %2550 = vmatpush1.bf16.msra.mxu0 %v2529
        %2551 = vmatprep.subr.bf16.mxu0 0
        %2552 = vmatpush1.bf16.msra.mxu0 %v2530
        %2553 = vmatprep.subr.bf16.mxu0 0
        %2554 = vmatpush1.bf16.msra.mxu0 %v2531
        %2555 = vmatprep.subr.bf16.mxu0 0
        %2556 = vmatpush1.bf16.msra.mxu0 %v2532
        %2557 = vmatprep.subr.bf16.mxu0 0
        %2558 = vmatpush1.bf16.msra.mxu0 0
        %2559 = vmatprep.subr.bf16.mxu0 0
        %2560 = vmatpush1.bf16.msra.mxu0 0
        %2561 = vmatprep.subr.bf16.mxu0 0
        %2562 = vmatpush1.bf16.msra.mxu0 0
        %2563 = vmatprep.subr.bf16.mxu0 0
        %2564 = vmatpush1.bf16.msra.mxu0 0
        %2565 = vmatprep.subr.bf16.mxu0 0
        %2566 = vmatpush1.bf16.msra.mxu0 0
        %2567 = vmatprep.subr.bf16.mxu0 0
        %2568 = vmatpush1.bf16.msra.mxu0 0
        %2569 = vmatprep.subr.bf16.mxu0 0
        %2570 = vmatpush1.bf16.msra.mxu0 0
        %2571 = vmatprep.subr.bf16.mxu0 0
        %2572 = vmatpush1.bf16.msra.mxu0 0
        %2573 = vmatprep.mubr.bf16.mxu0 0
        %2574 = vmatmul.mubr.bf16.gmra.mrb[0].mxu0 %v2340
        %v2575 = vpop.f32.mrb[0].mxu0
        %v2576 = vadd.f32 %v2431, %v2575
        %v2577 = vpop.f32.mrb[0].mxu0
        %v2578 = vpop.f32.mrb[0].mxu0
        %v2579 = vadd.f32 %v2434, %v2578
        %v2580 = vpop.f32.mrb[0].mxu0
        %2581 = vmatprep.mubr.bf16.mxu0 0
        %2582 = vmatmul.mubr.bf16.gmra.mrb[0].mxu0 %v2341
        %v2583 = vpop.f32.mrb[0].mxu0
        %v2584 = vadd.f32 %v2439, %v2583
        %v2585 = vpop.f32.mrb[0].mxu0
        %v2586 = vpop.f32.mrb[0].mxu0
        %v2587 = vadd.f32 %v2442, %v2586
        %v2588 = vpop.f32.mrb[0].mxu0
        %2589 = vmatprep.mubr.bf16.mxu0 0
        %2590 = vmatmul.mubr.bf16.gmra.mrb[0].mxu0 %v2342
        %v2591 = vpop.f32.mrb[0].mxu0
        %v2592 = vadd.f32 %v2447, %v2591
        %v2593 = vpop.f32.mrb[0].mxu0
        %v2594 = vpop.f32.mrb[0].mxu0
        %v2595 = vadd.f32 %v2450, %v2594
        %v2596 = vpop.f32.mrb[0].mxu0
        %2597 = vmatprep.mubr.bf16.mxu0 0
        %2598 = vmatmul.mubr.bf16.gmra.mrb[0].mxu0 %v2343
        %v2599 = vpop.f32.mrb[0].mxu0
        %v2600 = vadd.f32 %v2455, %v2599
        %v2601 = vpop.f32.mrb[0].mxu0
        %v2602 = vpop.f32.mrb[0].mxu0
        %v2603 = vadd.f32 %v2458, %v2602
        %v2604 = vpop.f32.mrb[0].mxu0
        %2605 = vmatprep.mubr.bf16.mxu0 0
        %2606 = vmatmul.mubr.bf16.gmra.mrb[0].mxu0 %v2344
        %v2607 = vpop.f32.mrb[0].mxu0
        %v2608 = vadd.f32 %v2463, %v2607
        %v2609 = vpop.f32.mrb[0].mxu0
        %v2610 = vpop.f32.mrb[0].mxu0
        %v2611 = vadd.f32 %v2466, %v2610
        %v2612 = vpop.f32.mrb[0].mxu0
        %2613 = vmatprep.mubr.bf16.mxu0 0
        %2614 = vmatmul.mubr.bf16.gmra.mrb[0].mxu0 %v2345
        %v2615 = vpop.f32.mrb[0].mxu0
        %v2616 = vadd.f32 %v2471, %v2615
        %v2617 = vpop.f32.mrb[0].mxu0
        %v2618 = vpop.f32.mrb[0].mxu0
        %v2619 = vadd.f32 %v2474, %v2618
        %v2620 = vpop.f32.mrb[0].mxu0
        %2621 = vmatprep.mubr.bf16.mxu0 0
        %2622 = vmatmul.mubr.bf16.gmra.mrb[0].mxu0 %v2346
        %v2623 = vpop.f32.mrb[0].mxu0
        %v2624 = vadd.f32 %v2479, %v2623
        %v2625 = vpop.f32.mrb[0].mxu0
        %v2626 = vpop.f32.mrb[0].mxu0
        %v2627 = vadd.f32 %v2482, %v2626
        %v2628 = vpop.f32.mrb[0].mxu0
        %2629 = vmatprep.mubr.bf16.mxu0 0
        %2630 = vmatmul.mubr.bf16.gmra.mrb[0].mxu0 %v2347
        %v2631 = vpop.f32.mrb[0].mxu0
        %v2632 = vadd.f32 %v2487, %v2631
        %v2633 = vpop.f32.mrb[0].mxu0
        %v2634 = vpop.f32.mrb[0].mxu0
        %v2635 = vadd.f32 %v2490, %v2634
        %v2636 = vpop.f32.mrb[0].mxu0
        %2637 = vdwg.mxu0
        %v2639 = vlaneseq
        %v2640 = vshrl.u32 %v2639, 7
        %v2641 = vsub.s32 0, %v2640
        %v2642 = vrot.slane %v2242, %v2641
        %v2644 = vadd.f32 %v2576, %v2642
        %v2645 = vadd.f32 %v2579, %v2642
        %v2646 = vadd.f32 %v2584, %v2642
        %v2647 = vadd.f32 %v2587, %v2642
        %v2648 = vadd.f32 %v2592, %v2642
        %v2649 = vadd.f32 %v2595, %v2642
        %v2650 = vadd.f32 %v2600, %v2642
        %v2651 = vadd.f32 %v2603, %v2642
        %v2652 = vadd.f32 %v2608, %v2642
        %v2653 = vadd.f32 %v2611, %v2642
        %v2654 = vadd.f32 %v2616, %v2642
        %v2655 = vadd.f32 %v2619, %v2642
        %v2656 = vadd.f32 %v2624, %v2642
        %v2657 = vadd.f32 %v2627, %v2642
        %v2658 = vadd.f32 %v2632, %v2642
        %v2659 = vadd.f32 %v2635, %v2642
        %v2660 = vmul.f32 %v2644, 0.01
        %v2661 = vmul.f32 %v2645, 0.01
        %v2662 = vmul.f32 %v2646, 0.01
        %v2663 = vmul.f32 %v2647, 0.01
        %v2664 = vmul.f32 %v2648, 0.01
        %v2665 = vmul.f32 %v2649, 0.01
        %v2666 = vmul.f32 %v2650, 0.01
        %v2667 = vmul.f32 %v2651, 0.01
        %v2668 = vmul.f32 %v2652, 0.01
        %v2669 = vmul.f32 %v2653, 0.01
        %v2670 = vmul.f32 %v2654, 0.01
        %v2671 = vmul.f32 %v2655, 0.01
        %v2672 = vmul.f32 %v2656, 0.01
        %v2673 = vmul.f32 %v2657, 0.01
        %v2674 = vmul.f32 %v2658, 0.01
        %v2675 = vmul.f32 %v2659, 0.01
        %v2676 = vmax.f32 %v2644, %v2660
        %v2677 = vmax.f32 %v2645, %v2661
        %v2678 = vmax.f32 %v2646, %v2662
        %v2679 = vmax.f32 %v2647, %v2663
        %v2680 = vmax.f32 %v2648, %v2664
        %v2681 = vmax.f32 %v2649, %v2665
        %v2682 = vmax.f32 %v2650, %v2666
        %v2683 = vmax.f32 %v2651, %v2667
        %v2684 = vmax.f32 %v2652, %v2668
        %v2685 = vmax.f32 %v2653, %v2669
        %v2686 = vmax.f32 %v2654, %v2670
        %v2687 = vmax.f32 %v2655, %v2671
        %v2688 = vmax.f32 %v2656, %v2672
        %v2689 = vmax.f32 %v2657, %v2673
        %v2690 = vmax.f32 %v2658, %v2674
        %v2691 = vmax.f32 %v2659, %v2675
        %v2692 = vpack.c.bf16 %v2677, %v2676
        %v2693 = vpack.c.bf16 %v2679, %v2678
        %v2694 = vpack.c.bf16 %v2681, %v2680
        %v2695 = vpack.c.bf16 %v2683, %v2682
        %v2696 = vpack.c.bf16 %v2685, %v2684
        %v2697 = vpack.c.bf16 %v2687, %v2686
        %v2698 = vpack.c.bf16 %v2689, %v2688
        %v2699 = vpack.c.bf16 %v2691, %v2690
        %v2700 = vld [vmem:[%s17] sm:$0xf]
        %v2701 = vld [vmem:[%s17 + $0x4] sm:$0xf]
        %v2702 = vld [vmem:[%s17 + $0x8] sm:$0xf]
        %v2703 = vld [vmem:[%s17 + $0xc] sm:$0xf]
        %v2704 = vld [vmem:[%s17 + $0x10] sm:$0xf]
        %v2705 = vld [vmem:[%s17 + $0x14] sm:$0xf]
        %v2706 = vld [vmem:[%s17 + $0x18] sm:$0xf]
        %v2707 = vld [vmem:[%s17 + $0x1c] sm:$0xf]
        %v2708 = vld [vmem:[%s17 + $0x20] sm:$0xf]
        %v2709 = vld [vmem:[%s17 + $0x24] sm:$0xf]
        %v2710 = vld [vmem:[%s17 + $0x28] sm:$0xf]
        %v2711 = vld [vmem:[%s17 + $0x2c] sm:$0xf]
        %v2712 = vld [vmem:[%s17 + $0x30] sm:$0xf]
        %v2713 = vld [vmem:[%s17 + $0x34] sm:$0xf]
        %v2714 = vld [vmem:[%s17 + $0x38] sm:$0xf]
        %v2715 = vld [vmem:[%s17 + $0x3c] sm:$0xf]
        %v2716 = vld [vmem:[%s18] sm:$0x1]
        %v2718 = vlaneseq
        %v2719 = vshrl.u32 %v2718, 7
        %v2720 = vsub.s32 0, %v2719
        %v2721 = vrot.slane %v2716, %v2720
        %v2739 = vunpack.c.l.b16 %v2700
        %v2740 = vunpack.c.l.b16 %v2701
        %v2741 = vunpack.c.l.b16 %v2702
        %v2742 = vunpack.c.l.b16 %v2703
        %v2743 = vunpack.c.l.b16 %v2704
        %v2744 = vunpack.c.l.b16 %v2705
        %v2745 = vunpack.c.l.b16 %v2706
        %v2746 = vunpack.c.l.b16 %v2707
        %v2747 = vunpack.c.l.b16 %v2708
        %v2748 = vunpack.c.l.b16 %v2709
        %v2749 = vunpack.c.l.b16 %v2710
        %v2750 = vunpack.c.l.b16 %v2711
        %v2751 = vunpack.c.l.b16 %v2712
        %v2752 = vunpack.c.l.b16 %v2713
        %v2753 = vunpack.c.l.b16 %v2714
        %v2754 = vunpack.c.l.b16 %v2715
        %v2755 = vpack.c.b16 %v2740, %v2739
        %v2756 = vpack.c.b16 %v2742, %v2741
        %v2757 = vpack.c.b16 %v2744, %v2743
        %v2758 = vpack.c.b16 %v2746, %v2745
        %v2759 = vpack.c.b16 %v2748, %v2747
        %v2760 = vpack.c.b16 %v2750, %v2749
        %v2761 = vpack.c.b16 %v2752, %v2751
        %v2762 = vpack.c.b16 %v2754, %v2753
        %2771 = vmatprep.subr.bf16.mxu0 0
        %2772 = vmatpush1.bf16.msra.mxu0 %v2755
        %2773 = vmatprep.subr.bf16.mxu0 0
        %2774 = vmatpush1.bf16.msra.mxu0 %v2756
        %2775 = vmatprep.subr.bf16.mxu0 0
        %2776 = vmatpush1.bf16.msra.mxu0 %v2757
        %2777 = vmatprep.subr.bf16.mxu0 0
        %2778 = vmatpush1.bf16.msra.mxu0 %v2758
        %2779 = vmatprep.subr.bf16.mxu0 0
        %2780 = vmatpush1.bf16.msra.mxu0 %v2759
        %2781 = vmatprep.subr.bf16.mxu0 0
        %2782 = vmatpush1.bf16.msra.mxu0 %v2760
        %2783 = vmatprep.subr.bf16.mxu0 0
        %2784 = vmatpush1.bf16.msra.mxu0 %v2761
        %2785 = vmatprep.subr.bf16.mxu0 0
        %2786 = vmatpush1.bf16.msra.mxu0 %v2762
        %2787 = vmatprep.subr.bf16.mxu0 0
        %2788 = vmatpush1.bf16.msra.mxu0 0
        %2789 = vmatprep.subr.bf16.mxu0 0
        %2790 = vmatpush1.bf16.msra.mxu0 0
        %2791 = vmatprep.subr.bf16.mxu0 0
        %2792 = vmatpush1.bf16.msra.mxu0 0
        %2793 = vmatprep.subr.bf16.mxu0 0
        %2794 = vmatpush1.bf16.msra.mxu0 0
        %2795 = vmatprep.subr.bf16.mxu0 0
        %2796 = vmatpush1.bf16.msra.mxu0 0
        %2797 = vmatprep.subr.bf16.mxu0 0
        %2798 = vmatpush1.bf16.msra.mxu0 0
        %2799 = vmatprep.subr.bf16.mxu0 0
        %2800 = vmatpush1.bf16.msra.mxu0 0
        %2801 = vmatprep.subr.bf16.mxu0 0
        %2802 = vmatpush1.bf16.msra.mxu0 0
        %2803 = vmatprep.mubr.bf16.mxu0 0
        %2804 = vmatmul.mubr.bf16.gmra.mrb[0].mxu0 %v2692
        %v2805 = vpop.f32.mrb[0].mxu0
        %v2806 = vadd.f32 %v2721, %v2805
        %v2807 = vpop.f32.mrb[0].mxu0
        %v2808 = vpop.f32.mrb[0].mxu0
        %v2809 = vadd.f32 %v2721, %v2808
        %v2810 = vpop.f32.mrb[0].mxu0
        %2811 = vmatprep.mubr.bf16.mxu0 0
        %2812 = vmatmul.mubr.bf16.gmra.mrb[0].mxu0 %v2693
        %v2813 = vpop.f32.mrb[0].mxu0
        %v2814 = vadd.f32 %v2721, %v2813
        %v2815 = vpop.f32.mrb[0].mxu0
        %v2816 = vpop.f32.mrb[0].mxu0
        %v2817 = vadd.f32 %v2721, %v2816
        %v2818 = vpop.f32.mrb[0].mxu0
        %2819 = vmatprep.mubr.bf16.mxu0 0
        %2820 = vmatmul.mubr.bf16.gmra.mrb[0].mxu0 %v2694
        %v2821 = vpop.f32.mrb[0].mxu0
        %v2822 = vadd.f32 %v2721, %v2821
        %v2823 = vpop.f32.mrb[0].mxu0
        %v2824 = vpop.f32.mrb[0].mxu0
        %v2825 = vadd.f32 %v2721, %v2824
        %v2826 = vpop.f32.mrb[0].mxu0
        %2827 = vmatprep.mubr.bf16.mxu0 0
        %2828 = vmatmul.mubr.bf16.gmra.mrb[0].mxu0 %v2695
        %v2829 = vpop.f32.mrb[0].mxu0
        %v2830 = vadd.f32 %v2721, %v2829
        %v2831 = vpop.f32.mrb[0].mxu0
        %v2832 = vpop.f32.mrb[0].mxu0
        %v2833 = vadd.f32 %v2721, %v2832
        %v2834 = vpop.f32.mrb[0].mxu0
        %2835 = vmatprep.mubr.bf16.mxu0 0
        %2836 = vmatmul.mubr.bf16.gmra.mrb[0].mxu0 %v2696
        %v2837 = vpop.f32.mrb[0].mxu0
        %v2838 = vadd.f32 %v2721, %v2837
        %v2839 = vpop.f32.mrb[0].mxu0
        %v2840 = vpop.f32.mrb[0].mxu0
        %v2841 = vadd.f32 %v2721, %v2840
        %v2842 = vpop.f32.mrb[0].mxu0
        %2843 = vmatprep.mubr.bf16.mxu0 0
        %2844 = vmatmul.mubr.bf16.gmra.mrb[0].mxu0 %v2697
        %v2845 = vpop.f32.mrb[0].mxu0
        %v2846 = vadd.f32 %v2721, %v2845
        %v2847 = vpop.f32.mrb[0].mxu0
        %v2848 = vpop.f32.mrb[0].mxu0
        %v2849 = vadd.f32 %v2721, %v2848
        %v2850 = vpop.f32.mrb[0].mxu0
        %2851 = vmatprep.mubr.bf16.mxu0 0
        %2852 = vmatmul.mubr.bf16.gmra.mrb[0].mxu0 %v2698
        %v2853 = vpop.f32.mrb[0].mxu0
        %v2854 = vadd.f32 %v2721, %v2853
        %v2855 = vpop.f32.mrb[0].mxu0
        %v2856 = vpop.f32.mrb[0].mxu0
        %v2857 = vadd.f32 %v2721, %v2856
        %v2858 = vpop.f32.mrb[0].mxu0
        %2859 = vmatprep.mubr.bf16.mxu0 0
        %2860 = vmatmul.mubr.bf16.gmra.mrb[0].mxu0 %v2699
        %v2861 = vpop.f32.mrb[0].mxu0
        %v2862 = vadd.f32 %v2721, %v2861
        %v2863 = vpop.f32.mrb[0].mxu0
        %v2864 = vpop.f32.mrb[0].mxu0
        %v2865 = vadd.f32 %v2721, %v2864
        %v2866 = vpop.f32.mrb[0].mxu0
        %2867 = vdwg.mxu0
        %v2868 = vld [vmem:[#allocation29] sm:$0xf]
        %v2869 = vld [vmem:[#allocation29 + $0x4] sm:$0xf]
        %v2870 = vld [vmem:[#allocation29 + $0x8] sm:$0xf]
        %v2871 = vld [vmem:[#allocation29 + $0xc] sm:$0xf]
        %v2872 = vld [vmem:[#allocation29 + $0x10] sm:$0xf]
        %v2873 = vld [vmem:[#allocation29 + $0x14] sm:$0xf]
        %v2874 = vld [vmem:[#allocation29 + $0x18] sm:$0xf]
        %v2875 = vld [vmem:[#allocation29 + $0x1c] sm:$0xf]
        %v2876 = vld [vmem:[#allocation29 + $0x20] sm:$0xf]
        %v2877 = vld [vmem:[#allocation29 + $0x24] sm:$0xf]
        %v2878 = vld [vmem:[#allocation29 + $0x28] sm:$0xf]
        %v2879 = vld [vmem:[#allocation29 + $0x2c] sm:$0xf]
        %v2880 = vld [vmem:[#allocation29 + $0x30] sm:$0xf]
        %v2881 = vld [vmem:[#allocation29 + $0x34] sm:$0xf]
        %v2882 = vld [vmem:[#allocation29 + $0x38] sm:$0xf]
        %v2883 = vld [vmem:[#allocation29 + $0x3c] sm:$0xf]
        %v2884 = vld [vmem:[%s20] sm:$0x1]
        %v2886 = vlaneseq
        %v2887 = vshrl.u32 %v2886, 7
        %v2888 = vsub.s32 0, %v2887
        %v2889 = vrot.slane %v2884, %v2888
        %v2907 = vunpack.c.l.b16 %v2868
        %v2908 = vunpack.c.l.b16 %v2869
        %v2909 = vunpack.c.l.b16 %v2870
        %v2910 = vunpack.c.l.b16 %v2871
        %v2911 = vunpack.c.l.b16 %v2872
        %v2912 = vunpack.c.l.b16 %v2873
        %v2913 = vunpack.c.l.b16 %v2874
        %v2914 = vunpack.c.l.b16 %v2875
        %v2915 = vunpack.c.l.b16 %v2876
        %v2916 = vunpack.c.l.b16 %v2877
        %v2917 = vunpack.c.l.b16 %v2878
        %v2918 = vunpack.c.l.b16 %v2879
        %v2919 = vunpack.c.l.b16 %v2880
        %v2920 = vunpack.c.l.b16 %v2881
        %v2921 = vunpack.c.l.b16 %v2882
        %v2922 = vunpack.c.l.b16 %v2883
        %v2923 = vpack.c.b16 %v2908, %v2907
        %v2924 = vpack.c.b16 %v2910, %v2909
        %v2925 = vpack.c.b16 %v2912, %v2911
        %v2926 = vpack.c.b16 %v2914, %v2913
        %v2927 = vpack.c.b16 %v2916, %v2915
        %v2928 = vpack.c.b16 %v2918, %v2917
        %v2929 = vpack.c.b16 %v2920, %v2919
        %v2930 = vpack.c.b16 %v2922, %v2921
        %2939 = vmatprep.subr.bf16.mxu0 0
        %2940 = vmatpush1.bf16.msra.mxu0 %v2923
        %2941 = vmatprep.subr.bf16.mxu0 0
        %2942 = vmatpush1.bf16.msra.mxu0 %v2924
        %2943 = vmatprep.subr.bf16.mxu0 0
        %2944 = vmatpush1.bf16.msra.mxu0 %v2925
        %2945 = vmatprep.subr.bf16.mxu0 0
        %2946 = vmatpush1.bf16.msra.mxu0 %v2926
        %2947 = vmatprep.subr.bf16.mxu0 0
        %2948 = vmatpush1.bf16.msra.mxu0 %v2927
        %2949 = vmatprep.subr.bf16.mxu0 0
        %2950 = vmatpush1.bf16.msra.mxu0 %v2928
        %2951 = vmatprep.subr.bf16.mxu0 0
        %2952 = vmatpush1.bf16.msra.mxu0 %v2929
        %2953 = vmatprep.subr.bf16.mxu0 0
        %2954 = vmatpush1.bf16.msra.mxu0 %v2930
        %2955 = vmatprep.subr.bf16.mxu0 0
        %2956 = vmatpush1.bf16.msra.mxu0 0
        %2957 = vmatprep.subr.bf16.mxu0 0
        %2958 = vmatpush1.bf16.msra.mxu0 0
        %2959 = vmatprep.subr.bf16.mxu0 0
        %2960 = vmatpush1.bf16.msra.mxu0 0
        %2961 = vmatprep.subr.bf16.mxu0 0
        %2962 = vmatpush1.bf16.msra.mxu0 0
        %2963 = vmatprep.subr.bf16.mxu0 0
        %2964 = vmatpush1.bf16.msra.mxu0 0
        %2965 = vmatprep.subr.bf16.mxu0 0
        %2966 = vmatpush1.bf16.msra.mxu0 0
        %2967 = vmatprep.subr.bf16.mxu0 0
        %2968 = vmatpush1.bf16.msra.mxu0 0
        %2969 = vmatprep.subr.bf16.mxu0 0
        %2970 = vmatpush1.bf16.msra.mxu0 0
        %2971 = vmatprep.mubr.bf16.mxu0 0
        %2972 = vmatmul.mubr.bf16.gmra.mrb[0].mxu0 %v1337
        %v2973 = vpop.f32.mrb[0].mxu0
        %v2974 = vadd.f32 %v2889, %v2973
        %v2975 = vpop.f32.mrb[0].mxu0
        %v2976 = vpop.f32.mrb[0].mxu0
        %v2977 = vadd.f32 %v2889, %v2976
        %v2978 = vpop.f32.mrb[0].mxu0
        %2979 = vmatprep.mubr.bf16.mxu0 0
        %2980 = vmatmul.mubr.bf16.gmra.mrb[0].mxu0 %v1338
        %v2981 = vpop.f32.mrb[0].mxu0
        %v2982 = vadd.f32 %v2889, %v2981
        %v2983 = vpop.f32.mrb[0].mxu0
        %v2984 = vpop.f32.mrb[0].mxu0
        %v2985 = vadd.f32 %v2889, %v2984
        %v2986 = vpop.f32.mrb[0].mxu0
        %2987 = vmatprep.mubr.bf16.mxu0 0
        %2988 = vmatmul.mubr.bf16.gmra.mrb[0].mxu0 %v1339
        %v2989 = vpop.f32.mrb[0].mxu0
        %v2990 = vadd.f32 %v2889, %v2989
        %v2991 = vpop.f32.mrb[0].mxu0
        %v2992 = vpop.f32.mrb[0].mxu0
        %v2993 = vadd.f32 %v2889, %v2992
        %v2994 = vpop.f32.mrb[0].mxu0
        %2995 = vmatprep.mubr.bf16.mxu0 0
        %2996 = vmatmul.mubr.bf16.gmra.mrb[0].mxu0 %v1340
        %v2997 = vpop.f32.mrb[0].mxu0
        %v2998 = vadd.f32 %v2889, %v2997
        %v2999 = vpop.f32.mrb[0].mxu0
        %v3000 = vpop.f32.mrb[0].mxu0
        %v3001 = vadd.f32 %v2889, %v3000
        %v3002 = vpop.f32.mrb[0].mxu0
        %3003 = vmatprep.mubr.bf16.mxu0 0
        %3004 = vmatmul.mubr.bf16.gmra.mrb[0].mxu0 %v1341
        %v3005 = vpop.f32.mrb[0].mxu0
        %v3006 = vadd.f32 %v2889, %v3005
        %v3007 = vpop.f32.mrb[0].mxu0
        %v3008 = vpop.f32.mrb[0].mxu0
        %v3009 = vadd.f32 %v2889, %v3008
        %v3010 = vpop.f32.mrb[0].mxu0
        %3011 = vmatprep.mubr.bf16.mxu0 0
        %3012 = vmatmul.mubr.bf16.gmra.mrb[0].mxu0 %v1342
        %v3013 = vpop.f32.mrb[0].mxu0
        %v3014 = vadd.f32 %v2889, %v3013
        %v3015 = vpop.f32.mrb[0].mxu0
        %v3016 = vpop.f32.mrb[0].mxu0
        %v3017 = vadd.f32 %v2889, %v3016
        %v3018 = vpop.f32.mrb[0].mxu0
        %3019 = vmatprep.mubr.bf16.mxu0 0
        %3020 = vmatmul.mubr.bf16.gmra.mrb[0].mxu0 %v1343
        %v3021 = vpop.f32.mrb[0].mxu0
        %v3022 = vadd.f32 %v2889, %v3021
        %v3023 = vpop.f32.mrb[0].mxu0
        %v3024 = vpop.f32.mrb[0].mxu0
        %v3025 = vadd.f32 %v2889, %v3024
        %v3026 = vpop.f32.mrb[0].mxu0
        %3027 = vmatprep.mubr.bf16.mxu0 0
        %3028 = vmatmul.mubr.bf16.gmra.mrb[0].mxu0 %v1344
        %v3029 = vpop.f32.mrb[0].mxu0
        %v3030 = vadd.f32 %v2889, %v3029
        %v3031 = vpop.f32.mrb[0].mxu0
        %v3032 = vpop.f32.mrb[0].mxu0
        %v3033 = vadd.f32 %v2889, %v3032
        %v3034 = vpop.f32.mrb[0].mxu0
        %3035 = vdwg.mxu0
        %s3036 = sld [smem:[#allocation2]]
        %v3037 = vstv %s3036
        %v3038 = vmul.f32 %v3037, %v2806
        %v3039 = vmul.f32 %v3037, %v2809
        %v3040 = vmul.f32 %v3037, %v2814
        %v3041 = vmul.f32 %v3037, %v2817
        %v3042 = vmul.f32 %v3037, %v2822
        %v3043 = vmul.f32 %v3037, %v2825
        %v3044 = vmul.f32 %v3037, %v2830
        %v3045 = vmul.f32 %v3037, %v2833
        %v3046 = vmul.f32 %v3037, %v2838
        %v3047 = vmul.f32 %v3037, %v2841
        %v3048 = vmul.f32 %v3037, %v2846
        %v3049 = vmul.f32 %v3037, %v2849
        %v3050 = vmul.f32 %v3037, %v2854
        %v3051 = vmul.f32 %v3037, %v2857
        %v3052 = vmul.f32 %v3037, %v2862
        %v3053 = vmul.f32 %v3037, %v2865
        %s3054 = ssub.f32 1.0, %s3036
        %v3055 = vstv %s3054
        %v3056 = vmul.f32 %v3055, %v2974
        %v3057 = vmul.f32 %v3055, %v2977
        %v3058 = vmul.f32 %v3055, %v2982
        %v3059 = vmul.f32 %v3055, %v2985
        %v3060 = vmul.f32 %v3055, %v2990
        %v3061 = vmul.f32 %v3055, %v2993
        %v3062 = vmul.f32 %v3055, %v2998
        %v3063 = vmul.f32 %v3055, %v3001
        %v3064 = vmul.f32 %v3055, %v3006
        %v3065 = vmul.f32 %v3055, %v3009
        %v3066 = vmul.f32 %v3055, %v3014
        %v3067 = vmul.f32 %v3055, %v3017
        %v3068 = vmul.f32 %v3055, %v3022
        %v3069 = vmul.f32 %v3055, %v3025
        %v3070 = vmul.f32 %v3055, %v3030
        %v3071 = vmul.f32 %v3055, %v3033
        %v3072 = vadd.f32 %v3038, %v3056
        %v3073 = vadd.f32 %v3039, %v3057
        %v3074 = vadd.f32 %v3040, %v3058
        %v3075 = vadd.f32 %v3041, %v3059
        %v3076 = vadd.f32 %v3042, %v3060
        %v3077 = vadd.f32 %v3043, %v3061
        %v3078 = vadd.f32 %v3044, %v3062
        %v3079 = vadd.f32 %v3045, %v3063
        %v3080 = vadd.f32 %v3046, %v3064
        %v3081 = vadd.f32 %v3047, %v3065
        %v3082 = vadd.f32 %v3048, %v3066
        %v3083 = vadd.f32 %v3049, %v3067
        %v3084 = vadd.f32 %v3050, %v3068
        %v3085 = vadd.f32 %v3051, %v3069
        %v3086 = vadd.f32 %v3052, %v3070
        %v3087 = vadd.f32 %v3053, %v3071
        %3088 = vst [vmem:[%s972] sm:$0xff] %v3072
        %3089 = vst [vmem:[%s972 + $0x8] sm:$0xff] %v3073
        %3090 = vst [vmem:[%s972 + $0x10] sm:$0xff] %v3074
        %3091 = vst [vmem:[%s972 + $0x18] sm:$0xff] %v3075
        %3092 = vst [vmem:[%s972 + $0x20] sm:$0xff] %v3076
        %3093 = vst [vmem:[%s972 + $0x28] sm:$0xff] %v3077
        %3094 = vst [vmem:[%s972 + $0x30] sm:$0xff] %v3078
        %3095 = vst [vmem:[%s972 + $0x38] sm:$0xff] %v3079
        %3096 = vst [vmem:[%s972 + $0x40] sm:$0xff] %v3080
        %3097 = vst [vmem:[%s972 + $0x48] sm:$0xff] %v3081
        %3098 = vst [vmem:[%s972 + $0x50] sm:$0xff] %v3082
        %3099 = vst [vmem:[%s972 + $0x58] sm:$0xff] %v3083
        %3100 = vst [vmem:[%s972 + $0x60] sm:$0xff] %v3084
        %3101 = vst [vmem:[%s972 + $0x68] sm:$0xff] %v3085
        %3102 = vst [vmem:[%s972 + $0x70] sm:$0xff] %v3086
        %3103 = vst [vmem:[%s972 + $0x78] sm:$0xff] %v3087
        %s3104 = sand.u32 %s520, 1
        %s3105 = scalar_lea.sflag [#allocation5], %s3104
        %s3106 = sand.u32 %s520, 1
        %s3107 = smul.addr %s3106, 128
        %s3108 = scalar_lea.vmem [#allocation30], %s3107
        // Predicated region
        $region173: #{tpu_custom_call.1} parent=103 // pred_check
          %p3109 = pneg %p530
        $region174: #{tpu_custom_call.1} parent=103 // pred_check_branch
          %3111 = sbr.rel (%p3109) target = $region176
        $region175: #{tpu_custom_call.1} parent=103 // pred_region
          %s3113 = ssub.s32 2048, 2048
          %3114 = vsyncadd %s3105, %s3113
          %s3115 = smul.addr %s51, 16
          %s3116 = smul.addr %s3115, 128
          %s3117 = scalar_lea.hbm %s21, %s3116
          %s3118 = sshll.u32 %s3108, 4
          %s3119 = int_to_ptr.vmem [resolvable:$true] %s3118
          %3124 = dma.vmem_to_hbm [thread:$0]  %s3119, 2048, %s3117, %s3105, 128, 128, 8
        $region176: #{tpu_custom_call.1} parent=103 // pred_fallthru
          _
      $region104: #{tpu_custom_call.1} parent=5 // pred_fallthru
        _
      %p3125 = scmp.le.s32.totalorder 2, %s46
      // Predicated region
      $region177: #{tpu_custom_call.1} parent=5 // pred_check
        %p3126 = pneg %p3125
      $region178: #{tpu_custom_call.1} parent=5 // pred_check_branch
        %3128 = sbr.rel (%p3126) target = $region180
      $region179: #{tpu_custom_call.1} parent=5 // pred_region
        %s3129 = ssub.s32 %s46, 2
        // Predicated region
        $region181: #{tpu_custom_call.1} parent=179 // pred_check
          %p3130 = pneg %p536
        $region182: #{tpu_custom_call.1} parent=179 // pred_check_branch
          %3132 = sbr.rel (%p3130) target = $region184
        $region183: #{tpu_custom_call.1} parent=179 // pred_region
          %s3133 = sand.u32 %s521, 1
          %s3134 = scalar_lea.sflag [#allocation5], %s3133
          %s3135 = sand.u32 %s521, 1
          %s3136 = smul.addr %s3135, 128
          %s3137 = scalar_lea.vmem [#allocation30], %s3136
          %3138 = dma.done %s3134, 2048
        $region184: #{tpu_custom_call.1} parent=179 // pred_fallthru
          _
      $region180: #{tpu_custom_call.1} parent=5 // pred_fallthru
        _
    $region6: #{tpu_custom_call.1} parent=1 // loop_footer
      %s50 = sadd.s32 1, %s46
    $region7: #{tpu_custom_call.1} parent=1 // loop_footer_branch
      %45 = sbr.rel target = $region3
    $region8: #{tpu_custom_call.1} parent=1 // loop_exit
      _
    %3139 = vsyncpa [#allocation4], 1
    %s3140 = scalar_lea.sflag [#allocation4], 1
    %3141 = vsyncpa %s3140, 1
    %3142 = vsyncpa [#allocation7], 1
    %s3143 = scalar_lea.sflag [#allocation7], 1
    %3144 = vsyncpa %s3143, 1
    %3145 = vsyncpa [#allocation10], 1
    %s3146 = scalar_lea.sflag [#allocation10], 1
    %3147 = vsyncpa %s3146, 1
    %3148 = vsyncpa [#allocation13], 1
    %3149 = vsyncpa [#allocation16], 1
    %3150 = vsyncpa [#allocation19], 1
    %3151 = vsyncpa [#allocation22], 1
    %3152 = vsyncpa [#allocation25], 1
    %3153 = vsyncpa [#allocation28], 1
    %3154 = vsyncpa [#allocation5], 1
    %s3155 = scalar_lea.sflag [#allocation5], 1
    %3156 = vsyncpa %s3155, 1

</llo_original>
